<compile_context>
chip_gen: v7x
topology: tpu7x:2x2x1
jax: 0.10.0
libtpu: 0.0.40
codegen_flags: <defaults>
</compile_context>

<pallas_src>
import functools

import jax
import jax.numpy as jnp
from jax.experimental import pallas as pl
from jax.experimental.pallas import tpu as pltpu

LN_EPS = 1e-5                      # PyTorch nn.LayerNorm default
NEG_INF = -1e30                    # finite mask sentinel (avoids inf - inf NaN)
VMEM_LIMIT = 48 * 1024 * 1024      # safe on v5e/v6e (128 MiB) and v7x (64 MiB)


# --------------------------------------------------------------------------------------
# Row-tiled linear:  out = x @ W + b        (bf16 matmul, f32 accumulation)
# --------------------------------------------------------------------------------------

def _linear_kernel(x_ref, w_ref, b_ref, o_ref):
    o_ref[...] = (jnp.dot(x_ref[...].astype(jnp.bfloat16), w_ref[...],
                          preferred_element_type=jnp.float32) + b_ref[...])


def linear(x, w_bf16, bias, *, row_tile=256):
    rows, d_in = x.shape
    d_out = w_bf16.shape[1]
    rt = min(rows, row_tile)
    return pl.pallas_call(
        _linear_kernel,
        out_shape=jax.ShapeDtypeStruct((rows, d_out), jnp.float32),
        grid=(pl.cdiv(rows, rt),),
        in_specs=[pl.BlockSpec((rt, d_in), lambda i: (i, 0)),
                  pl.BlockSpec((d_in, d_out), lambda i: (0, 0)),
                  pl.BlockSpec((1, d_out), lambda i: (0, 0))],
        out_specs=pl.BlockSpec((rt, d_out), lambda i: (i, 0)),
        compiler_params=pltpu.CompilerParams(
            dimension_semantics=("parallel",), vmem_limit_bytes=VMEM_LIMIT),
    )(x, w_bf16, bias.reshape(1, -1))


# --------------------------------------------------------------------------------------
# Row-tiled fused FFN block:  out = x + relu(LN(x) @ W1 + b1) @ W2 + b2
# --------------------------------------------------------------------------------------

def _ffn_kernel(x_ref, g_ref, b_ref, w1_ref, b1_ref, w2_ref, b2_ref, o_ref):
    x = x_ref[...]
    mu = jnp.mean(x, axis=-1, keepdims=True)
    var = jnp.mean(jnp.square(x - mu), axis=-1, keepdims=True)
    h = (x - mu) * jax.lax.rsqrt(var + LN_EPS) * g_ref[...] + b_ref[...]
    h1 = jnp.maximum(
        jnp.dot(h.astype(jnp.bfloat16), w1_ref[...],
                preferred_element_type=jnp.float32) + b1_ref[...], 0.0)
    o_ref[...] = x + jnp.dot(h1.astype(jnp.bfloat16), w2_ref[...],
                             preferred_element_type=jnp.float32) + b2_ref[...]


def ffn(x, g, b, w1_bf, b1, w2_bf, b2, *, row_tile=256):
    rows, d_model = x.shape
    d_inner = w1_bf.shape[1]
    rt = min(rows, row_tile)
    return pl.pallas_call(
        _ffn_kernel,
        out_shape=jax.ShapeDtypeStruct((rows, d_model), jnp.float32),
        grid=(pl.cdiv(rows, rt),),
        in_specs=[pl.BlockSpec((rt, d_model), lambda i: (i, 0)),
                  pl.BlockSpec((1, d_model), lambda i: (0, 0)),
                  pl.BlockSpec((1, d_model), lambda i: (0, 0)),
                  pl.BlockSpec((d_model, d_inner), lambda i: (0, 0)),
                  pl.BlockSpec((1, d_inner), lambda i: (0, 0)),
                  pl.BlockSpec((d_inner, d_model), lambda i: (0, 0)),
                  pl.BlockSpec((1, d_model), lambda i: (0, 0))],
        out_specs=pl.BlockSpec((rt, d_model), lambda i: (i, 0)),
        compiler_params=pltpu.CompilerParams(
            dimension_semantics=("parallel",), vmem_limit_bytes=VMEM_LIMIT),
    )(x, g.reshape(1, -1), b.reshape(1, -1), w1_bf, b1.reshape(1, -1),
      w2_bf, b2.reshape(1, -1))


# --------------------------------------------------------------------------------------
# Fused per-layer relative attention (one grid step per batch element, all heads inside)
# --------------------------------------------------------------------------------------

def _attn_layer_kernel(cat_ref, u_ref, z_ref, ln1g_ref, ln1b_ref, wqkv_ref,
                       rk_ref, rwb_ref, rrb_ref, ln2g_ref, ln2b_ref,
                       wo_ref, bo_ref, o_ref,
                       *, n_head, d_head, m_len, local_size, scale):
    q_len = z_ref.shape[1]
    k_len = cat_ref.shape[1]

    # LN1 over [hist ; now]
    x = cat_ref[0]                                               # (k_len, d_model) f32
    mu = jnp.mean(x, axis=-1, keepdims=True)
    var = jnp.mean(jnp.square(x - mu), axis=-1, keepdims=True)
    h = (x - mu) * jax.lax.rsqrt(var + LN_EPS) * ln1g_ref[...] + ln1b_ref[...]

    # qkv projection + injection  (MXU, bf16 in / f32 acc)
    w_heads = jnp.dot(h.astype(jnp.bfloat16), wqkv_ref[...],
                      preferred_element_type=jnp.float32) + u_ref[0]     # (k_len, 3*nd)

    # causal + local mask built in-kernel (no HBM mask tensor)
    ii = jax.lax.broadcasted_iota(jnp.int32, (q_len, k_len), 0)
    jj = jax.lax.broadcasted_iota(jnp.int32, (q_len, k_len), 1)
    masked = (jj > ii + m_len) | (jj <= ii + m_len - local_size)

    rwb_all = rwb_ref[...]
    rrb_all = rrb_ref[...]
    rk_all = rk_ref[...]                                         # (k_len, nd) bf16

    head_outs = []
    for hh in range(n_head):
        base = hh * 3 * d_head
        q_h = w_heads[m_len:, base:base + d_head]                # (q_len, d_head)
        k_h = w_heads[:, base + d_head:base + 2 * d_head]        # (k_len, d_head)
        v_h = w_heads[:, base + 2 * d_head:base + 3 * d_head]    # (k_len, d_head)
        rk_h = rk_all[:, hh * d_head:(hh + 1) * d_head]          # (k_len, d_head)

        rq_w = (q_h + rwb_all[hh:hh + 1, :]).astype(jnp.bfloat16)
        rq_r = (q_h + rrb_all[hh:hh + 1, :]).astype(jnp.bfloat16)

        # AC = (q + r_w_bias) @ k^T  ;  BD_raw = (q + r_r_bias) @ r_head_k^T  -- both on MXU
        ac = jax.lax.dot_general(rq_w, k_h.astype(jnp.bfloat16),
                                 (((1,), (1,)), ((), ())),
                                 preferred_element_type=jnp.float32)      # (q_len, k_len)
        bd_raw = jax.lax.dot_general(rq_r, rk_h, (((1,), (1,)), ((), ())),
                                     preferred_element_type=jnp.float32)  # (q_len, k_len)

        # Transformer-XL rel_shift: BD[i, j] = BD_raw[i, q_len-1-i+j]; out-of-range positions
        # are exactly the ones masked below.  Implemented with static per-row slices of a
        # right-padded score row (definitely lowers; for long q_len one would switch to a
        # strided pltpu.roll).
        if q_len > 1:
            bd_pad = jnp.concatenate(
                [bd_raw, jnp.zeros((q_len, q_len - 1), jnp.float32)], axis=1)
            bd = jnp.concatenate(
                [bd_pad[i:i + 1, q_len - 1 - i:q_len - 1 - i + k_len]
                 for i in range(q_len)], axis=0)
        else:
            bd = bd_raw

        score = (ac + bd) * scale
        score = jnp.where(masked, NEG_INF, score)
        mx = jnp.max(score, axis=-1, keepdims=True)
        p = jnp.exp(score - mx)
        p = p * pl.reciprocal(jnp.sum(p, axis=-1, keepdims=True), approx=True)
        head_outs.append(jnp.dot(p.astype(jnp.bfloat16), v_h.astype(jnp.bfloat16),
                                 preferred_element_type=jnp.float32))     # (q_len, d_head)

    attn_vec = jnp.concatenate(head_outs, axis=1) if n_head > 1 else head_outs[0]

    # LN2 -> o_net -> residual
    mu2 = jnp.mean(attn_vec, axis=-1, keepdims=True)
    var2 = jnp.mean(jnp.square(attn_vec - mu2), axis=-1, keepdims=True)
    an = (attn_vec - mu2) * jax.lax.rsqrt(var2 + LN_EPS) * ln2g_ref[...] + ln2b_ref[...]
    o_ref[0] = (jnp.dot(an.astype(jnp.bfloat16), wo_ref[...],
                        preferred_element_type=jnp.float32)
                + bo_ref[...] + z_ref[0])


def attention_layer(cat, u_cat, z_now, ln1g, ln1b, wqkv_bf, rk_bf, rwb, rrb,
                    ln2g, ln2b, wo_bf, bo, *, n_head, d_head, m_len, local_size, scale):
    B, q_len, d_model = z_now.shape
    k_len = cat.shape[1]
    nd = n_head * d_head
    kern = functools.partial(_attn_layer_kernel, n_head=n_head, d_head=d_head,
                             m_len=m_len, local_size=local_size, scale=scale)

    def const2(shape):
        return pl.BlockSpec(shape, lambda b: (0, 0))

    return pl.pallas_call(
        kern,
        out_shape=jax.ShapeDtypeStruct((B, q_len, d_model), jnp.float32),
        grid=(B,),
        in_specs=[
            pl.BlockSpec((1, k_len, d_model), lambda b: (b, 0, 0)),   # cat = [z_hist ; z_now]
            pl.BlockSpec((1, k_len, 3 * nd), lambda b: (b, 0, 0)),    # u_cat
            pl.BlockSpec((1, q_len, d_model), lambda b: (b, 0, 0)),   # z_now (residual)
            const2((1, d_model)),                                     # ln1 gamma
            const2((1, d_model)),                                     # ln1 beta
            const2((d_model, 3 * nd)),                                # W_qkv   (bf16)
            const2((k_len, nd)),                                      # r_head_k (bf16)
            const2((n_head, d_head)),                                 # r_w_bias
            const2((n_head, d_head)),                                 # r_r_bias
            const2((1, d_model)),                                     # ln2 gamma
            const2((1, d_model)),                                     # ln2 beta
            const2((nd, d_model)),                                    # W_o (bf16)
            const2((1, d_model)),                                     # b_o
        ],
        out_specs=pl.BlockSpec((1, q_len, d_model), lambda b: (b, 0, 0)),
        compiler_params=pltpu.CompilerParams(
            dimension_semantics=("parallel",), vmem_limit_bytes=VMEM_LIMIT),
    )(cat, u_cat, z_now, ln1g.reshape(1, -1), ln1b.reshape(1, -1), wqkv_bf, rk_bf,
      rwb, rrb, ln2g.reshape(1, -1), ln2b.reshape(1, -1), wo_bf, bo.reshape(1, -1))


# --------------------------------------------------------------------------------------
# Fused tied-weight logits + online logsumexp + NLL   (grid = (row tiles, vocab tiles))
# --------------------------------------------------------------------------------------

def _nll_kernel(z_ref, emb_ref, b_ref, tgt_ref, nll_ref, m_sc, s_sc, t_sc,
                *, n_token, tile_v):
    v = pl.program_id(1)

    @pl.when(v == 0)
    def _():
        m_sc[...] = jnp.full_like(m_sc, NEG_INF)
        s_sc[...] = jnp.zeros_like(s_sc)
        t_sc[...] = jnp.zeros_like(t_sc)

    # logits tile = z @ emb_tile^T + b_tile   (no emb transpose materialized)
    logits = jax.lax.dot_general(z_ref[...], emb_ref[...], (((1,), (1,)), ((), ())),
                                 preferred_element_type=jnp.float32) + b_ref[...]
    rt = logits.shape[0]
    col = jax.lax.broadcasted_iota(jnp.int32, (rt, tile_v), 1) + v * tile_v
    logits = jnp.where(col < n_token, logits, NEG_INF)            # mask padded vocab columns

    # gather target logit via one-hot select (global index compare)
    hit = col == tgt_ref[...]
    t_sc[...] += jnp.sum(jnp.where(hit, logits, 0.0), axis=-1, keepdims=True)

    # online logsumexp
    m_old = m_sc[...]
    m_new = jnp.maximum(m_old, jnp.max(logits, axis=-1, keepdims=True))
    s_sc[...] = s_sc[...] * jnp.exp(m_old - m_new) + jnp.sum(
        jnp.exp(logits - m_new), axis=-1, keepdims=True)
    m_sc[...] = m_new

    @pl.when(v == pl.num_programs(1) - 1)
    def _():
        nll_ref[...] = m_sc[...] + jnp.log(s_sc[...]) - t_sc[...]


def nll_loss(z_pred_bf, emb_bf, crit_b, target_flat, n_token,
             *, row_tile=256, vocab_tile=2048):
    rows, d_model = z_pred_bf.shape
    rt = min(rows, row_tile)
    tv = min(n_token, vocab_tile)
    kern = functools.partial(_nll_kernel, n_token=n_token, tile_v=tv)
    nll = pl.pallas_call(
        kern,
        out_shape=jax.ShapeDtypeStruct((rows, 1), jnp.float32),
        grid=(pl.cdiv(rows, rt), pl.cdiv(n_token, tv)),
        in_specs=[pl.BlockSpec((rt, d_model), lambda r, v: (r, 0)),
                  pl.BlockSpec((tv, d_model), lambda r, v: (v, 0)),
                  pl.BlockSpec((1, tv), lambda r, v: (0, v)),
                  pl.BlockSpec((rt, 1), lambda r, v: (r, 0))],
        out_specs=pl.BlockSpec((rt, 1), lambda r, v: (r, 0)),
        scratch_shapes=[pltpu.VMEM((rt, 1), jnp.float32),
                        pltpu.VMEM((rt, 1), jnp.float32),
                        pltpu.VMEM((rt, 1), jnp.float32)],
        compiler_params=pltpu.CompilerParams(
            dimension_semantics=("parallel", "arbitrary"),
            vmem_limit_bytes=VMEM_LIMIT),
    )(z_pred_bf, emb_bf, crit_b.reshape(1, -1), target_flat.reshape(-1, 1).astype(jnp.int32))
    return nll[:, 0]


# --------------------------------------------------------------------------------------
# Parameters (deterministic, synthetic)
# --------------------------------------------------------------------------------------

def make_params(key, cfg):
    d_model, n_head, d_head = cfg["d_model"], cfg["n_head"], cfg["d_head"]
    d_inner, n_token = cfg["d_inner"], cfg["n_token"]
    nd = n_head * d_head
    ks = iter(jax.random.split(key, 8 + 16 * cfg["n_layer"]))

    def nrm(shape, s=0.05):
        return (jax.random.normal(next(ks), shape) * s).astype(jnp.float32)

    def unif(shape, a=0.05):
        return jax.random.uniform(next(ks), shape, jnp.float32, -a, a)

    params = {
        "emb_W": nrm((n_token, d_model), 0.1),          # AdaptiveEmbedding (div_val=1, no cutoffs)
        "inj_W": nrm((d_model, 3 * nd)),
        "inj_b": jnp.zeros((3 * nd,), jnp.float32),
        "crit_b": jnp.zeros((n_token,), jnp.float32),   # tied-weight output layer bias
        "layers": [],
    }
    for _ in range(cfg["n_layer"]):
        params["layers"].append({
            "W_qkv": nrm((d_model, 3 * nd)),
            "W_r": nrm((d_model, nd)),
            "r_w_bias": unif((n_head, d_head)),
            "r_r_bias": unif((n_head, d_head)),
            "W_o": nrm((nd, d_model)),
            "b_o": jnp.zeros((d_model,), jnp.float32),
            "ln1_g": jnp.ones((d_model,), jnp.float32),
            "ln1_b": jnp.zeros((d_model,), jnp.float32),
            "ln2_g": jnp.ones((d_model,), jnp.float32),
            "ln2_b": jnp.zeros((d_model,), jnp.float32),
            "ff_ln_g": jnp.ones((d_model,), jnp.float32),
            "ff_ln_b": jnp.zeros((d_model,), jnp.float32),
            "W_ff1": nrm((d_model, d_inner)),
            "b_ff1": jnp.zeros((d_inner,), jnp.float32),
            "W_ff2": nrm((d_inner, d_model)),
            "b_ff2": jnp.zeros((d_model,), jnp.float32),
        })
    return params


# --------------------------------------------------------------------------------------
# DEQTransformerLM forward
# --------------------------------------------------------------------------------------

def deq_transformer_lm_forward(params, data, target, mems, cfg, n_fp_iter=4):
    B, q_len = data.shape
    d_model, n_head, d_head = cfg["d_model"], cfg["n_head"], cfg["d_head"]
    nd = n_head * d_head
    bf16 = jnp.bfloat16

    z_hist, u_hist = mems
    m_len = z_hist.shape[1]
    k_len = q_len + m_len
    local_size = cfg["local_size"] or 1000
    scale = 1.0 / (d_head ** 0.5)

    # word embedding (scaled, as in AdaptiveEmbedding) + injection; io/pos dropouts = identity
    word_emb = params["emb_W"][data] * jnp.sqrt(float(d_model))          # (B, q_len, d_model)
    u_now = linear(word_emb.reshape(-1, d_model), params["inj_W"].astype(bf16),
                   params["inj_b"]).reshape(B, q_len, 3 * nd)
    u_cat = jnp.concatenate([u_hist, u_now], axis=1)                     # (B, k_len, 3*nd)

    # relative positional embedding + per-layer r_net projection (z-independent, computed once)
    pos_seq = jnp.arange(k_len - 1, -1, -1.0, dtype=jnp.float32)
    inv_freq = 1.0 / (10000.0 ** (jnp.arange(0, d_model, 2, dtype=jnp.float32) / d_model))
    sinus = pos_seq[:, None] * inv_freq[None, :]
    pos_emb = jnp.concatenate([jnp.sin(sinus), jnp.cos(sinus)], axis=1)  # (k_len, d_model)

    zeros_nd = jnp.zeros((nd,), jnp.float32)
    layers_bf = []
    for lp in params["layers"]:
        layers_bf.append(dict(
            rk=linear(pos_emb, lp["W_r"].astype(bf16), zeros_nd).astype(bf16),
            wqkv=lp["W_qkv"].astype(bf16),
            wo=lp["W_o"].astype(bf16),
            w1=lp["W_ff1"].astype(bf16),
            w2=lp["W_ff2"].astype(bf16),
        ))

    def deq_func(z_now):
        for lp, lb in zip(params["layers"], layers_bf):
            cat = jnp.concatenate([z_hist, z_now], axis=1)               # (B, k_len, d_model)
            z_now = attention_layer(
                cat, u_cat, z_now, lp["ln1_g"], lp["ln1_b"], lb["wqkv"], lb["rk"],
                lp["r_w_bias"], lp["r_r_bias"], lp["ln2_g"], lp["ln2_b"],
                lb["wo"], lp["b_o"],
                n_head=n_head, d_head=d_head, m_len=m_len,
                local_size=local_size, scale=scale)
            z_now = ffn(z_now.reshape(-1, d_model), lp["ff_ln_g"], lp["ff_ln_b"],
                        lb["w1"], lp["b_ff1"], lb["w2"], lp["b_ff2"]
                        ).reshape(B, q_len, d_model)
        return z_now

    # TODO(synk): torchdeq's get_deq() solver (anderson/broyden) replaced by plain fixed-point
    # iteration from z = 0; the semantics of one deq_func application are exact.
    z_now = jnp.zeros((B, q_len, d_model), jnp.float32)
    for _ in range(n_fp_iter):
        z_now = deq_func(z_now)
    z_next = deq_func(z_now)

    diff = jnp.linalg.norm((z_next - z_now).reshape(B, -1), axis=-1)
    rel = diff / (jnp.linalg.norm(z_now.reshape(B, -1), axis=-1) + 1e-8)
    info = {"abs_lowest": diff.mean(), "rel_lowest": rel.mean()}

    # tied-weight ProjectedAdaptiveLogSoftmax (cutoffs=[]) -> fused logits + logsumexp + NLL
    tgt_len = target.shape[-1]
    z_pred = z_now[:, -tgt_len:].reshape(-1, d_model)
    nll = nll_loss(z_pred.astype(bf16), params["emb_W"].astype(bf16),
                   params["crit_b"], target.reshape(-1), cfg["n_token"])
    loss = nll.mean()

    # memory update
    end_idx = m_len + q_len
    beg_idx = max(0, end_idx - cfg["mem_len"])
    z_cat = jnp.concatenate([z_hist, z_now], axis=1)
    new_mems = [z_cat[:, beg_idx:end_idx], u_cat[:, beg_idx:end_idx]]
    return loss, new_mems, info


# --------------------------------------------------------------------------------------

if __name__ == "__main__":
    cfg = dict(n_token=50, d_model=32, n_head=4, d_head=8, d_inner=64,
               n_layer=2, mem_len=8, local_size=0)
    B, q_len = 2, 8

    key = jax.random.PRNGKey(0)
    pk, dk, tk, zk, uk = jax.random.split(key, 5)
    params = make_params(pk, cfg)

    data = jax.random.randint(dk, (B, q_len), 0, cfg["n_token"])
    target = jax.random.randint(tk, (B, q_len), 0, cfg["n_token"])
    z_hist = jax.random.normal(zk, (B, cfg["mem_len"], cfg["d_model"]), jnp.float32) * 0.1
    u_hist = jax.random.normal(
        uk, (B, cfg["mem_len"], 3 * cfg["n_head"] * cfg["d_head"]), jnp.float32) * 0.1

    fwd = jax.jit(functools.partial(deq_transformer_lm_forward, cfg=cfg, n_fp_iter=4))
    loss, new_mems, info = fwd(params, data, target, [z_hist, u_hist])
    jax.block_until_ready((loss, new_mems, info))
    print("KERNEL_OK")
</pallas_src>

<mosaic_0001>
module attributes {stable_mosaic.version = 11 : i64} {
  func.func @_linear_kernel(%arg0: i32, %arg1: memref<16x32xf32, #tpu.memory_space<vmem>>, %arg2: memref<32x32xbf16, #tpu.memory_space<vmem>>, %arg3: memref<1x32xf32, #tpu.memory_space<vmem>>, %arg4: memref<16x32xf32, #tpu.memory_space<vmem>>) attributes {dimension_semantics = [#tpu.dimension_semantics<parallel>], iteration_bounds = array<i64: 1>, scalar_prefetch = 0 : i64, scratch_operands = 0 : i64, tpu.core_type = #tpu.core_type<tc>, window_params = [{transform_indices = @transform_0, window_bounds = array<i64: 16, 32>}, {pipeline_mode = #tpu.pipeline_mode<synchronous>, transform_indices = @transform_1, window_bounds = array<i64: 32, 32>}, {pipeline_mode = #tpu.pipeline_mode<synchronous>, transform_indices = @transform_2, window_bounds = array<i64: 1, 32>}, {transform_indices = @transform_3, window_bounds = array<i64: 16, 32>}]} {
    %c0 = arith.constant 0 : index
    %c0_0 = arith.constant 0 : index
    %0 = vector.load %arg1[%c0, %c0_0] : memref<16x32xf32, #tpu.memory_space<vmem>>, vector<16x32xf32>
    %1 = arith.truncf %0 : vector<16x32xf32> to vector<16x32xbf16>
    %c0_1 = arith.constant 0 : index
    %c0_2 = arith.constant 0 : index
    %2 = vector.load %arg2[%c0_1, %c0_2] : memref<32x32xbf16, #tpu.memory_space<vmem>>, vector<32x32xbf16>
    %cst = arith.constant dense<0.000000e+00> : vector<16x32xf32>
    %3 = tpu.matmul %1, %2, %cst {dimension_numbers = #tpu.dot_dimension_numbers<[1], [0], [0], [1], [0, 0, 1, 1], [], []>} : vector<16x32xbf16>, vector<32x32xbf16>, vector<16x32xf32> -> vector<16x32xf32>
    %c0_3 = arith.constant 0 : index
    %c0_4 = arith.constant 0 : index
    %4 = vector.load %arg3[%c0_3, %c0_4] : memref<1x32xf32, #tpu.memory_space<vmem>>, vector<1x32xf32>
    %5 = vector.broadcast %4 : vector<1x32xf32> to vector<16x32xf32>
    %6 = arith.addf %3, %5 : vector<16x32xf32>
    %c0_5 = arith.constant 0 : index
    %c0_6 = arith.constant 0 : index
    %7 = vector.load %arg4[%c0_5, %c0_6] : memref<16x32xf32, #tpu.memory_space<vmem>>, vector<16x32xf32>
    tpu.vector_store %arg4[%c0_5, %c0_6], %6 {strides = array<i32>} : memref<16x32xf32, #tpu.memory_space<vmem>>, vector<16x32xf32>,
    return
  }
  func.func @transform_0(%arg0: i32) -> (i32, i32) {
    %c0_i32 = arith.constant 0 : i32
    %c0_i32_0 = arith.constant 0 : i32
    return %arg0, %c0_i32 : i32, i32
  }
  func.func @transform_1(%arg0: i32) -> (i32, i32) {
    %c0_i32 = arith.constant 0 : i32
    %c0_i32_0 = arith.constant 0 : i32
    %c0_i32_1 = arith.constant 0 : i32
    return %c0_i32, %c0_i32_0 : i32, i32
  }
  func.func @transform_2(%arg0: i32) -> (i32, i32) {
    %c0_i32 = arith.constant 0 : i32
    %c0_i32_0 = arith.constant 0 : i32
    %c0_i32_1 = arith.constant 0 : i32
    return %c0_i32, %c0_i32_0 : i32, i32
  }
  func.func @transform_3(%arg0: i32) -> (i32, i32) {
    %c0_i32 = arith.constant 0 : i32
    %c0_i32_0 = arith.constant 0 : i32
    return %arg0, %c0_i32 : i32, i32
  }
}

module attributes {stable_mosaic.version = 11 : i64} {
  func.func @_linear_kernel(%arg0: i32, %arg1: memref<16x32xf32, #tpu.memory_space<vmem>>, %arg2: memref<32x96xbf16, #tpu.memory_space<vmem>>, %arg3: memref<1x96xf32, #tpu.memory_space<vmem>>, %arg4: memref<16x96xf32, #tpu.memory_space<vmem>>) attributes {dimension_semantics = [#tpu.dimension_semantics<parallel>], iteration_bounds = array<i64: 1>, scalar_prefetch = 0 : i64, scratch_operands = 0 : i64, tpu.core_type = #tpu.core_type<tc>, window_params = [{transform_indices = @transform_0, window_bounds = array<i64: 16, 32>}, {pipeline_mode = #tpu.pipeline_mode<synchronous>, transform_indices = @transform_1, window_bounds = array<i64: 32, 96>}, {pipeline_mode = #tpu.pipeline_mode<synchronous>, transform_indices = @transform_2, window_bounds = array<i64: 1, 96>}, {transform_indices = @transform_3, window_bounds = array<i64: 16, 96>}]} {
    %c0 = arith.constant 0 : index
    %c0_0 = arith.constant 0 : index
    %0 = vector.load %arg1[%c0, %c0_0] : memref<16x32xf32, #tpu.memory_space<vmem>>, vector<16x32xf32>
    %1 = arith.truncf %0 : vector<16x32xf32> to vector<16x32xbf16>
    %c0_1 = arith.constant 0 : index
    %c0_2 = arith.constant 0 : index
    %2 = vector.load %arg2[%c0_1, %c0_2] : memref<32x96xbf16, #tpu.memory_space<vmem>>, vector<32x96xbf16>
    %cst = arith.constant dense<0.000000e+00> : vector<16x96xf32>
    %3 = tpu.matmul %1, %2, %cst {dimension_numbers = #tpu.dot_dimension_numbers<[1], [0], [0], [1], [0, 0, 1, 1], [], []>} : vector<16x32xbf16>, vector<32x96xbf16>, vector<16x96xf32> -> vector<16x96xf32>
    %c0_3 = arith.constant 0 : index
    %c0_4 = arith.constant 0 : index
    %4 = vector.load %arg3[%c0_3, %c0_4] : memref<1x96xf32, #tpu.memory_space<vmem>>, vector<1x96xf32>
    %5 = vector.broadcast %4 : vector<1x96xf32> to vector<16x96xf32>
    %6 = arith.addf %3, %5 : vector<16x96xf32>
    %c0_5 = arith.constant 0 : index
    %c0_6 = arith.constant 0 : index
    %7 = vector.load %arg4[%c0_5, %c0_6] : memref<16x96xf32, #tpu.memory_space<vmem>>, vector<16x96xf32>
    tpu.vector_store %arg4[%c0_5, %c0_6], %6 {strides = array<i32>} : memref<16x96xf32, #tpu.memory_space<vmem>>, vector<16x96xf32>,
    return
  }
  func.func @transform_0(%arg0: i32) -> (i32, i32) {
    %c0_i32 = arith.constant 0 : i32
    %c0_i32_0 = arith.constant 0 : i32
    return %arg0, %c0_i32 : i32, i32
  }
  func.func @transform_1(%arg0: i32) -> (i32, i32) {
    %c0_i32 = arith.constant 0 : i32
    %c0_i32_0 = arith.constant 0 : i32
    %c0_i32_1 = arith.constant 0 : i32
    return %c0_i32, %c0_i32_0 : i32, i32
  }
  func.func @transform_2(%arg0: i32) -> (i32, i32) {
    %c0_i32 = arith.constant 0 : i32
    %c0_i32_0 = arith.constant 0 : i32
    %c0_i32_1 = arith.constant 0 : i32
    return %c0_i32, %c0_i32_0 : i32, i32
  }
  func.func @transform_3(%arg0: i32) -> (i32, i32) {
    %c0_i32 = arith.constant 0 : i32
    %c0_i32_0 = arith.constant 0 : i32
    return %arg0, %c0_i32 : i32, i32
  }
}

module attributes {stable_mosaic.version = 11 : i64} {
  func.func @_attn_layer_kernel(%arg0: i32, %arg1: memref<1x16x32xf32, #tpu.memory_space<vmem>>, %arg2: memref<1x16x96xf32, #tpu.memory_space<vmem>>, %arg3: memref<1x8x32xf32, #tpu.memory_space<vmem>>, %arg4: memref<1x32xf32, #tpu.memory_space<vmem>>, %arg5: memref<1x32xf32, #tpu.memory_space<vmem>>, %arg6: memref<32x96xbf16, #tpu.memory_space<vmem>>, %arg7: memref<16x32xbf16, #tpu.memory_space<vmem>>, %arg8: memref<4x8xf32, #tpu.memory_space<vmem>>, %arg9: memref<4x8xf32, #tpu.memory_space<vmem>>, %arg10: memref<1x32xf32, #tpu.memory_space<vmem>>, %arg11: memref<1x32xf32, #tpu.memory_space<vmem>>, %arg12: memref<32x32xbf16, #tpu.memory_space<vmem>>, %arg13: memref<1x32xf32, #tpu.memory_space<vmem>>, %arg14: memref<1x8x32xf32, #tpu.memory_space<vmem>>) attributes {dimension_semantics = [#tpu.dimension_semantics<parallel>], iteration_bounds = array<i64: 2>, scalar_prefetch = 0 : i64, scratch_operands = 0 : i64, tpu.core_type = #tpu.core_type<tc>, window_params = [{transform_indices = @transform_0, window_bounds = array<i64: 1, 16, 32>}, {transform_indices = @transform_1, window_bounds = array<i64: 1, 16, 96>}, {transform_indices = @transform_2, window_bounds = array<i64: 1, 8, 32>}, {pipeline_mode = #tpu.pipeline_mode<synchronous>, transform_indices = @transform_3, window_bounds = array<i64: 1, 32>}, {pipeline_mode = #tpu.pipeline_mode<synchronous>, transform_indices = @transform_4, window_bounds = array<i64: 1, 32>}, {pipeline_mode = #tpu.pipeline_mode<synchronous>, transform_indices = @transform_5, window_bounds = array<i64: 32, 96>}, {pipeline_mode = #tpu.pipeline_mode<synchronous>, transform_indices = @transform_6, window_bounds = array<i64: 16, 32>}, {pipeline_mode = #tpu.pipeline_mode<synchronous>, transform_indices = @transform_7, window_bounds = array<i64: 4, 8>}, {pipeline_mode = #tpu.pipeline_mode<synchronous>, transform_indices = @transform_8, window_bounds = array<i64: 4, 8>}, {pipeline_mode = #tpu.pipeline_mode<synchronous>, transform_indices = @transform_9, window_bounds = array<i64: 1, 32>}, {pipeline_mode = #tpu.pipeline_mode<synchronous>, transform_indices = @transform_10, window_bounds = array<i64: 1, 32>}, {pipeline_mode = #tpu.pipeline_mode<synchronous>, transform_indices = @transform_11, window_bounds = array<i64: 32, 32>}, {pipeline_mode = #tpu.pipeline_mode<synchronous>, transform_indices = @transform_12, window_bounds = array<i64: 1, 32>}, {transform_indices = @transform_13, window_bounds = array<i64: 1, 8, 32>}]} {
    %c0 = arith.constant 0 : index
    %c0_0 = arith.constant 0 : index
    %c0_1 = arith.constant 0 : index
    %0 = vector.load %arg1[%c0, %c0_0, %c0_1] : memref<1x16x32xf32, #tpu.memory_space<vmem>>, vector<1x16x32xf32>
    %1 = vector.shape_cast %0 : vector<1x16x32xf32> to vector<16x32xf32>
    %cst = arith.constant dense<0.000000e+00> : vector<16xf32>
    %2 = vector.multi_reduction <add>, %1, %cst [1] : vector<16x32xf32> to vector<16xf32>
    %3 = vector.shape_cast %2 : vector<16xf32> to vector<16x1xf32>
    %cst_2 = arith.constant 3.200000e+01 : f32
    %4 = vector.broadcast %cst_2 : f32 to vector<16x1xf32>
    %5 = arith.divf %3, %4 : vector<16x1xf32>
    %6 = vector.broadcast %5 : vector<16x1xf32> to vector<16x32xf32>
    %7 = arith.subf %1, %6 : vector<16x32xf32>
    %8 = arith.mulf %7, %7 : vector<16x32xf32>
    %cst_3 = arith.constant dense<0.000000e+00> : vector<16xf32>
    %9 = vector.multi_reduction <add>, %8, %cst_3 [1] : vector<16x32xf32> to vector<16xf32>
    %10 = vector.shape_cast %9 : vector<16xf32> to vector<16x1xf32>
    %cst_4 = arith.constant 3.200000e+01 : f32
    %11 = vector.broadcast %cst_4 : f32 to vector<16x1xf32>
    %12 = arith.divf %10, %11 : vector<16x1xf32>
    %13 = vector.broadcast %5 : vector<16x1xf32> to vector<16x32xf32>
    %14 = arith.subf %1, %13 : vector<16x32xf32>
    %cst_5 = arith.constant 9.99999974E-6 : f32
    %15 = vector.broadcast %cst_5 : f32 to vector<16x1xf32>
    %16 = arith.addf %12, %15 : vector<16x1xf32>
    %17 = math.rsqrt %16 : vector<16x1xf32>
    %18 = vector.broadcast %17 : vector<16x1xf32> to vector<16x32xf32>
    %19 = arith.mulf %14, %18 : vector<16x32xf32>
    %c0_6 = arith.constant 0 : index
    %c0_7 = arith.constant 0 : index
    %20 = vector.load %arg4[%c0_6, %c0_7] : memref<1x32xf32, #tpu.memory_space<vmem>>, vector<1x32xf32>
    %21 = vector.broadcast %20 : vector<1x32xf32> to vector<16x32xf32>
    %22 = arith.mulf %19, %21 : vector<16x32xf32>
    %c0_8 = arith.constant 0 : index
    %c0_9 = arith.constant 0 : index
    %23 = vector.load %arg5[%c0_8, %c0_9] : memref<1x32xf32, #tpu.memory_space<vmem>>, vector<1x32xf32>
    %24 = vector.broadcast %23 : vector<1x32xf32> to vector<16x32xf32>
    %25 = arith.addf %22, %24 : vector<16x32xf32>
    %26 = arith.truncf %25 : vector<16x32xf32> to vector<16x32xbf16>
    %c0_10 = arith.constant 0 : index
    %c0_11 = arith.constant 0 : index
    %27 = vector.load %arg6[%c0_10, %c0_11] : memref<32x96xbf16, #tpu.memory_space<vmem>>, vector<32x96xbf16>
    %cst_12 = arith.constant dense<0.000000e+00> : vector<16x96xf32>
    %28 = tpu.matmul %26, %27, %cst_12 {dimension_numbers = #tpu.dot_dimension_numbers<[1], [0], [0], [1], [0, 0, 1, 1], [], []>} : vector<16x32xbf16>, vector<32x96xbf16>, vector<16x96xf32> -> vector<16x96xf32>
    %c0_13 = arith.constant 0 : index
    %c0_14 = arith.constant 0 : index
    %c0_15 = arith.constant 0 : index
    %29 = vector.load %arg2[%c0_13, %c0_14, %c0_15] : memref<1x16x96xf32, #tpu.memory_space<vmem>>, vector<1x16x96xf32>
    %30 = vector.shape_cast %29 : vector<1x16x96xf32> to vector<16x96xf32>
    %31 = arith.addf %28, %30 : vector<16x96xf32>
    %32 = tpu.iota {dimensions = array<i32: 0>} : vector<8x16xi32>
    %33 = tpu.iota {dimensions = array<i32: 1>} : vector<8x16xi32>
    %c8_i32 = arith.constant 8 : i32
    %34 = vector.broadcast %c8_i32 : i32 to vector<8x16xi32>
    %35 = arith.addi %32, %34 : vector<8x16xi32>
    %36 = arith.cmpi sgt, %33, %35 : vector<8x16xi32>
    %c8_i32_16 = arith.constant 8 : i32
    %37 = vector.broadcast %c8_i32_16 : i32 to vector<8x16xi32>
    %38 = arith.addi %32, %37 : vector<8x16xi32>
    %c1000_i32 = arith.constant 1000 : i32
    %39 = vector.broadcast %c1000_i32 : i32 to vector<8x16xi32>
    %40 = arith.subi %38, %39 : vector<8x16xi32>
    %41 = arith.cmpi sle, %33, %40 : vector<8x16xi32>
    %42 = arith.ori %36, %41 : vector<8x16xi1>
    %c0_17 = arith.constant 0 : index
    %c0_18 = arith.constant 0 : index
    %43 = vector.load %arg8[%c0_17, %c0_18] : memref<4x8xf32, #tpu.memory_space<vmem>>, vector<4x8xf32>
    %c0_19 = arith.constant 0 : index
    %c0_20 = arith.constant 0 : index
    %44 = vector.load %arg9[%c0_19, %c0_20] : memref<4x8xf32, #tpu.memory_space<vmem>>, vector<4x8xf32>
    %c0_21 = arith.constant 0 : index
    %c0_22 = arith.constant 0 : index
    %45 = vector.load %arg7[%c0_21, %c0_22] : memref<16x32xbf16, #tpu.memory_space<vmem>>, vector<16x32xbf16>
    %46 = vector.extract_strided_slice %31 {offsets = [8, 0], sizes = [8, 8], strides = [1, 1]} : vector<16x96xf32> to vector<8x8xf32>
    %47 = vector.extract_strided_slice %31 {offsets = [0, 8], sizes = [16, 8], strides = [1, 1]} : vector<16x96xf32> to vector<16x8xf32>
    %48 = vector.extract_strided_slice %31 {offsets = [0, 16], sizes = [16, 8], strides = [1, 1]} : vector<16x96xf32> to vector<16x8xf32>
    %49 = vector.extract_strided_slice %45 {offsets = [0, 0], sizes = [16, 8], strides = [1, 1]} : vector<16x32xbf16> to vector<16x8xbf16>
    %50 = vector.extract_strided_slice %43 {offsets = [0, 0], sizes = [1, 8], strides = [1, 1]} : vector<4x8xf32> to vector<1x8xf32>
    %51 = vector.broadcast %50 : vector<1x8xf32> to vector<8x8xf32>
    %52 = arith.addf %46, %51 : vector<8x8xf32>
    %53 = arith.truncf %52 : vector<8x8xf32> to vector<8x8xbf16>
    %54 = vector.extract_strided_slice %44 {offsets = [0, 0], sizes = [1, 8], strides = [1, 1]} : vector<4x8xf32> to vector<1x8xf32>
    %55 = vector.broadcast %54 : vector<1x8xf32> to vector<8x8xf32>
    %56 = arith.addf %46, %55 : vector<8x8xf32>
    %57 = arith.truncf %56 : vector<8x8xf32> to vector<8x8xbf16>
    %58 = arith.truncf %47 : vector<16x8xf32> to vector<16x8xbf16>
    %cst_23 = arith.constant dense<0.000000e+00> : vector<8x16xf32>
    %59 = tpu.matmul %53, %58, %cst_23 {dimension_numbers = #tpu.dot_dimension_numbers<[1], [1], [0], [0], [0, 0, 1, 0], [], []>} : vector<8x8xbf16>, vector<16x8xbf16>, vector<8x16xf32> -> vector<8x16xf32>
    %cst_24 = arith.constant dense<0.000000e+00> : vector<8x16xf32>
    %60 = tpu.matmul %57, %49, %cst_24 {dimension_numbers = #tpu.dot_dimension_numbers<[1], [1], [0], [0], [0, 0, 1, 0], [], []>} : vector<8x8xbf16>, vector<16x8xbf16>, vector<8x16xf32> -> vector<8x16xf32>
    %cst_25 = arith.constant 0.000000e+00 : f32
    %61 = vector.broadcast %cst_25 : f32 to vector<8x7xf32>
    %62 = tpu.concatenate %60, %61 in 1 : vector<8x16xf32>, vector<8x7xf32> -> vector<8x23xf32>
    %63 = vector.extract_strided_slice %62 {offsets = [0, 7], sizes = [1, 16], strides = [1, 1]} : vector<8x23xf32> to vector<1x16xf32>
    %64 = vector.extract_strided_slice %62 {offsets = [1, 6], sizes = [1, 16], strides = [1, 1]} : vector<8x23xf32> to vector<1x16xf32>
    %65 = vector.extract_strided_slice %62 {offsets = [2, 5], sizes = [1, 16], strides = [1, 1]} : vector<8x23xf32> to vector<1x16xf32>
    %66 = vector.extract_strided_slice %62 {offsets = [3, 4], sizes = [1, 16], strides = [1, 1]} : vector<8x23xf32> to vector<1x16xf32>
    %67 = vector.extract_strided_slice %62 {offsets = [4, 3], sizes = [1, 16], strides = [1, 1]} : vector<8x23xf32> to vector<1x16xf32>
    %68 = vector.extract_strided_slice %62 {offsets = [5, 2], sizes = [1, 16], strides = [1, 1]} : vector<8x23xf32> to vector<1x16xf32>
    %69 = vector.extract_strided_slice %62 {offsets = [6, 1], sizes = [1, 16], strides = [1, 1]} : vector<8x23xf32> to vector<1x16xf32>
    %70 = vector.extract_strided_slice %62 {offsets = [7, 0], sizes = [1, 16], strides = [1, 1]} : vector<8x23xf32> to vector<1x16xf32>
    %71 = tpu.concatenate %63, %64, %65, %66, %67, %68, %69, %70 in 0 : vector<1x16xf32>, vector<1x16xf32>, vector<1x16xf32>, vector<1x16xf32>, vector<1x16xf32>, vector<1x16xf32>, vector<1x16xf32>, vector<1x16xf32> -> vector<8x16xf32>
    %72 = arith.addf %59, %71 : vector<8x16xf32>
    %cst_26 = arith.constant 0.353553385 : f32
    %73 = vector.broadcast %cst_26 : f32 to vector<8x16xf32>
    %74 = arith.mulf %72, %73 : vector<8x16xf32>
    %cst_27 = arith.constant -1.000000e+30 : f32
    %75 = vector.broadcast %cst_27 : f32 to vector<8x16xf32>
    %76 = arith.select %42, %75, %74 : vector<8x16xi1>, vector<8x16xf32>
    %cst_28 = arith.constant dense<0xFF800000> : vector<8xf32>
    %77 = vector.multi_reduction <maximumf>, %76, %cst_28 [1] : vector<8x16xf32> to vector<8xf32>
    %78 = vector.shape_cast %77 : vector<8xf32> to vector<8x1xf32>
    %79 = vector.broadcast %78 : vector<8x1xf32> to vector<8x16xf32>
    %80 = arith.subf %76, %79 : vector<8x16xf32>
    %81 = math.exp %80 : vector<8x16xf32>
    %cst_29 = arith.constant dense<0.000000e+00> : vector<8xf32>
    %82 = vector.multi_reduction <add>, %81, %cst_29 [1] : vector<8x16xf32> to vector<8xf32>
    %83 = vector.shape_cast %82 : vector<8xf32> to vector<8x1xf32>
    %84 = tpu.reciprocal %83 {approx = true} : vector<8x1xf32> -> vector<8x1xf32>
    %85 = vector.broadcast %84 : vector<8x1xf32> to vector<8x16xf32>
    %86 = arith.mulf %81, %85 : vector<8x16xf32>
    %87 = arith.truncf %86 : vector<8x16xf32> to vector<8x16xbf16>
    %88 = arith.truncf %48 : vector<16x8xf32> to vector<16x8xbf16>
    %cst_30 = arith.constant dense<0.000000e+00> : vector<8x8xf32>
    %89 = tpu.matmul %87, %88, %cst_30 {dimension_numbers = #tpu.dot_dimension_numbers<[1], [0], [0], [1], [0, 0, 1, 1], [], []>} : vector<8x16xbf16>, vector<16x8xbf16>, vector<8x8xf32> -> vector<8x8xf32>
    %90 = vector.extract_strided_slice %31 {offsets = [8, 24], sizes = [8, 8], strides = [1, 1]} : vector<16x96xf32> to vector<8x8xf32>
    %91 = vector.extract_strided_slice %31 {offsets = [0, 32], sizes = [16, 8], strides = [1, 1]} : vector<16x96xf32> to vector<16x8xf32>
    %92 = vector.extract_strided_slice %31 {offsets = [0, 40], sizes = [16, 8], strides = [1, 1]} : vector<16x96xf32> to vector<16x8xf32>
    %93 = vector.extract_strided_slice %45 {offsets = [0, 8], sizes = [16, 8], strides = [1, 1]} : vector<16x32xbf16> to vector<16x8xbf16>
    %94 = vector.extract_strided_slice %43 {offsets = [1, 0], sizes = [1, 8], strides = [1, 1]} : vector<4x8xf32> to vector<1x8xf32>
    %95 = vector.broadcast %94 : vector<1x8xf32> to vector<8x8xf32>
    %96 = arith.addf %90, %95 : vector<8x8xf32>
    %97 = arith.truncf %96 : vector<8x8xf32> to vector<8x8xbf16>
    %98 = vector.extract_strided_slice %44 {offsets = [1, 0], sizes = [1, 8], strides = [1, 1]} : vector<4x8xf32> to vector<1x8xf32>
    %99 = vector.broadcast %98 : vector<1x8xf32> to vector<8x8xf32>
    %100 = arith.addf %90, %99 : vector<8x8xf32>
    %101 = arith.truncf %100 : vector<8x8xf32> to vector<8x8xbf16>
    %102 = arith.truncf %91 : vector<16x8xf32> to vector<16x8xbf16>
    %cst_31 = arith.constant dense<0.000000e+00> : vector<8x16xf32>
    %103 = tpu.matmul %97, %102, %cst_31 {dimension_numbers = #tpu.dot_dimension_numbers<[1], [1], [0], [0], [0, 0, 1, 0], [], []>} : vector<8x8xbf16>, vector<16x8xbf16>, vector<8x16xf32> -> vector<8x16xf32>
    %cst_32 = arith.constant dense<0.000000e+00> : vector<8x16xf32>
    %104 = tpu.matmul %101, %93, %cst_32 {dimension_numbers = #tpu.dot_dimension_numbers<[1], [1], [0], [0], [0, 0, 1, 0], [], []>} : vector<8x8xbf16>, vector<16x8xbf16>, vector<8x16xf32> -> vector<8x16xf32>
    %cst_33 = arith.constant 0.000000e+00 : f32
    %105 = vector.broadcast %cst_33 : f32 to vector<8x7xf32>
    %106 = tpu.concatenate %104, %105 in 1 : vector<8x16xf32>, vector<8x7xf32> -> vector<8x23xf32>
    %107 = vector.extract_strided_slice %106 {offsets = [0, 7], sizes = [1, 16], strides = [1, 1]} : vector<8x23xf32> to vector<1x16xf32>
    %108 = vector.extract_strided_slice %106 {offsets = [1, 6], sizes = [1, 16], strides = [1, 1]} : vector<8x23xf32> to vector<1x16xf32>
    %109 = vector.extract_strided_slice %106 {offsets = [2, 5], sizes = [1, 16], strides = [1, 1]} : vector<8x23xf32> to vector<1x16xf32>
    %110 = vector.extract_strided_slice %106 {offsets = [3, 4], sizes = [1, 16], strides = [1, 1]} : vector<8x23xf32> to vector<1x16xf32>
    %111 = vector.extract_strided_slice %106 {offsets = [4, 3], sizes = [1, 16], strides = [1, 1]} : vector<8x23xf32> to vector<1x16xf32>
    %112 = vector.extract_strided_slice %106 {offsets = [5, 2], sizes = [1, 16], strides = [1, 1]} : vector<8x23xf32> to vector<1x16xf32>
    %113 = vector.extract_strided_slice %106 {offsets = [6, 1], sizes = [1, 16], strides = [1, 1]} : vector<8x23xf32> to vector<1x16xf32>
    %114 = vector.extract_strided_slice %106 {offsets = [7, 0], sizes = [1, 16], strides = [1, 1]} : vector<8x23xf32> to vector<1x16xf32>
    %115 = tpu.concatenate %107, %108, %109, %110, %111, %112, %113, %114 in 0 : vector<1x16xf32>, vector<1x16xf32>, vector<1x16xf32>, vector<1x16xf32>, vector<1x16xf32>, vector<1x16xf32>, vector<1x16xf32>, vector<1x16xf32> -> vector<8x16xf32>
    %116 = arith.addf %103, %115 : vector<8x16xf32>
    %cst_34 = arith.constant 0.353553385 : f32
    %117 = vector.broadcast %cst_34 : f32 to vector<8x16xf32>
    %118 = arith.mulf %116, %117 : vector<8x16xf32>
    %cst_35 = arith.constant -1.000000e+30 : f32
    %119 = vector.broadcast %cst_35 : f32 to vector<8x16xf32>
    %120 = arith.select %42, %119, %118 : vector<8x16xi1>, vector<8x16xf32>
    %cst_36 = arith.constant dense<0xFF800000> : vector<8xf32>
    %121 = vector.multi_reduction <maximumf>, %120, %cst_36 [1] : vector<8x16xf32> to vector<8xf32>
    %122 = vector.shape_cast %121 : vector<8xf32> to vector<8x1xf32>
    %123 = vector.broadcast %122 : vector<8x1xf32> to vector<8x16xf32>
    %124 = arith.subf %120, %123 : vector<8x16xf32>
    %125 = math.exp %124 : vector<8x16xf32>
    %cst_37 = arith.constant dense<0.000000e+00> : vector<8xf32>
    %126 = vector.multi_reduction <add>, %125, %cst_37 [1] : vector<8x16xf32> to vector<8xf32>
    %127 = vector.shape_cast %126 : vector<8xf32> to vector<8x1xf32>
    %128 = tpu.reciprocal %127 {approx = true} : vector<8x1xf32> -> vector<8x1xf32>
    %129 = vector.broadcast %128 : vector<8x1xf32> to vector<8x16xf32>
    %130 = arith.mulf %125, %129 : vector<8x16xf32>
    %131 = arith.truncf %130 : vector<8x16xf32> to vector<8x16xbf16>
    %132 = arith.truncf %92 : vector<16x8xf32> to vector<16x8xbf16>
    %cst_38 = arith.constant dense<0.000000e+00> : vector<8x8xf32>
    %133 = tpu.matmul %131, %132, %cst_38 {dimension_numbers = #tpu.dot_dimension_numbers<[1], [0], [0], [1], [0, 0, 1, 1], [], []>} : vector<8x16xbf16>, vector<16x8xbf16>, vector<8x8xf32> -> vector<8x8xf32>
    %134 = vector.extract_strided_slice %31 {offsets = [8, 48], sizes = [8, 8], strides = [1, 1]} : vector<16x96xf32> to vector<8x8xf32>
    %135 = vector.extract_strided_slice %31 {offsets = [0, 56], sizes = [16, 8], strides = [1, 1]} : vector<16x96xf32> to vector<16x8xf32>
    %136 = vector.extract_strided_slice %31 {offsets = [0, 64], sizes = [16, 8], strides = [1, 1]} : vector<16x96xf32> to vector<16x8xf32>
    %137 = vector.extract_strided_slice %45 {offsets = [0, 16], sizes = [16, 8], strides = [1, 1]} : vector<16x32xbf16> to vector<16x8xbf16>
    %138 = vector.extract_strided_slice %43 {offsets = [2, 0], sizes = [1, 8], strides = [1, 1]} : vector<4x8xf32> to vector<1x8xf32>
    %139 = vector.broadcast %138 : vector<1x8xf32> to vector<8x8xf32>
    %140 = arith.addf %134, %139 : vector<8x8xf32>
    %141 = arith.truncf %140 : vector<8x8xf32> to vector<8x8xbf16>
    %142 = vector.extract_strided_slice %44 {offsets = [2, 0], sizes = [1, 8], strides = [1, 1]} : vector<4x8xf32> to vector<1x8xf32>
    %143 = vector.broadcast %142 : vector<1x8xf32> to vector<8x8xf32>
    %144 = arith.addf %134, %143 : vector<8x8xf32>
    %145 = arith.truncf %144 : vector<8x8xf32> to vector<8x8xbf16>
    %146 = arith.truncf %135 : vector<16x8xf32> to vector<16x8xbf16>
    %cst_39 = arith.constant dense<0.000000e+00> : vector<8x16xf32>
    %147 = tpu.matmul %141, %146, %cst_39 {dimension_numbers = #tpu.dot_dimension_numbers<[1], [1], [0], [0], [0, 0, 1, 0], [], []>} : vector<8x8xbf16>, vector<16x8xbf16>, vector<8x16xf32> -> vector<8x16xf32>
    %cst_40 = arith.constant dense<0.000000e+00> : vector<8x16xf32>
    %148 = tpu.matmul %145, %137, %cst_40 {dimension_numbers = #tpu.dot_dimension_numbers<[1], [1], [0], [0], [0, 0, 1, 0], [], []>} : vector<8x8xbf16>, vector<16x8xbf16>, vector<8x16xf32> -> vector<8x16xf32>
    %cst_41 = arith.constant 0.000000e+00 : f32
    %149 = vector.broadcast %cst_41 : f32 to vector<8x7xf32>
    %150 = tpu.concatenate %148, %149 in 1 : vector<8x16xf32>, vector<8x7xf32> -> vector<8x23xf32>
    %151 = vector.extract_strided_slice %150 {offsets = [0, 7], sizes = [1, 16], strides = [1, 1]} : vector<8x23xf32> to vector<1x16xf32>
    %152 = vector.extract_strided_slice %150 {offsets = [1, 6], sizes = [1, 16], strides = [1, 1]} : vector<8x23xf32> to vector<1x16xf32>
    %153 = vector.extract_strided_slice %150 {offsets = [2, 5], sizes = [1, 16], strides = [1, 1]} : vector<8x23xf32> to vector<1x16xf32>
    %154 = vector.extract_strided_slice %150 {offsets = [3, 4], sizes = [1, 16], strides = [1, 1]} : vector<8x23xf32> to vector<1x16xf32>
    %155 = vector.extract_strided_slice %150 {offsets = [4, 3], sizes = [1, 16], strides = [1, 1]} : vector<8x23xf32> to vector<1x16xf32>
    %156 = vector.extract_strided_slice %150 {offsets = [5, 2], sizes = [1, 16], strides = [1, 1]} : vector<8x23xf32> to vector<1x16xf32>
    %157 = vector.extract_strided_slice %150 {offsets = [6, 1], sizes = [1, 16], strides = [1, 1]} : vector<8x23xf32> to vector<1x16xf32>
    %158 = vector.extract_strided_slice %150 {offsets = [7, 0], sizes = [1, 16], strides = [1, 1]} : vector<8x23xf32> to vector<1x16xf32>
    %159 = tpu.concatenate %151, %152, %153, %154, %155, %156, %157, %158 in 0 : vector<1x16xf32>, vector<1x16xf32>, vector<1x16xf32>, vector<1x16xf32>, vector<1x16xf32>, vector<1x16xf32>, vector<1x16xf32>, vector<1x16xf32> -> vector<8x16xf32>
    %160 = arith.addf %147, %159 : vector<8x16xf32>
    %cst_42 = arith.constant 0.353553385 : f32
    %161 = vector.broadcast %cst_42 : f32 to vector<8x16xf32>
    %162 = arith.mulf %160, %161 : vector<8x16xf32>
    %cst_43 = arith.constant -1.000000e+30 : f32
    %163 = vector.broadcast %cst_43 : f32 to vector<8x16xf32>
    %164 = arith.select %42, %163, %162 : vector<8x16xi1>, vector<8x16xf32>
    %cst_44 = arith.constant dense<0xFF800000> : vector<8xf32>
    %165 = vector.multi_reduction <maximumf>, %164, %cst_44 [1] : vector<8x16xf32> to vector<8xf32>
    %166 = vector.shape_cast %165 : vector<8xf32> to vector<8x1xf32>
    %167 = vector.broadcast %166 : vector<8x1xf32> to vector<8x16xf32>
    %168 = arith.subf %164, %167 : vector<8x16xf32>
    %169 = math.exp %168 : vector<8x16xf32>
    %cst_45 = arith.constant dense<0.000000e+00> : vector<8xf32>
    %170 = vector.multi_reduction <add>, %169, %cst_45 [1] : vector<8x16xf32> to vector<8xf32>
    %171 = vector.shape_cast %170 : vector<8xf32> to vector<8x1xf32>
    %172 = tpu.reciprocal %171 {approx = true} : vector<8x1xf32> -> vector<8x1xf32>
    %173 = vector.broadcast %172 : vector<8x1xf32> to vector<8x16xf32>
    %174 = arith.mulf %169, %173 : vector<8x16xf32>
    %175 = arith.truncf %174 : vector<8x16xf32> to vector<8x16xbf16>
    %176 = arith.truncf %136 : vector<16x8xf32> to vector<16x8xbf16>
    %cst_46 = arith.constant dense<0.000000e+00> : vector<8x8xf32>
    %177 = tpu.matmul %175, %176, %cst_46 {dimension_numbers = #tpu.dot_dimension_numbers<[1], [0], [0], [1], [0, 0, 1, 1], [], []>} : vector<8x16xbf16>, vector<16x8xbf16>, vector<8x8xf32> -> vector<8x8xf32>
    %178 = vector.extract_strided_slice %31 {offsets = [8, 72], sizes = [8, 8], strides = [1, 1]} : vector<16x96xf32> to vector<8x8xf32>
    %179 = vector.extract_strided_slice %31 {offsets = [0, 80], sizes = [16, 8], strides = [1, 1]} : vector<16x96xf32> to vector<16x8xf32>
    %180 = vector.extract_strided_slice %31 {offsets = [0, 88], sizes = [16, 8], strides = [1, 1]} : vector<16x96xf32> to vector<16x8xf32>
    %181 = vector.extract_strided_slice %45 {offsets = [0, 24], sizes = [16, 8], strides = [1, 1]} : vector<16x32xbf16> to vector<16x8xbf16>
    %182 = vector.extract_strided_slice %43 {offsets = [3, 0], sizes = [1, 8], strides = [1, 1]} : vector<4x8xf32> to vector<1x8xf32>
    %183 = vector.broadcast %182 : vector<1x8xf32> to vector<8x8xf32>
    %184 = arith.addf %178, %183 : vector<8x8xf32>
    %185 = arith.truncf %184 : vector<8x8xf32> to vector<8x8xbf16>
    %186 = vector.extract_strided_slice %44 {offsets = [3, 0], sizes = [1, 8], strides = [1, 1]} : vector<4x8xf32> to vector<1x8xf32>
    %187 = vector.broadcast %186 : vector<1x8xf32> to vector<8x8xf32>
    %188 = arith.addf %178, %187 : vector<8x8xf32>
    %189 = arith.truncf %188 : vector<8x8xf32> to vector<8x8xbf16>
    %190 = arith.truncf %179 : vector<16x8xf32> to vector<16x8xbf16>
    %cst_47 = arith.constant dense<0.000000e+00> : vector<8x16xf32>
    %191 = tpu.matmul %185, %190, %cst_47 {dimension_numbers = #tpu.dot_dimension_numbers<[1], [1], [0], [0], [0, 0, 1, 0], [], []>} : vector<8x8xbf16>, vector<16x8xbf16>, vector<8x16xf32> -> vector<8x16xf32>
    %cst_48 = arith.constant dense<0.000000e+00> : vector<8x16xf32>
    %192 = tpu.matmul %189, %181, %cst_48 {dimension_numbers = #tpu.dot_dimension_numbers<[1], [1], [0], [0], [0, 0, 1, 0], [], []>} : vector<8x8xbf16>, vector<16x8xbf16>, vector<8x16xf32> -> vector<8x16xf32>
    %cst_49 = arith.constant 0.000000e+00 : f32
    %193 = vector.broadcast %cst_49 : f32 to vector<8x7xf32>
    %194 = tpu.concatenate %192, %193 in 1 : vector<8x16xf32>, vector<8x7xf32> -> vector<8x23xf32>
    %195 = vector.extract_strided_slice %194 {offsets = [0, 7], sizes = [1, 16], strides = [1, 1]} : vector<8x23xf32> to vector<1x16xf32>
    %196 = vector.extract_strided_slice %194 {offsets = [1, 6], sizes = [1, 16], strides = [1, 1]} : vector<8x23xf32> to vector<1x16xf32>
    %197 = vector.extract_strided_slice %194 {offsets = [2, 5], sizes = [1, 16], strides = [1, 1]} : vector<8x23xf32> to vector<1x16xf32>
    %198 = vector.extract_strided_slice %194 {offsets = [3, 4], sizes = [1, 16], strides = [1, 1]} : vector<8x23xf32> to vector<1x16xf32>
    %199 = vector.extract_strided_slice %194 {offsets = [4, 3], sizes = [1, 16], strides = [1, 1]} : vector<8x23xf32> to vector<1x16xf32>
    %200 = vector.extract_strided_slice %194 {offsets = [5, 2], sizes = [1, 16], strides = [1, 1]} : vector<8x23xf32> to vector<1x16xf32>
    %201 = vector.extract_strided_slice %194 {offsets = [6, 1], sizes = [1, 16], strides = [1, 1]} : vector<8x23xf32> to vector<1x16xf32>
    %202 = vector.extract_strided_slice %194 {offsets = [7, 0], sizes = [1, 16], strides = [1, 1]} : vector<8x23xf32> to vector<1x16xf32>
    %203 = tpu.concatenate %195, %196, %197, %198, %199, %200, %201, %202 in 0 : vector<1x16xf32>, vector<1x16xf32>, vector<1x16xf32>, vector<1x16xf32>, vector<1x16xf32>, vector<1x16xf32>, vector<1x16xf32>, vector<1x16xf32> -> vector<8x16xf32>
    %204 = arith.addf %191, %203 : vector<8x16xf32>
    %cst_50 = arith.constant 0.353553385 : f32
    %205 = vector.broadcast %cst_50 : f32 to vector<8x16xf32>
    %206 = arith.mulf %204, %205 : vector<8x16xf32>
    %cst_51 = arith.constant -1.000000e+30 : f32
    %207 = vector.broadcast %cst_51 : f32 to vector<8x16xf32>
    %208 = arith.select %42, %207, %206 : vector<8x16xi1>, vector<8x16xf32>
    %cst_52 = arith.constant dense<0xFF800000> : vector<8xf32>
    %209 = vector.multi_reduction <maximumf>, %208, %cst_52 [1] : vector<8x16xf32> to vector<8xf32>
    %210 = vector.shape_cast %209 : vector<8xf32> to vector<8x1xf32>
    %211 = vector.broadcast %210 : vector<8x1xf32> to vector<8x16xf32>
    %212 = arith.subf %208, %211 : vector<8x16xf32>
    %213 = math.exp %212 : vector<8x16xf32>
    %cst_53 = arith.constant dense<0.000000e+00> : vector<8xf32>
    %214 = vector.multi_reduction <add>, %213, %cst_53 [1] : vector<8x16xf32> to vector<8xf32>
    %215 = vector.shape_cast %214 : vector<8xf32> to vector<8x1xf32>
    %216 = tpu.reciprocal %215 {approx = true} : vector<8x1xf32> -> vector<8x1xf32>
    %217 = vector.broadcast %216 : vector<8x1xf32> to vector<8x16xf32>
    %218 = arith.mulf %213, %217 : vector<8x16xf32>
    %219 = arith.truncf %218 : vector<8x16xf32> to vector<8x16xbf16>
    %220 = arith.truncf %180 : vector<16x8xf32> to vector<16x8xbf16>
    %cst_54 = arith.constant dense<0.000000e+00> : vector<8x8xf32>
    %221 = tpu.matmul %219, %220, %cst_54 {dimension_numbers = #tpu.dot_dimension_numbers<[1], [0], [0], [1], [0, 0, 1, 1], [], []>} : vector<8x16xbf16>, vector<16x8xbf16>, vector<8x8xf32> -> vector<8x8xf32>
    %222 = tpu.concatenate %89, %133, %177, %221 in 1 : vector<8x8xf32>, vector<8x8xf32>, vector<8x8xf32>, vector<8x8xf32> -> vector<8x32xf32>
    %cst_55 = arith.constant dense<0.000000e+00> : vector<8xf32>
    %223 = vector.multi_reduction <add>, %222, %cst_55 [1] : vector<8x32xf32> to vector<8xf32>
    %224 = vector.shape_cast %223 : vector<8xf32> to vector<8x1xf32>
    %cst_56 = arith.constant 3.200000e+01 : f32
    %225 = vector.broadcast %cst_56 : f32 to vector<8x1xf32>
    %226 = arith.divf %224, %225 : vector<8x1xf32>
    %227 = vector.broadcast %226 : vector<8x1xf32> to vector<8x32xf32>
    %228 = arith.subf %222, %227 : vector<8x32xf32>
    %229 = arith.mulf %228, %228 : vector<8x32xf32>
    %cst_57 = arith.constant dense<0.000000e+00> : vector<8xf32>
    %230 = vector.multi_reduction <add>, %229, %cst_57 [1] : vector<8x32xf32> to vector<8xf32>
    %231 = vector.shape_cast %230 : vector<8xf32> to vector<8x1xf32>
    %cst_58 = arith.constant 3.200000e+01 : f32
    %232 = vector.broadcast %cst_58 : f32 to vector<8x1xf32>
    %233 = arith.divf %231, %232 : vector<8x1xf32>
    %234 = vector.broadcast %226 : vector<8x1xf32> to vector<8x32xf32>
    %235 = arith.subf %222, %234 : vector<8x32xf32>
    %cst_59 = arith.constant 9.99999974E-6 : f32
    %236 = vector.broadcast %cst_59 : f32 to vector<8x1xf32>
    %237 = arith.addf %233, %236 : vector<8x1xf32>
    %238 = math.rsqrt %237 : vector<8x1xf32>
    %239 = vector.broadcast %238 : vector<8x1xf32> to vector<8x32xf32>
    %240 = arith.mulf %235, %239 : vector<8x32xf32>
    %c0_60 = arith.constant 0 : index
    %c0_61 = arith.constant 0 : index
    %241 = vector.load %arg10[%c0_60, %c0_61] : memref<1x32xf32, #tpu.memory_space<vmem>>, vector<1x32xf32>
    %242 = vector.broadcast %241 : vector<1x32xf32> to vector<8x32xf32>
    %243 = arith.mulf %240, %242 : vector<8x32xf32>
    %c0_62 = arith.constant 0 : index
    %c0_63 = arith.constant 0 : index
    %244 = vector.load %arg11[%c0_62, %c0_63] : memref<1x32xf32, #tpu.memory_space<vmem>>, vector<1x32xf32>
    %245 = vector.broadcast %244 : vector<1x32xf32> to vector<8x32xf32>
    %246 = arith.addf %243, %245 : vector<8x32xf32>
    %247 = arith.truncf %246 : vector<8x32xf32> to vector<8x32xbf16>
    %c0_64 = arith.constant 0 : index
    %c0_65 = arith.constant 0 : index
    %248 = vector.load %arg12[%c0_64, %c0_65] : memref<32x32xbf16, #tpu.memory_space<vmem>>, vector<32x32xbf16>
    %cst_66 = arith.constant dense<0.000000e+00> : vector<8x32xf32>
    %249 = tpu.matmul %247, %248, %cst_66 {dimension_numbers = #tpu.dot_dimension_numbers<[1], [0], [0], [1], [0, 0, 1, 1], [], []>} : vector<8x32xbf16>, vector<32x32xbf16>, vector<8x32xf32> -> vector<8x32xf32>
    %c0_67 = arith.constant 0 : index
    %c0_68 = arith.constant 0 : index
    %250 = vector.load %arg13[%c0_67, %c0_68] : memref<1x32xf32, #tpu.memory_space<vmem>>, vector<1x32xf32>
    %251 = vector.broadcast %250 : vector<1x32xf32> to vector<8x32xf32>
    %252 = arith.addf %249, %251 : vector<8x32xf32>
    %c0_69 = arith.constant 0 : index
    %c0_70 = arith.constant 0 : index
    %c0_71 = arith.constant 0 : index
    %253 = vector.load %arg3[%c0_69, %c0_70, %c0_71] : memref<1x8x32xf32, #tpu.memory_space<vmem>>, vector<1x8x32xf32>
    %254 = vector.shape_cast %253 : vector<1x8x32xf32> to vector<8x32xf32>
    %255 = arith.addf %252, %254 : vector<8x32xf32>
    %c0_72 = arith.constant 0 : index
    %c0_73 = arith.constant 0 : index
    %c0_74 = arith.constant 0 : index
    %256 = vector.load %arg14[%c0_72, %c0_73, %c0_74] : memref<1x8x32xf32, #tpu.memory_space<vmem>>, vector<1x8x32xf32>
    %257 = vector.shape_cast %256 : vector<1x8x32xf32> to vector<8x32xf32>
    %258 = vector.shape_cast %255 : vector<8x32xf32> to vector<1x8x32xf32>
    tpu.vector_store %arg14[%c0_72, %c0_73, %c0_74], %258 {strides = array<i32>} : memref<1x8x32xf32, #tpu.memory_space<vmem>>, vector<1x8x32xf32>,
    return
  }
  func.func @transform_0(%arg0: i32) -> (i32, i32, i32) {
    %c0_i32 = arith.constant 0 : i32
    %c0_i32_0 = arith.constant 0 : i32
    %c0_i32_1 = arith.constant 0 : i32
    return %arg0, %c0_i32, %c0_i32_0 : i32, i32, i32
  }
  func.func @transform_1(%arg0: i32) -> (i32, i32, i32) {
    %c0_i32 = arith.constant 0 : i32
    %c0_i32_0 = arith.constant 0 : i32
    %c0_i32_1 = arith.constant 0 : i32
    return %arg0, %c0_i32, %c0_i32_0 : i32, i32, i32
  }
  func.func @transform_2(%arg0: i32) -> (i32, i32, i32) {
    %c0_i32 = arith.constant 0 : i32
    %c0_i32_0 = arith.constant 0 : i32
    %c0_i32_1 = arith.constant 0 : i32
    return %arg0, %c0_i32, %c0_i32_0 : i32, i32, i32
  }
  func.func @transform_3(%arg0: i32) -> (i32, i32) {
    %c0_i32 = arith.constant 0 : i32
    %c0_i32_0 = arith.constant 0 : i32
    %c0_i32_1 = arith.constant 0 : i32
    return %c0_i32, %c0_i32_0 : i32, i32
  }
  func.func @transform_4(%arg0: i32) -> (i32, i32) {
    %c0_i32 = arith.constant 0 : i32
    %c0_i32_0 = arith.constant 0 : i32
    %c0_i32_1 = arith.constant 0 : i32
    return %c0_i32, %c0_i32_0 : i32, i32
  }
  func.func @transform_5(%arg0: i32) -> (i32, i32) {
    %c0_i32 = arith.constant 0 : i32
    %c0_i32_0 = arith.constant 0 : i32
    %c0_i32_1 = arith.constant 0 : i32
    return %c0_i32, %c0_i32_0 : i32, i32
  }
  func.func @transform_6(%arg0: i32) -> (i32, i32) {
    %c0_i32 = arith.constant 0 : i32
    %c0_i32_0 = arith.constant 0 : i32
    %c0_i32_1 = arith.constant 0 : i32
    return %c0_i32, %c0_i32_0 : i32, i32
  }
  func.func @transform_7(%arg0: i32) -> (i32, i32) {
    %c0_i32 = arith.constant 0 : i32
    %c0_i32_0 = arith.constant 0 : i32
    %c0_i32_1 = arith.constant 0 : i32
    return %c0_i32, %c0_i32_0 : i32, i32
  }
  func.func @transform_8(%arg0: i32) -> (i32, i32) {
    %c0_i32 = arith.constant 0 : i32
    %c0_i32_0 = arith.constant 0 : i32
    %c0_i32_1 = arith.constant 0 : i32
    return %c0_i32, %c0_i32_0 : i32, i32
  }
  func.func @transform_9(%arg0: i32) -> (i32, i32) {
    %c0_i32 = arith.constant 0 : i32
    %c0_i32_0 = arith.constant 0 : i32
    %c0_i32_1 = arith.constant 0 : i32
    return %c0_i32, %c0_i32_0 : i32, i32
  }
  func.func @transform_10(%arg0: i32) -> (i32, i32) {
    %c0_i32 = arith.constant 0 : i32
    %c0_i32_0 = arith.constant 0 : i32
    %c0_i32_1 = arith.constant 0 : i32
    return %c0_i32, %c0_i32_0 : i32, i32
  }
  func.func @transform_11(%arg0: i32) -> (i32, i32) {
    %c0_i32 = arith.constant 0 : i32
    %c0_i32_0 = arith.constant 0 : i32
    %c0_i32_1 = arith.constant 0 : i32
    return %c0_i32, %c0_i32_0 : i32, i32
  }
  func.func @transform_12(%arg0: i32) -> (i32, i32) {
    %c0_i32 = arith.constant 0 : i32
    %c0_i32_0 = arith.constant 0 : i32
    %c0_i32_1 = arith.constant 0 : i32
    return %c0_i32, %c0_i32_0 : i32, i32
  }
  func.func @transform_13(%arg0: i32) -> (i32, i32, i32) {
    %c0_i32 = arith.constant 0 : i32
    %c0_i32_0 = arith.constant 0 : i32
    %c0_i32_1 = arith.constant 0 : i32
    return %arg0, %c0_i32, %c0_i32_0 : i32, i32, i32
  }
}

module attributes {stable_mosaic.version = 11 : i64} {
  func.func @_ffn_kernel(%arg0: i32, %arg1: memref<16x32xf32, #tpu.memory_space<vmem>>, %arg2: memref<1x32xf32, #tpu.memory_space<vmem>>, %arg3: memref<1x32xf32, #tpu.memory_space<vmem>>, %arg4: memref<32x64xbf16, #tpu.memory_space<vmem>>, %arg5: memref<1x64xf32, #tpu.memory_space<vmem>>, %arg6: memref<64x32xbf16, #tpu.memory_space<vmem>>, %arg7: memref<1x32xf32, #tpu.memory_space<vmem>>, %arg8: memref<16x32xf32, #tpu.memory_space<vmem>>) attributes {dimension_semantics = [#tpu.dimension_semantics<parallel>], iteration_bounds = array<i64: 1>, scalar_prefetch = 0 : i64, scratch_operands = 0 : i64, tpu.core_type = #tpu.core_type<tc>, window_params = [{transform_indices = @transform_0, window_bounds = array<i64: 16, 32>}, {pipeline_mode = #tpu.pipeline_mode<synchronous>, transform_indices = @transform_1, window_bounds = array<i64: 1, 32>}, {pipeline_mode = #tpu.pipeline_mode<synchronous>, transform_indices = @transform_2, window_bounds = array<i64: 1, 32>}, {pipeline_mode = #tpu.pipeline_mode<synchronous>, transform_indices = @transform_3, window_bounds = array<i64: 32, 64>}, {pipeline_mode = #tpu.pipeline_mode<synchronous>, transform_indices = @transform_4, window_bounds = array<i64: 1, 64>}, {pipeline_mode = #tpu.pipeline_mode<synchronous>, transform_indices = @transform_5, window_bounds = array<i64: 64, 32>}, {pipeline_mode = #tpu.pipeline_mode<synchronous>, transform_indices = @transform_6, window_bounds = array<i64: 1, 32>}, {transform_indices = @transform_7, window_bounds = array<i64: 16, 32>}]} {
    %c0 = arith.constant 0 : index
    %c0_0 = arith.constant 0 : index
    %0 = vector.load %arg1[%c0, %c0_0] : memref<16x32xf32, #tpu.memory_space<vmem>>, vector<16x32xf32>
    %cst = arith.constant dense<0.000000e+00> : vector<16xf32>
    %1 = vector.multi_reduction <add>, %0, %cst [1] : vector<16x32xf32> to vector<16xf32>
    %2 = vector.shape_cast %1 : vector<16xf32> to vector<16x1xf32>
    %cst_1 = arith.constant 3.200000e+01 : f32
    %3 = vector.broadcast %cst_1 : f32 to vector<16x1xf32>
    %4 = arith.divf %2, %3 : vector<16x1xf32>
    %5 = vector.broadcast %4 : vector<16x1xf32> to vector<16x32xf32>
    %6 = arith.subf %0, %5 : vector<16x32xf32>
    %7 = arith.mulf %6, %6 : vector<16x32xf32>
    %cst_2 = arith.constant dense<0.000000e+00> : vector<16xf32>
    %8 = vector.multi_reduction <add>, %7, %cst_2 [1] : vector<16x32xf32> to vector<16xf32>
    %9 = vector.shape_cast %8 : vector<16xf32> to vector<16x1xf32>
    %cst_3 = arith.constant 3.200000e+01 : f32
    %10 = vector.broadcast %cst_3 : f32 to vector<16x1xf32>
    %11 = arith.divf %9, %10 : vector<16x1xf32>
    %12 = vector.broadcast %4 : vector<16x1xf32> to vector<16x32xf32>
    %13 = arith.subf %0, %12 : vector<16x32xf32>
    %cst_4 = arith.constant 9.99999974E-6 : f32
    %14 = vector.broadcast %cst_4 : f32 to vector<16x1xf32>
    %15 = arith.addf %11, %14 : vector<16x1xf32>
    %16 = math.rsqrt %15 : vector<16x1xf32>
    %17 = vector.broadcast %16 : vector<16x1xf32> to vector<16x32xf32>
    %18 = arith.mulf %13, %17 : vector<16x32xf32>
    %c0_5 = arith.constant 0 : index
    %c0_6 = arith.constant 0 : index
    %19 = vector.load %arg2[%c0_5, %c0_6] : memref<1x32xf32, #tpu.memory_space<vmem>>, vector<1x32xf32>
    %20 = vector.broadcast %19 : vector<1x32xf32> to vector<16x32xf32>
    %21 = arith.mulf %18, %20 : vector<16x32xf32>
    %c0_7 = arith.constant 0 : index
    %c0_8 = arith.constant 0 : index
    %22 = vector.load %arg3[%c0_7, %c0_8] : memref<1x32xf32, #tpu.memory_space<vmem>>, vector<1x32xf32>
    %23 = vector.broadcast %22 : vector<1x32xf32> to vector<16x32xf32>
    %24 = arith.addf %21, %23 : vector<16x32xf32>
    %25 = arith.truncf %24 : vector<16x32xf32> to vector<16x32xbf16>
    %c0_9 = arith.constant 0 : index
    %c0_10 = arith.constant 0 : index
    %26 = vector.load %arg4[%c0_9, %c0_10] : memref<32x64xbf16, #tpu.memory_space<vmem>>, vector<32x64xbf16>
    %cst_11 = arith.constant dense<0.000000e+00> : vector<16x64xf32>
    %27 = tpu.matmul %25, %26, %cst_11 {dimension_numbers = #tpu.dot_dimension_numbers<[1], [0], [0], [1], [0, 0, 1, 1], [], []>} : vector<16x32xbf16>, vector<32x64xbf16>, vector<16x64xf32> -> vector<16x64xf32>
    %c0_12 = arith.constant 0 : index
    %c0_13 = arith.constant 0 : index
    %28 = vector.load %arg5[%c0_12, %c0_13] : memref<1x64xf32, #tpu.memory_space<vmem>>, vector<1x64xf32>
    %29 = vector.broadcast %28 : vector<1x64xf32> to vector<16x64xf32>
    %30 = arith.addf %27, %29 : vector<16x64xf32>
    %cst_14 = arith.constant 0.000000e+00 : f32
    %31 = vector.broadcast %cst_14 : f32 to vector<16x64xf32>
    %32 = arith.maximumf %30, %31 : vector<16x64xf32>
    %33 = arith.truncf %32 : vector<16x64xf32> to vector<16x64xbf16>
    %c0_15 = arith.constant 0 : index
    %c0_16 = arith.constant 0 : index
    %34 = vector.load %arg6[%c0_15, %c0_16] : memref<64x32xbf16, #tpu.memory_space<vmem>>, vector<64x32xbf16>
    %cst_17 = arith.constant dense<0.000000e+00> : vector<16x32xf32>
    %35 = tpu.matmul %33, %34, %cst_17 {dimension_numbers = #tpu.dot_dimension_numbers<[1], [0], [0], [1], [0, 0, 1, 1], [], []>} : vector<16x64xbf16>, vector<64x32xbf16>, vector<16x32xf32> -> vector<16x32xf32>
    %36 = arith.addf %0, %35 : vector<16x32xf32>
    %c0_18 = arith.constant 0 : index
    %c0_19 = arith.constant 0 : index
    %37 = vector.load %arg7[%c0_18, %c0_19] : memref<1x32xf32, #tpu.memory_space<vmem>>, vector<1x32xf32>
    %38 = vector.broadcast %37 : vector<1x32xf32> to vector<16x32xf32>
    %39 = arith.addf %36, %38 : vector<16x32xf32>
    %c0_20 = arith.constant 0 : index
    %c0_21 = arith.constant 0 : index
    %40 = vector.load %arg8[%c0_20, %c0_21] : memref<16x32xf32, #tpu.memory_space<vmem>>, vector<16x32xf32>
    tpu.vector_store %arg8[%c0_20, %c0_21], %39 {strides = array<i32>} : memref<16x32xf32, #tpu.memory_space<vmem>>, vector<16x32xf32>,
    return
  }
  func.func @transform_0(%arg0: i32) -> (i32, i32) {
    %c0_i32 = arith.constant 0 : i32
    %c0_i32_0 = arith.constant 0 : i32
    return %arg0, %c0_i32 : i32, i32
  }
  func.func @transform_1(%arg0: i32) -> (i32, i32) {
    %c0_i32 = arith.constant 0 : i32
    %c0_i32_0 = arith.constant 0 : i32
    %c0_i32_1 = arith.constant 0 : i32
    return %c0_i32, %c0_i32_0 : i32, i32
  }
  func.func @transform_2(%arg0: i32) -> (i32, i32) {
    %c0_i32 = arith.constant 0 : i32
    %c0_i32_0 = arith.constant 0 : i32
    %c0_i32_1 = arith.constant 0 : i32
    return %c0_i32, %c0_i32_0 : i32, i32
  }
  func.func @transform_3(%arg0: i32) -> (i32, i32) {
    %c0_i32 = arith.constant 0 : i32
    %c0_i32_0 = arith.constant 0 : i32
    %c0_i32_1 = arith.constant 0 : i32
    return %c0_i32, %c0_i32_0 : i32, i32
  }
  func.func @transform_4(%arg0: i32) -> (i32, i32) {
    %c0_i32 = arith.constant 0 : i32
    %c0_i32_0 = arith.constant 0 : i32
    %c0_i32_1 = arith.constant 0 : i32
    return %c0_i32, %c0_i32_0 : i32, i32
  }
  func.func @transform_5(%arg0: i32) -> (i32, i32) {
    %c0_i32 = arith.constant 0 : i32
    %c0_i32_0 = arith.constant 0 : i32
    %c0_i32_1 = arith.constant 0 : i32
    return %c0_i32, %c0_i32_0 : i32, i32
  }
  func.func @transform_6(%arg0: i32) -> (i32, i32) {
    %c0_i32 = arith.constant 0 : i32
    %c0_i32_0 = arith.constant 0 : i32
    %c0_i32_1 = arith.constant 0 : i32
    return %c0_i32, %c0_i32_0 : i32, i32
  }
  func.func @transform_7(%arg0: i32) -> (i32, i32) {
    %c0_i32 = arith.constant 0 : i32
    %c0_i32_0 = arith.constant 0 : i32
    return %arg0, %c0_i32 : i32, i32
  }
}

module attributes {stable_mosaic.version = 11 : i64} {
  func.func @_nll_kernel(%arg0: i32, %arg1: i32, %arg2: memref<16x32xbf16, #tpu.memory_space<vmem>>, %arg3: memref<50x32xbf16, #tpu.memory_space<vmem>>, %arg4: memref<1x50xf32, #tpu.memory_space<vmem>>, %arg5: memref<16x1xi32, #tpu.memory_space<vmem>>, %arg6: memref<16x1xf32, #tpu.memory_space<vmem>>, %arg7: memref<16x1xf32, #tpu.memory_space<vmem>>, %arg8: memref<16x1xf32, #tpu.memory_space<vmem>>, %arg9: memref<16x1xf32, #tpu.memory_space<vmem>>) attributes {dimension_semantics = [#tpu.dimension_semantics<parallel>, #tpu.dimension_semantics<arbitrary>], iteration_bounds = array<i64: 1, 1>, scalar_prefetch = 0 : i64, scratch_operands = 3 : i64, tpu.core_type = #tpu.core_type<tc>, window_params = [{transform_indices = @transform_0, window_bounds = array<i64: 16, 32>}, {transform_indices = @transform_1, window_bounds = array<i64: 50, 32>}, {transform_indices = @transform_2, window_bounds = array<i64: 1, 50>}, {transform_indices = @transform_3, window_bounds = array<i64: 16, 1>}, {transform_indices = @transform_4, window_bounds = array<i64: 16, 1>}]} {
    %c0_i32 = arith.constant 0 : i32
    %0 = arith.cmpi eq, %arg1, %c0_i32 : i32
    %1 = arith.extui %0 : i1 to i32
    %c0_i32_0 = arith.constant 0 : i32
    %2 = arith.cmpi ne, %1, %c0_i32_0 : i32
    scf.if %2 {
      %cst_28 = arith.constant -1.000000e+30 : f32
      %46 = vector.broadcast %cst_28 : f32 to vector<16x1xf32>
      %c0_29 = arith.constant 0 : index
      %c0_30 = arith.constant 0 : index
      %47 = vector.load %arg7[%c0_29, %c0_30] : memref<16x1xf32, #tpu.memory_space<vmem>>, vector<16x1xf32>
      tpu.vector_store %arg7[%c0_29, %c0_30], %46 {strides = array<i32>} : memref<16x1xf32, #tpu.memory_space<vmem>>, vector<16x1xf32>,
      %cst_31 = arith.constant 0.000000e+00 : f32
      %48 = vector.broadcast %cst_31 : f32 to vector<16x1xf32>
      %c0_32 = arith.constant 0 : index
      %c0_33 = arith.constant 0 : index
      %49 = vector.load %arg8[%c0_32, %c0_33] : memref<16x1xf32, #tpu.memory_space<vmem>>, vector<16x1xf32>
      tpu.vector_store %arg8[%c0_32, %c0_33], %48 {strides = array<i32>} : memref<16x1xf32, #tpu.memory_space<vmem>>, vector<16x1xf32>,
      %cst_34 = arith.constant 0.000000e+00 : f32
      %50 = vector.broadcast %cst_34 : f32 to vector<16x1xf32>
      %c0_35 = arith.constant 0 : index
      %c0_36 = arith.constant 0 : index
      %51 = vector.load %arg9[%c0_35, %c0_36] : memref<16x1xf32, #tpu.memory_space<vmem>>, vector<16x1xf32>
      tpu.vector_store %arg9[%c0_35, %c0_36], %50 {strides = array<i32>} : memref<16x1xf32, #tpu.memory_space<vmem>>, vector<16x1xf32>,
    } else {
    }
    %c0 = arith.constant 0 : index
    %c0_1 = arith.constant 0 : index
    %3 = vector.load %arg2[%c0, %c0_1] : memref<16x32xbf16, #tpu.memory_space<vmem>>, vector<16x32xbf16>
    %c0_2 = arith.constant 0 : index
    %c0_3 = arith.constant 0 : index
    %4 = vector.load %arg3[%c0_2, %c0_3] : memref<50x32xbf16, #tpu.memory_space<vmem>>, vector<50x32xbf16>
    %cst = arith.constant dense<0.000000e+00> : vector<16x50xf32>
    %5 = tpu.matmul %3, %4, %cst {dimension_numbers = #tpu.dot_dimension_numbers<[1], [1], [0], [0], [0, 0, 1, 0], [], []>} : vector<16x32xbf16>, vector<50x32xbf16>, vector<16x50xf32> -> vector<16x50xf32>
    %c0_4 = arith.constant 0 : index
    %c0_5 = arith.constant 0 : index
    %6 = vector.load %arg4[%c0_4, %c0_5] : memref<1x50xf32, #tpu.memory_space<vmem>>, vector<1x50xf32>
    %7 = vector.broadcast %6 : vector<1x50xf32> to vector<16x50xf32>
    %8 = arith.addf %5, %7 : vector<16x50xf32>
    %9 = tpu.iota {dimensions = array<i32: 1>} : vector<16x50xi32>
    %c50_i32 = arith.constant 50 : i32
    %10 = arith.muli %arg1, %c50_i32 : i32
    %11 = vector.broadcast %10 : i32 to vector<16x50xi32>
    %12 = arith.addi %9, %11 : vector<16x50xi32>
    %c50_i32_6 = arith.constant 50 : i32
    %13 = vector.broadcast %c50_i32_6 : i32 to vector<16x50xi32>
    %14 = arith.cmpi slt, %12, %13 : vector<16x50xi32>
    %cst_7 = arith.constant -1.000000e+30 : f32
    %15 = vector.broadcast %cst_7 : f32 to vector<16x50xf32>
    %16 = arith.select %14, %8, %15 : vector<16x50xi1>, vector<16x50xf32>
    %c0_8 = arith.constant 0 : index
    %c0_9 = arith.constant 0 : index
    %17 = vector.load %arg5[%c0_8, %c0_9] : memref<16x1xi32, #tpu.memory_space<vmem>>, vector<16x1xi32>
    %18 = vector.broadcast %17 : vector<16x1xi32> to vector<16x50xi32>
    %19 = arith.cmpi eq, %12, %18 : vector<16x50xi32>
    %c0_10 = arith.constant 0 : index
    %c0_11 = arith.constant 0 : index
    %20 = vector.load %arg9[%c0_10, %c0_11] : memref<16x1xf32, #tpu.memory_space<vmem>>, vector<16x1xf32>
    %cst_12 = arith.constant 0.000000e+00 : f32
    %21 = vector.broadcast %cst_12 : f32 to vector<16x50xf32>
    %22 = arith.select %19, %16, %21 : vector<16x50xi1>, vector<16x50xf32>
    %cst_13 = arith.constant dense<0.000000e+00> : vector<16xf32>
    %23 = vector.multi_reduction <add>, %22, %cst_13 [1] : vector<16x50xf32> to vector<16xf32>
    %24 = vector.shape_cast %23 : vector<16xf32> to vector<16x1xf32>
    %25 = arith.addf %20, %24 : vector<16x1xf32>
    %c0_14 = arith.constant 0 : index
    %c0_15 = arith.constant 0 : index
    %26 = vector.load %arg9[%c0_14, %c0_15] : memref<16x1xf32, #tpu.memory_space<vmem>>, vector<16x1xf32>
    tpu.vector_store %arg9[%c0_14, %c0_15], %25 {strides = array<i32>} : memref<16x1xf32, #tpu.memory_space<vmem>>, vector<16x1xf32>,
    %c0_16 = arith.constant 0 : index
    %c0_17 = arith.constant 0 : index
    %27 = vector.load %arg7[%c0_16, %c0_17] : memref<16x1xf32, #tpu.memory_space<vmem>>, vector<16x1xf32>
    %cst_18 = arith.constant dense<0xFF800000> : vector<16xf32>
    %28 = vector.multi_reduction <maximumf>, %16, %cst_18 [1] : vector<16x50xf32> to vector<16xf32>
    %29 = vector.shape_cast %28 : vector<16xf32> to vector<16x1xf32>
    %30 = arith.maximumf %27, %29 : vector<16x1xf32>
    %c0_19 = arith.constant 0 : index
    %c0_20 = arith.constant 0 : index
    %31 = vector.load %arg8[%c0_19, %c0_20] : memref<16x1xf32, #tpu.memory_space<vmem>>, vector<16x1xf32>
    %32 = arith.subf %27, %30 : vector<16x1xf32>
    %33 = math.exp %32 : vector<16x1xf32>
    %34 = arith.mulf %31, %33 : vector<16x1xf32>
    %35 = vector.broadcast %30 : vector<16x1xf32> to vector<16x50xf32>
    %36 = arith.subf %16, %35 : vector<16x50xf32>
    %37 = math.exp %36 : vector<16x50xf32>
    %cst_21 = arith.constant dense<0.000000e+00> : vector<16xf32>
    %38 = vector.multi_reduction <add>, %37, %cst_21 [1] : vector<16x50xf32> to vector<16xf32>
    %39 = vector.shape_cast %38 : vector<16xf32> to vector<16x1xf32>
    %40 = arith.addf %34, %39 : vector<16x1xf32>
    %c0_22 = arith.constant 0 : index
    %c0_23 = arith.constant 0 : index
    %41 = vector.load %arg8[%c0_22, %c0_23] : memref<16x1xf32, #tpu.memory_space<vmem>>, vector<16x1xf32>
    tpu.vector_store %arg8[%c0_22, %c0_23], %40 {strides = array<i32>} : memref<16x1xf32, #tpu.memory_space<vmem>>, vector<16x1xf32>,
    %c0_24 = arith.constant 0 : index
    %c0_25 = arith.constant 0 : index
    %42 = vector.load %arg7[%c0_24, %c0_25] : memref<16x1xf32, #tpu.memory_space<vmem>>, vector<16x1xf32>
    tpu.vector_store %arg7[%c0_24, %c0_25], %30 {strides = array<i32>} : memref<16x1xf32, #tpu.memory_space<vmem>>, vector<16x1xf32>,
    %c0_i32_26 = arith.constant 0 : i32
    %43 = arith.cmpi eq, %arg1, %c0_i32_26 : i32
    %44 = arith.extui %43 : i1 to i32
    %c0_i32_27 = arith.constant 0 : i32
    %45 = arith.cmpi ne, %44, %c0_i32_27 : i32
    scf.if %45 {
      %c0_28 = arith.constant 0 : index
      %c0_29 = arith.constant 0 : index
      %46 = vector.load %arg7[%c0_28, %c0_29] : memref<16x1xf32, #tpu.memory_space<vmem>>, vector<16x1xf32>
      %c0_30 = arith.constant 0 : index
      %c0_31 = arith.constant 0 : index
      %47 = vector.load %arg8[%c0_30, %c0_31] : memref<16x1xf32, #tpu.memory_space<vmem>>, vector<16x1xf32>
      %48 = math.log %47 : vector<16x1xf32>
      %49 = arith.addf %46, %48 : vector<16x1xf32>
      %c0_32 = arith.constant 0 : index
      %c0_33 = arith.constant 0 : index
      %50 = vector.load %arg9[%c0_32, %c0_33] : memref<16x1xf32, #tpu.memory_space<vmem>>, vector<16x1xf32>
      %51 = arith.subf %49, %50 : vector<16x1xf32>
      %c0_34 = arith.constant 0 : index
      %c0_35 = arith.constant 0 : index
      %52 = vector.load %arg6[%c0_34, %c0_35] : memref<16x1xf32, #tpu.memory_space<vmem>>, vector<16x1xf32>
      tpu.vector_store %arg6[%c0_34, %c0_35], %51 {strides = array<i32>} : memref<16x1xf32, #tpu.memory_space<vmem>>, vector<16x1xf32>,
    } else {
    }
    return
  }
  func.func @transform_0(%arg0: i32, %arg1: i32) -> (i32, i32) {
    %c0_i32 = arith.constant 0 : i32
    %c0_i32_0 = arith.constant 0 : i32
    return %arg0, %c0_i32 : i32, i32
  }
  func.func @transform_1(%arg0: i32, %arg1: i32) -> (i32, i32) {
    %c0_i32 = arith.constant 0 : i32
    %c0_i32_0 = arith.constant 0 : i32
    return %arg1, %c0_i32 : i32, i32
  }
  func.func @transform_2(%arg0: i32, %arg1: i32) -> (i32, i32) {
    %c0_i32 = arith.constant 0 : i32
    %c0_i32_0 = arith.constant 0 : i32
    return %c0_i32, %arg1 : i32, i32
  }
  func.func @transform_3(%arg0: i32, %arg1: i32) -> (i32, i32) {
    %c0_i32 = arith.constant 0 : i32
    %c0_i32_0 = arith.constant 0 : i32
    return %arg0, %c0_i32 : i32, i32
  }
  func.func @transform_4(%arg0: i32, %arg1: i32) -> (i32, i32) {
    %c0_i32 = arith.constant 0 : i32
    %c0_i32_0 = arith.constant 0 : i32
    return %arg0, %c0_i32 : i32, i32
  }
}

</mosaic_0001>

<llo_original>
// kernel: deq_transformer_lm_forward.25
$region0: #{deq_transformer_lm_forward.25}
  #allocation0 [shape = 'u32[]', space=smem, size = 0x4, offset = 0x4, fixed_abs, tag = 'smem constant byte address 0x4 - core index']
  #allocation1 [shape = 'u32[144,128]{1,0:T(1,128)}', space=vmem, size = 0x12000, scoped, tag = 'internal scratch']
  %s0 = inlined_call_operand.vmem [shape: f32[16,32], index: 0, kind: input, shape index: {}]
  %s1 = inlined_call_operand.vmem [shape: bf16[32,32], index: 1, kind: input, shape index: {}]
  %s2 = inlined_call_operand.vmem [shape: f32[1,32], index: 2, kind: input, shape index: {}]
  %s3 = inlined_call_operand.vmem [shape: f32[16,32], index: 3, kind: output, shape index: {}]
  %s4 = sld [smem:[#allocation0]]
  $region22: #{deq_transformer_lm_forward.25} parent=0
    _
  %s6 = ssub.s32 1, %s4
  %s7 = scalar_select 0, %s6, %s4
  // Predicated region
  $region2: #{deq_transformer_lm_forward.25} parent=0 // pred_check
    _
  $region3: #{deq_transformer_lm_forward.25} parent=0 // pred_check_branch
    %9 = sbr.rel (0) target = $region5
  $region4: #{deq_transformer_lm_forward.25} parent=0 // pred_region
    _
  $region5: #{deq_transformer_lm_forward.25} parent=0 // pred_fallthru
    _
  // Predicated region
  $region6: #{deq_transformer_lm_forward.25} parent=0 // pred_check
    _
  $region7: #{deq_transformer_lm_forward.25} parent=0 // pred_check_branch
    %11 = sbr.rel (0) target = $region9
  $region8: #{deq_transformer_lm_forward.25} parent=0 // pred_region
    _
  $region9: #{deq_transformer_lm_forward.25} parent=0 // pred_fallthru
    _
  // Predicated region
  $region10: #{deq_transformer_lm_forward.25} parent=0 // pred_check
    _
  $region11: #{deq_transformer_lm_forward.25} parent=0 // pred_check_branch
    %13 = sbr.rel (0) target = $region13
  $region12: #{deq_transformer_lm_forward.25} parent=0 // pred_region
    _
  $region13: #{deq_transformer_lm_forward.25} parent=0 // pred_fallthru
    _
  %v15 = vld [vmem:[%s0] sm:$0xff]
  %v16 = vld [vmem:[%s0 + $0x8] sm:$0xff]
  %v17 = vpack.c.bf16 %v16, %v15
  %v18 = vld [vmem:[%s1] sm:$0xf]
  %v19 = vld [vmem:[%s1 + $0x4] sm:$0xf]
  %v20 = vld [vmem:[%s1 + $0x8] sm:$0xf]
  %v21 = vld [vmem:[%s1 + $0xc] sm:$0xf]
  %v22 = vld [vmem:[%s2] sm:$0x1]
  %v24 = vlaneseq
  %v25 = vshrl.u32 %v24, 7
  %v26 = vsub.s32 0, %v25
  %v27 = vrot.slane %v22, %v26
  %v33 = vunpack.c.l.b16 %v18
  %v34 = vunpack.c.l.b16 %v19
  %v35 = vunpack.c.l.b16 %v20
  %v36 = vunpack.c.l.b16 %v21
  %v37 = vpack.c.b16 %v34, %v33
  %v38 = vpack.c.b16 %v36, %v35
  %vm41 = vcmask 261120
  %v43 = vsel %vm41, %v17, 0
  %45 = vmatprep.subr.bf16.mxu0 0
  %46 = vmatpush1.bf16.msra.mxu0 %v37
  %47 = vmatprep.subr.bf16.mxu0 0
  %48 = vmatpush1.bf16.msra.mxu0 %v38
  %49 = vmatprep.subr.bf16.mxu0 0
  %50 = vmatpush1.bf16.msra.mxu0 0
  %51 = vmatprep.subr.bf16.mxu0 0
  %52 = vmatpush1.bf16.msra.mxu0 0
  %53 = vmatprep.subr.bf16.mxu0 0
  %54 = vmatpush1.bf16.msra.mxu0 0
  %55 = vmatprep.subr.bf16.mxu0 0
  %56 = vmatpush1.bf16.msra.mxu0 0
  %57 = vmatprep.subr.bf16.mxu0 0
  %58 = vmatpush1.bf16.msra.mxu0 0
  %59 = vmatprep.subr.bf16.mxu0 0
  %60 = vmatpush1.bf16.msra.mxu0 0
  %61 = vmatprep.subr.bf16.mxu0 0
  %62 = vmatpush1.bf16.msra.mxu0 0
  %63 = vmatprep.subr.bf16.mxu0 0
  %64 = vmatpush1.bf16.msra.mxu0 0
  %65 = vmatprep.subr.bf16.mxu0 0
  %66 = vmatpush1.bf16.msra.mxu0 0
  %67 = vmatprep.subr.bf16.mxu0 0
  %68 = vmatpush1.bf16.msra.mxu0 0
  %69 = vmatprep.subr.bf16.mxu0 0
  %70 = vmatpush1.bf16.msra.mxu0 0
  %71 = vmatprep.subr.bf16.mxu0 0
  %72 = vmatpush1.bf16.msra.mxu0 0
  %73 = vmatprep.subr.bf16.mxu0 0
  %74 = vmatpush1.bf16.msra.mxu0 0
  %75 = vmatprep.subr.bf16.mxu0 0
  %76 = vmatpush1.bf16.msra.mxu0 0
  %77 = vmatprep.mubr.bf16.mxu0 0
  %78 = vmatmul.mubr.bf16.gmra.mrb[0].mxu0 %v43
  %v79 = vpop.f32.mrb[0].mxu0
  %v80 = vadd.f32 %v27, %v79
  %v81 = vpop.f32.mrb[0].mxu0
  %v82 = vpop.f32.mrb[0].mxu0
  %v83 = vadd.f32 %v27, %v82
  %v84 = vpop.f32.mrb[0].mxu0
  %85 = vdwg.mxu0
  %86 = vst.msk [vmem:[%s3] sm:$0xff] %vm41, %v80
  %87 = vst.msk [vmem:[%s3 + $0x8] sm:$0xff] %vm41, %v83
  // Predicated region
  $region14: #{deq_transformer_lm_forward.25} parent=0 // pred_check
    _
  $region15: #{deq_transformer_lm_forward.25} parent=0 // pred_check_branch
    %89 = sbr.rel (0) target = $region17
  $region16: #{deq_transformer_lm_forward.25} parent=0 // pred_region
    _
  $region17: #{deq_transformer_lm_forward.25} parent=0 // pred_fallthru
    _
  // Predicated region
  $region18: #{deq_transformer_lm_forward.25} parent=0 // pred_check
    _
  $region19: #{deq_transformer_lm_forward.25} parent=0 // pred_check_branch
    %91 = sbr.rel (0) target = $region21
  $region20: #{deq_transformer_lm_forward.25} parent=0 // pred_region
    _
  $region21: #{deq_transformer_lm_forward.25} parent=0 // pred_fallthru
    _

// kernel: deq_transformer_lm_forward.24
$region0: #{deq_transformer_lm_forward.24}
  #allocation0 [shape = 'u32[]', space=smem, size = 0x4, offset = 0x4, fixed_abs, tag = 'smem constant byte address 0x4 - core index']
  #allocation1 [shape = 'u32[144,128]{1,0:T(1,128)}', space=vmem, size = 0x12000, scoped, tag = 'internal scratch']
  %s0 = inlined_call_operand.vmem [shape: f32[16,32], index: 0, kind: input, shape index: {}]
  %s1 = inlined_call_operand.vmem [shape: bf16[32,96], index: 1, kind: input, shape index: {}]
  %s2 = inlined_call_operand.vmem [shape: f32[1,96], index: 2, kind: input, shape index: {}]
  %s3 = inlined_call_operand.vmem [shape: f32[16,96], index: 3, kind: output, shape index: {}]
  %s4 = sld [smem:[#allocation0]]
  $region22: #{deq_transformer_lm_forward.24} parent=0
    _
  %s6 = ssub.s32 1, %s4
  %s7 = scalar_select 0, %s6, %s4
  // Predicated region
  $region2: #{deq_transformer_lm_forward.24} parent=0 // pred_check
    _
  $region3: #{deq_transformer_lm_forward.24} parent=0 // pred_check_branch
    %9 = sbr.rel (0) target = $region5
  $region4: #{deq_transformer_lm_forward.24} parent=0 // pred_region
    _
  $region5: #{deq_transformer_lm_forward.24} parent=0 // pred_fallthru
    _
  // Predicated region
  $region6: #{deq_transformer_lm_forward.24} parent=0 // pred_check
    _
  $region7: #{deq_transformer_lm_forward.24} parent=0 // pred_check_branch
    %11 = sbr.rel (0) target = $region9
  $region8: #{deq_transformer_lm_forward.24} parent=0 // pred_region
    _
  $region9: #{deq_transformer_lm_forward.24} parent=0 // pred_fallthru
    _
  // Predicated region
  $region10: #{deq_transformer_lm_forward.24} parent=0 // pred_check
    _
  $region11: #{deq_transformer_lm_forward.24} parent=0 // pred_check_branch
    %13 = sbr.rel (0) target = $region13
  $region12: #{deq_transformer_lm_forward.24} parent=0 // pred_region
    _
  $region13: #{deq_transformer_lm_forward.24} parent=0 // pred_fallthru
    _
  %v15 = vld [vmem:[%s0] sm:$0xff]
  %v16 = vld [vmem:[%s0 + $0x8] sm:$0xff]
  %v17 = vpack.c.bf16 %v16, %v15
  %v18 = vld [vmem:[%s1] sm:$0xf]
  %v19 = vld [vmem:[%s1 + $0x4] sm:$0xf]
  %v20 = vld [vmem:[%s1 + $0x8] sm:$0xf]
  %v21 = vld [vmem:[%s1 + $0xc] sm:$0xf]
  %v22 = vld [vmem:[%s2] sm:$0x1]
  %v24 = vlaneseq
  %v25 = vshrl.u32 %v24, 7
  %v26 = vsub.s32 0, %v25
  %v27 = vrot.slane %v22, %v26
  %v33 = vunpack.c.l.b16 %v18
  %v34 = vunpack.c.l.b16 %v19
  %v35 = vunpack.c.l.b16 %v20
  %v36 = vunpack.c.l.b16 %v21
  %v37 = vpack.c.b16 %v34, %v33
  %v38 = vpack.c.b16 %v36, %v35
  %vm41 = vcmask 261120
  %v43 = vsel %vm41, %v17, 0
  %45 = vmatprep.subr.bf16.mxu0 0
  %46 = vmatpush1.bf16.msra.mxu0 %v37
  %47 = vmatprep.subr.bf16.mxu0 0
  %48 = vmatpush1.bf16.msra.mxu0 %v38
  %49 = vmatprep.subr.bf16.mxu0 0
  %50 = vmatpush1.bf16.msra.mxu0 0
  %51 = vmatprep.subr.bf16.mxu0 0
  %52 = vmatpush1.bf16.msra.mxu0 0
  %53 = vmatprep.subr.bf16.mxu0 0
  %54 = vmatpush1.bf16.msra.mxu0 0
  %55 = vmatprep.subr.bf16.mxu0 0
  %56 = vmatpush1.bf16.msra.mxu0 0
  %57 = vmatprep.subr.bf16.mxu0 0
  %58 = vmatpush1.bf16.msra.mxu0 0
  %59 = vmatprep.subr.bf16.mxu0 0
  %60 = vmatpush1.bf16.msra.mxu0 0
  %61 = vmatprep.subr.bf16.mxu0 0
  %62 = vmatpush1.bf16.msra.mxu0 0
  %63 = vmatprep.subr.bf16.mxu0 0
  %64 = vmatpush1.bf16.msra.mxu0 0
  %65 = vmatprep.subr.bf16.mxu0 0
  %66 = vmatpush1.bf16.msra.mxu0 0
  %67 = vmatprep.subr.bf16.mxu0 0
  %68 = vmatpush1.bf16.msra.mxu0 0
  %69 = vmatprep.subr.bf16.mxu0 0
  %70 = vmatpush1.bf16.msra.mxu0 0
  %71 = vmatprep.subr.bf16.mxu0 0
  %72 = vmatpush1.bf16.msra.mxu0 0
  %73 = vmatprep.subr.bf16.mxu0 0
  %74 = vmatpush1.bf16.msra.mxu0 0
  %75 = vmatprep.subr.bf16.mxu0 0
  %76 = vmatpush1.bf16.msra.mxu0 0
  %77 = vmatprep.mubr.bf16.mxu0 0
  %78 = vmatmul.mubr.bf16.gmra.mrb[0].mxu0 %v43
  %v79 = vpop.f32.mrb[0].mxu0
  %v80 = vadd.f32 %v27, %v79
  %v81 = vpop.f32.mrb[0].mxu0
  %v82 = vpop.f32.mrb[0].mxu0
  %v83 = vadd.f32 %v27, %v82
  %v84 = vpop.f32.mrb[0].mxu0
  %85 = vdwg.mxu0
  %vm86 = vcmask 785408
  %87 = vst.msk [vmem:[%s3] sm:$0xff] %vm86, %v80
  %88 = vst.msk [vmem:[%s3 + $0x8] sm:$0xff] %vm86, %v83
  // Predicated region
  $region14: #{deq_transformer_lm_forward.24} parent=0 // pred_check
    _
  $region15: #{deq_transformer_lm_forward.24} parent=0 // pred_check_branch
    %90 = sbr.rel (0) target = $region17
  $region16: #{deq_transformer_lm_forward.24} parent=0 // pred_region
    _
  $region17: #{deq_transformer_lm_forward.24} parent=0 // pred_fallthru
    _
  // Predicated region
  $region18: #{deq_transformer_lm_forward.24} parent=0 // pred_check
    _
  $region19: #{deq_transformer_lm_forward.24} parent=0 // pred_check_branch
    %92 = sbr.rel (0) target = $region21
  $region20: #{deq_transformer_lm_forward.24} parent=0 // pred_region
    _
  $region21: #{deq_transformer_lm_forward.24} parent=0 // pred_fallthru
    _

// kernel: deq_transformer_lm_forward.28
$region0: #{deq_transformer_lm_forward.28}
  #allocation0 [shape = 'u32[]', space=smem, size = 0x4, offset = 0x4, fixed_abs, tag = 'smem constant byte address 0x4 - core index']
  #allocation1 [shape = 'u32[144,128]{1,0:T(1,128)}', space=vmem, size = 0x12000, scoped, tag = 'internal scratch']
  %s0 = inlined_call_operand.vmem [shape: f32[16,32], index: 0, kind: input, shape index: {}]
  %s1 = inlined_call_operand.vmem [shape: f32[1,32], index: 1, kind: input, shape index: {}]
  %s2 = inlined_call_operand.vmem [shape: f32[1,32], index: 2, kind: input, shape index: {}]
  %s3 = inlined_call_operand.vmem [shape: bf16[32,64], index: 3, kind: input, shape index: {}]
  %s4 = inlined_call_operand.vmem [shape: f32[1,64], index: 4, kind: input, shape index: {}]
  %s5 = inlined_call_operand.vmem [shape: bf16[64,32], index: 5, kind: input, shape index: {}]
  %s6 = inlined_call_operand.vmem [shape: f32[1,32], index: 6, kind: input, shape index: {}]
  %s7 = inlined_call_operand.vmem [shape: f32[16,32], index: 7, kind: output, shape index: {}]
  %s8 = sld [smem:[#allocation0]]
  $region38: #{deq_transformer_lm_forward.28} parent=0
    _
  %s10 = ssub.s32 1, %s8
  %s11 = scalar_select 0, %s10, %s8
  // Predicated region
  $region2: #{deq_transformer_lm_forward.28} parent=0 // pred_check
    _
  $region3: #{deq_transformer_lm_forward.28} parent=0 // pred_check_branch
    %13 = sbr.rel (0) target = $region5
  $region4: #{deq_transformer_lm_forward.28} parent=0 // pred_region
    _
  $region5: #{deq_transformer_lm_forward.28} parent=0 // pred_fallthru
    _
  // Predicated region
  $region6: #{deq_transformer_lm_forward.28} parent=0 // pred_check
    _
  $region7: #{deq_transformer_lm_forward.28} parent=0 // pred_check_branch
    %15 = sbr.rel (0) target = $region9
  $region8: #{deq_transformer_lm_forward.28} parent=0 // pred_region
    _
  $region9: #{deq_transformer_lm_forward.28} parent=0 // pred_fallthru
    _
  // Predicated region
  $region10: #{deq_transformer_lm_forward.28} parent=0 // pred_check
    _
  $region11: #{deq_transformer_lm_forward.28} parent=0 // pred_check_branch
    %17 = sbr.rel (0) target = $region13
  $region12: #{deq_transformer_lm_forward.28} parent=0 // pred_region
    _
  $region13: #{deq_transformer_lm_forward.28} parent=0 // pred_fallthru
    _
  // Predicated region
  $region14: #{deq_transformer_lm_forward.28} parent=0 // pred_check
    _
  $region15: #{deq_transformer_lm_forward.28} parent=0 // pred_check_branch
    %19 = sbr.rel (0) target = $region17
  $region16: #{deq_transformer_lm_forward.28} parent=0 // pred_region
    _
  $region17: #{deq_transformer_lm_forward.28} parent=0 // pred_fallthru
    _
  // Predicated region
  $region18: #{deq_transformer_lm_forward.28} parent=0 // pred_check
    _
  $region19: #{deq_transformer_lm_forward.28} parent=0 // pred_check_branch
    %21 = sbr.rel (0) target = $region21
  $region20: #{deq_transformer_lm_forward.28} parent=0 // pred_region
    _
  $region21: #{deq_transformer_lm_forward.28} parent=0 // pred_fallthru
    _
  // Predicated region
  $region22: #{deq_transformer_lm_forward.28} parent=0 // pred_check
    _
  $region23: #{deq_transformer_lm_forward.28} parent=0 // pred_check_branch
    %23 = sbr.rel (0) target = $region25
  $region24: #{deq_transformer_lm_forward.28} parent=0 // pred_region
    _
  $region25: #{deq_transformer_lm_forward.28} parent=0 // pred_fallthru
    _
  // Predicated region
  $region26: #{deq_transformer_lm_forward.28} parent=0 // pred_check
    _
  $region27: #{deq_transformer_lm_forward.28} parent=0 // pred_check_branch
    %25 = sbr.rel (0) target = $region29
  $region28: #{deq_transformer_lm_forward.28} parent=0 // pred_region
    _
  $region29: #{deq_transformer_lm_forward.28} parent=0 // pred_fallthru
    _
  %v27 = vld [vmem:[%s0] sm:$0xff]
  %v28 = vld [vmem:[%s0 + $0x8] sm:$0xff]
  %vm29 = vcmask 261120
  %v30 = vsel %vm29, %v27, 0.0
  %31 = vadd.xlane.f32.xlu0 %v30
  %v32 = vpop.xlane.xlu0 %31
  %v33 = vsel %vm29, %v28, 0.0
  %34 = vadd.xlane.f32.xlu0 %v33
  %v35 = vpop.xlane.xlu0 %34
  %v36 = vrcp.pop 32.0
  %v37 = vmul.f32 %v32, %v36
  %v38 = vmul.f32 %v35, %v36
  %v39 = vsub.f32 %v27, %v37
  %v40 = vsub.f32 %v28, %v38
  %v41 = vmul.f32 %v39, %v39
  %v42 = vmul.f32 %v40, %v40
  %v43 = vsel %vm29, %v41, 0.0
  %44 = vadd.xlane.f32.xlu0 %v43
  %v45 = vpop.xlane.xlu0 %44
  %v46 = vsel %vm29, %v42, 0.0
  %47 = vadd.xlane.f32.xlu0 %v46
  %v48 = vpop.xlane.xlu0 %47
  %v49 = vmul.f32 %v45, %v36
  %v50 = vmul.f32 %v48, %v36
  %v51 = vadd.f32 %v49, 1e-05
  %v52 = vadd.f32 %v50, 1e-05
  %v53 = vrsqrt.pop %v51
  %v54 = vrsqrt.pop %v52
  %v55 = vmul.f32 %v39, %v53
  %v56 = vmul.f32 %v40, %v54
  %v57 = vld [vmem:[%s1] sm:$0x1]
  %v59 = vlaneseq
  %v60 = vshrl.u32 %v59, 7
  %v61 = vsub.s32 0, %v60
  %v62 = vrot.slane %v57, %v61
  %v64 = vmul.f32 %v55, %v62
  %v65 = vmul.f32 %v56, %v62
  %v66 = vld [vmem:[%s2] sm:$0x1]
  %v68 = vlaneseq
  %v69 = vshrl.u32 %v68, 7
  %v70 = vsub.s32 0, %v69
  %v71 = vrot.slane %v66, %v70
  %v73 = vadd.f32 %v64, %v71
  %v74 = vadd.f32 %v65, %v71
  %v75 = vpack.c.bf16 %v74, %v73
  %v76 = vld [vmem:[%s3] sm:$0xf]
  %v77 = vld [vmem:[%s3 + $0x4] sm:$0xf]
  %v78 = vld [vmem:[%s3 + $0x8] sm:$0xf]
  %v79 = vld [vmem:[%s3 + $0xc] sm:$0xf]
  %v80 = vld [vmem:[%s4] sm:$0x1]
  %v82 = vlaneseq
  %v83 = vshrl.u32 %v82, 7
  %v84 = vsub.s32 0, %v83
  %v85 = vrot.slane %v80, %v84
  %v91 = vunpack.c.l.b16 %v76
  %v92 = vunpack.c.l.b16 %v77
  %v93 = vunpack.c.l.b16 %v78
  %v94 = vunpack.c.l.b16 %v79
  %v95 = vpack.c.b16 %v92, %v91
  %v96 = vpack.c.b16 %v94, %v93
  %v100 = vsel %vm29, %v75, 0
  %102 = vmatprep.subr.bf16.mxu0 0
  %103 = vmatpush1.bf16.msra.mxu0 %v95
  %104 = vmatprep.subr.bf16.mxu0 0
  %105 = vmatpush1.bf16.msra.mxu0 %v96
  %106 = vmatprep.subr.bf16.mxu0 0
  %107 = vmatpush1.bf16.msra.mxu0 0
  %108 = vmatprep.subr.bf16.mxu0 0
  %109 = vmatpush1.bf16.msra.mxu0 0
  %110 = vmatprep.subr.bf16.mxu0 0
  %111 = vmatpush1.bf16.msra.mxu0 0
  %112 = vmatprep.subr.bf16.mxu0 0
  %113 = vmatpush1.bf16.msra.mxu0 0
  %114 = vmatprep.subr.bf16.mxu0 0
  %115 = vmatpush1.bf16.msra.mxu0 0
  %116 = vmatprep.subr.bf16.mxu0 0
  %117 = vmatpush1.bf16.msra.mxu0 0
  %118 = vmatprep.subr.bf16.mxu0 0
  %119 = vmatpush1.bf16.msra.mxu0 0
  %120 = vmatprep.subr.bf16.mxu0 0
  %121 = vmatpush1.bf16.msra.mxu0 0
  %122 = vmatprep.subr.bf16.mxu0 0
  %123 = vmatpush1.bf16.msra.mxu0 0
  %124 = vmatprep.subr.bf16.mxu0 0
  %125 = vmatpush1.bf16.msra.mxu0 0
  %126 = vmatprep.subr.bf16.mxu0 0
  %127 = vmatpush1.bf16.msra.mxu0 0
  %128 = vmatprep.subr.bf16.mxu0 0
  %129 = vmatpush1.bf16.msra.mxu0 0
  %130 = vmatprep.subr.bf16.mxu0 0
  %131 = vmatpush1.bf16.msra.mxu0 0
  %132 = vmatprep.subr.bf16.mxu0 0
  %133 = vmatpush1.bf16.msra.mxu0 0
  %134 = vmatprep.mubr.bf16.mxu0 0
  %135 = vmatmul.mubr.bf16.gmra.mrb[0].mxu0 %v100
  %v136 = vpop.f32.mrb[0].mxu0
  %v137 = vadd.f32 %v85, %v136
  %v138 = vpop.f32.mrb[0].mxu0
  %v139 = vpop.f32.mrb[0].mxu0
  %v140 = vadd.f32 %v85, %v139
  %v141 = vpop.f32.mrb[0].mxu0
  %142 = vdwg.mxu0
  %v143 = vmax.f32 %v137, 0.0
  %v144 = vmax.f32 %v140, 0.0
  %v145 = vpack.c.bf16 %v144, %v143
  %v146 = vld [vmem:[%s5] sm:$0xf]
  %v147 = vld [vmem:[%s5 + $0x4] sm:$0xf]
  %v148 = vld [vmem:[%s5 + $0x8] sm:$0xf]
  %v149 = vld [vmem:[%s5 + $0xc] sm:$0xf]
  %v150 = vld [vmem:[%s5 + $0x10] sm:$0xf]
  %v151 = vld [vmem:[%s5 + $0x14] sm:$0xf]
  %v152 = vld [vmem:[%s5 + $0x18] sm:$0xf]
  %v153 = vld [vmem:[%s5 + $0x1c] sm:$0xf]
  %v162 = vunpack.c.l.b16 %v146
  %v163 = vunpack.c.l.b16 %v147
  %v164 = vunpack.c.l.b16 %v148
  %v165 = vunpack.c.l.b16 %v149
  %v166 = vunpack.c.l.b16 %v150
  %v167 = vunpack.c.l.b16 %v151
  %v168 = vunpack.c.l.b16 %v152
  %v169 = vunpack.c.l.b16 %v153
  %v170 = vpack.c.b16 %v163, %v162
  %v171 = vpack.c.b16 %v165, %v164
  %v172 = vpack.c.b16 %v167, %v166
  %v173 = vpack.c.b16 %v169, %v168
  %vm178 = vcmask 523264
  %v180 = vsel %vm178, %v145, 0
  %182 = vmatprep.subr.bf16.mxu0 0
  %183 = vmatpush1.bf16.msra.mxu0 %v170
  %184 = vmatprep.subr.bf16.mxu0 0
  %185 = vmatpush1.bf16.msra.mxu0 %v171
  %186 = vmatprep.subr.bf16.mxu0 0
  %187 = vmatpush1.bf16.msra.mxu0 %v172
  %188 = vmatprep.subr.bf16.mxu0 0
  %189 = vmatpush1.bf16.msra.mxu0 %v173
  %190 = vmatprep.subr.bf16.mxu0 0
  %191 = vmatpush1.bf16.msra.mxu0 0
  %192 = vmatprep.subr.bf16.mxu0 0
  %193 = vmatpush1.bf16.msra.mxu0 0
  %194 = vmatprep.subr.bf16.mxu0 0
  %195 = vmatpush1.bf16.msra.mxu0 0
  %196 = vmatprep.subr.bf16.mxu0 0
  %197 = vmatpush1.bf16.msra.mxu0 0
  %198 = vmatprep.subr.bf16.mxu0 0
  %199 = vmatpush1.bf16.msra.mxu0 0
  %200 = vmatprep.subr.bf16.mxu0 0
  %201 = vmatpush1.bf16.msra.mxu0 0
  %202 = vmatprep.subr.bf16.mxu0 0
  %203 = vmatpush1.bf16.msra.mxu0 0
  %204 = vmatprep.subr.bf16.mxu0 0
  %205 = vmatpush1.bf16.msra.mxu0 0
  %206 = vmatprep.subr.bf16.mxu0 0
  %207 = vmatpush1.bf16.msra.mxu0 0
  %208 = vmatprep.subr.bf16.mxu0 0
  %209 = vmatpush1.bf16.msra.mxu0 0
  %210 = vmatprep.subr.bf16.mxu0 0
  %211 = vmatpush1.bf16.msra.mxu0 0
  %212 = vmatprep.subr.bf16.mxu0 0
  %213 = vmatpush1.bf16.msra.mxu0 0
  %214 = vmatprep.mubr.bf16.mxu0 0
  %215 = vmatmul.mubr.bf16.gmra.mrb[0].mxu0 %v180
  %v216 = vpop.f32.mrb[0].mxu0
  %v217 = vadd.f32 0.0, %v216
  %v218 = vpop.f32.mrb[0].mxu0
  %v219 = vpop.f32.mrb[0].mxu0
  %v220 = vadd.f32 0.0, %v219
  %v221 = vpop.f32.mrb[0].mxu0
  %222 = vdwg.mxu0
  %v223 = vadd.f32 %v27, %v217
  %v224 = vadd.f32 %v28, %v220
  %v225 = vld [vmem:[%s6] sm:$0x1]
  %v227 = vlaneseq
  %v228 = vshrl.u32 %v227, 7
  %v229 = vsub.s32 0, %v228
  %v230 = vrot.slane %v225, %v229
  %v232 = vadd.f32 %v223, %v230
  %v233 = vadd.f32 %v224, %v230
  %234 = vst.msk [vmem:[%s7] sm:$0xff] %vm29, %v232
  %235 = vst.msk [vmem:[%s7 + $0x8] sm:$0xff] %vm29, %v233
  // Predicated region
  $region30: #{deq_transformer_lm_forward.28} parent=0 // pred_check
    _
  $region31: #{deq_transformer_lm_forward.28} parent=0 // pred_check_branch
    %237 = sbr.rel (0) target = $region33
  $region32: #{deq_transformer_lm_forward.28} parent=0 // pred_region
    _
  $region33: #{deq_transformer_lm_forward.28} parent=0 // pred_fallthru
    _
  // Predicated region
  $region34: #{deq_transformer_lm_forward.28} parent=0 // pred_check
    _
  $region35: #{deq_transformer_lm_forward.28} parent=0 // pred_check_branch
    %239 = sbr.rel (0) target = $region37
  $region36: #{deq_transformer_lm_forward.28} parent=0 // pred_region
    _
  $region37: #{deq_transformer_lm_forward.28} parent=0 // pred_fallthru
    _

// kernel: deq_transformer_lm_forward.27
$region0: #{deq_transformer_lm_forward.27}
  #allocation0 [shape = 'u32[]', space=smem, size = 0x4, offset = 0x4, fixed_abs, tag = 'smem constant byte address 0x4 - core index']
  #allocation1 [shape = 'u32[144,128]{1,0:T(1,128)}', space=vmem, size = 0x12000, scoped, tag = 'internal scratch']
  %s0 = inlined_call_operand.vmem [shape: f32[2,16,32], index: 0, kind: input, shape index: {}]
  %s1 = inlined_call_operand.vmem [shape: f32[2,16,96], index: 1, kind: input, shape index: {}]
  %s2 = inlined_call_operand.vmem [shape: f32[2,8,32], index: 2, kind: input, shape index: {}]
  %s3 = inlined_call_operand.vmem [shape: f32[1,32], index: 3, kind: input, shape index: {}]
  %s4 = inlined_call_operand.vmem [shape: f32[1,32], index: 4, kind: input, shape index: {}]
  %s5 = inlined_call_operand.vmem [shape: bf16[32,96], index: 5, kind: input, shape index: {}]
  %s6 = inlined_call_operand.vmem [shape: bf16[16,32], index: 6, kind: input, shape index: {}]
  %s7 = inlined_call_operand.vmem [shape: f32[4,8], index: 7, kind: input, shape index: {}]
  %s8 = inlined_call_operand.vmem [shape: f32[4,8], index: 8, kind: input, shape index: {}]
  %s9 = inlined_call_operand.vmem [shape: f32[1,32], index: 9, kind: input, shape index: {}]
  %s10 = inlined_call_operand.vmem [shape: f32[1,32], index: 10, kind: input, shape index: {}]
  %s11 = inlined_call_operand.vmem [shape: bf16[32,32], index: 11, kind: input, shape index: {}]
  %s12 = inlined_call_operand.vmem [shape: f32[1,32], index: 12, kind: input, shape index: {}]
  %s13 = inlined_call_operand.vmem [shape: f32[2,8,32], index: 13, kind: output, shape index: {}]
  %s14 = sld [smem:[#allocation0]]
  $region85: #{deq_transformer_lm_forward.27} parent=0
    _
  %s16 = ssub.s32 1, %s14
  %s17 = scalar_select 0, %s16, %s14
  loop: start=0, step=1, limit=4
  $region2: #{deq_transformer_lm_forward.27} parent=0 // loop_pre_header
    _
  $region3: #{deq_transformer_lm_forward.27} parent=0 // loop_header
    %s19 = sphi 0, %s23
    %p20 = scmp.ge.s32.totalorder %s19, 4
    %s29 = sphi 0, %s31
    %s32 = sphi 0, %s29
    %s33 = sphi 0, %s32
    %s49 = sphi 0, %s33
    %s55 = sphi 0, %s57
    %s58 = sphi 0, %s55
    %s59 = sphi 0, %s58
    %s75 = sphi 0, %s59
    %s81 = sphi 0, %s83
    %s84 = sphi 0, %s81
    %s85 = sphi 0, %s84
    %s101 = sphi 0, %s85
    %s105 = sphi 0, %s105
    %s107 = sphi 0, %s105
    %s108 = sphi 0, %s107
    %s122 = sphi 0, %s108
    %s126 = sphi 0, %s126
    %s128 = sphi 0, %s126
    %s129 = sphi 0, %s128
    %s143 = sphi 0, %s129
    %s147 = sphi 0, %s147
    %s149 = sphi 0, %s147
    %s150 = sphi 0, %s149
    %s164 = sphi 0, %s150
    %s168 = sphi 0, %s168
    %s170 = sphi 0, %s168
    %s171 = sphi 0, %s170
    %s185 = sphi 0, %s171
    %s189 = sphi 0, %s189
    %s191 = sphi 0, %s189
    %s192 = sphi 0, %s191
    %s206 = sphi 0, %s192
    %s210 = sphi 0, %s210
    %s212 = sphi 0, %s210
    %s213 = sphi 0, %s212
    %s227 = sphi 0, %s213
    %s231 = sphi 0, %s231
    %s233 = sphi 0, %s231
    %s234 = sphi 0, %s233
    %s248 = sphi 0, %s234
    %s252 = sphi 0, %s252
    %s254 = sphi 0, %s252
    %s255 = sphi 0, %s254
    %s269 = sphi 0, %s255
    %s273 = sphi 0, %s273
    %s275 = sphi 0, %s273
    %s276 = sphi 0, %s275
    %s290 = sphi 0, %s276
    %s294 = sphi 0, %s294
    %s296 = sphi 0, %s294
    %s297 = sphi 0, %s296
    %s311 = sphi 0, %s297
    %s317 = sphi 0, %s319
    %s320 = sphi 0, %s317
    %s321 = sphi 0, %s320
    %s337 = sphi 0, %s321
  $region4: #{deq_transformer_lm_forward.27} parent=0 // loop_header_branch
    %22 = sbr.rel (%p20) target = $region8
  $region5: #{deq_transformer_lm_forward.27} parent=0 // loop_body
    %s24 = ssub.s32 %s19, 1
    %s25 = ssub.s32 %s19, 2
    %s26 = sadd.s32 %s19, 1
    %s27 = ssub.s32 %s19, %s26
    %p28 = scmp.eq.s32.totalorder %s27, 0
    %s30 = sadd.s32 %s29, 1
    %s31 = scalar_select %p28, %s29, %s30
    %p34 = pneg %p28
    %p35 = scmp.eq.s32.totalorder %s19, 1
    %p36 = por %p34, %p35
    %p37 = scmp.ne.s32.totalorder %s29, %s32
    %p38 = scmp.eq.s32.totalorder %s19, 0
    %p39 = por %p37, %p38
    %p40 = scmp.ne.s32.totalorder %s29, %s32
    %p41 = scmp.eq.s32.totalorder %s24, 1
    %p42 = por %p40, %p41
    %p43 = scmp.ne.s32.totalorder %s32, %s33
    %p44 = scmp.eq.s32.totalorder %s24, 0
    %p45 = por %p43, %p44
    %p46 = scmp.ne.s32.totalorder %s32, %s33
    %p47 = scmp.eq.s32.totalorder %s25, 1
    %p48 = por %p46, %p47
    %p50 = scmp.ne.s32.totalorder %s33, %s49
    %p51 = scmp.eq.s32.totalorder %s25, 0
    %p52 = por %p50, %p51
    %s53 = ssub.s32 %s19, %s26
    %p54 = scmp.eq.s32.totalorder %s53, 0
    %s56 = sadd.s32 %s55, 1
    %s57 = scalar_select %p54, %s55, %s56
    %p60 = pneg %p54
    %p61 = scmp.eq.s32.totalorder %s19, 1
    %p62 = por %p60, %p61
    %p63 = scmp.ne.s32.totalorder %s55, %s58
    %p64 = scmp.eq.s32.totalorder %s19, 0
    %p65 = por %p63, %p64
    %p66 = scmp.ne.s32.totalorder %s55, %s58
    %p67 = scmp.eq.s32.totalorder %s24, 1
    %p68 = por %p66, %p67
    %p69 = scmp.ne.s32.totalorder %s58, %s59
    %p70 = scmp.eq.s32.totalorder %s24, 0
    %p71 = por %p69, %p70
    %p72 = scmp.ne.s32.totalorder %s58, %s59
    %p73 = scmp.eq.s32.totalorder %s25, 1
    %p74 = por %p72, %p73
    %p76 = scmp.ne.s32.totalorder %s59, %s75
    %p77 = scmp.eq.s32.totalorder %s25, 0
    %p78 = por %p76, %p77
    %s79 = ssub.s32 %s19, %s26
    %p80 = scmp.eq.s32.totalorder %s79, 0
    %s82 = sadd.s32 %s81, 1
    %s83 = scalar_select %p80, %s81, %s82
    %p86 = pneg %p80
    %p87 = scmp.eq.s32.totalorder %s19, 1
    %p88 = por %p86, %p87
    %p89 = scmp.ne.s32.totalorder %s81, %s84
    %p90 = scmp.eq.s32.totalorder %s19, 0
    %p91 = por %p89, %p90
    %p92 = scmp.ne.s32.totalorder %s81, %s84
    %p93 = scmp.eq.s32.totalorder %s24, 1
    %p94 = por %p92, %p93
    %p95 = scmp.ne.s32.totalorder %s84, %s85
    %p96 = scmp.eq.s32.totalorder %s24, 0
    %p97 = por %p95, %p96
    %p98 = scmp.ne.s32.totalorder %s84, %s85
    %p99 = scmp.eq.s32.totalorder %s25, 1
    %p100 = por %p98, %p99
    %p102 = scmp.ne.s32.totalorder %s85, %s101
    %p103 = scmp.eq.s32.totalorder %s25, 0
    %p104 = por %p102, %p103
    %s106 = sadd.s32 %s105, 1
    %p109 = scmp.eq.s32.totalorder %s19, 1
    %p110 = scmp.ne.s32.totalorder %s105, %s107
    %p111 = scmp.eq.s32.totalorder %s19, 0
    %p112 = por %p110, %p111
    %p113 = scmp.ne.s32.totalorder %s105, %s107
    %p114 = scmp.eq.s32.totalorder %s24, 1
    %p115 = por %p113, %p114
    %p116 = scmp.ne.s32.totalorder %s107, %s108
    %p117 = scmp.eq.s32.totalorder %s24, 0
    %p118 = por %p116, %p117
    %p119 = scmp.ne.s32.totalorder %s107, %s108
    %p120 = scmp.eq.s32.totalorder %s25, 1
    %p121 = por %p119, %p120
    %p123 = scmp.ne.s32.totalorder %s108, %s122
    %p124 = scmp.eq.s32.totalorder %s25, 0
    %p125 = por %p123, %p124
    %s127 = sadd.s32 %s126, 1
    %p130 = scmp.eq.s32.totalorder %s19, 1
    %p131 = scmp.ne.s32.totalorder %s126, %s128
    %p132 = scmp.eq.s32.totalorder %s19, 0
    %p133 = por %p131, %p132
    %p134 = scmp.ne.s32.totalorder %s126, %s128
    %p135 = scmp.eq.s32.totalorder %s24, 1
    %p136 = por %p134, %p135
    %p137 = scmp.ne.s32.totalorder %s128, %s129
    %p138 = scmp.eq.s32.totalorder %s24, 0
    %p139 = por %p137, %p138
    %p140 = scmp.ne.s32.totalorder %s128, %s129
    %p141 = scmp.eq.s32.totalorder %s25, 1
    %p142 = por %p140, %p141
    %p144 = scmp.ne.s32.totalorder %s129, %s143
    %p145 = scmp.eq.s32.totalorder %s25, 0
    %p146 = por %p144, %p145
    %s148 = sadd.s32 %s147, 1
    %p151 = scmp.eq.s32.totalorder %s19, 1
    %p152 = scmp.ne.s32.totalorder %s147, %s149
    %p153 = scmp.eq.s32.totalorder %s19, 0
    %p154 = por %p152, %p153
    %p155 = scmp.ne.s32.totalorder %s147, %s149
    %p156 = scmp.eq.s32.totalorder %s24, 1
    %p157 = por %p155, %p156
    %p158 = scmp.ne.s32.totalorder %s149, %s150
    %p159 = scmp.eq.s32.totalorder %s24, 0
    %p160 = por %p158, %p159
    %p161 = scmp.ne.s32.totalorder %s149, %s150
    %p162 = scmp.eq.s32.totalorder %s25, 1
    %p163 = por %p161, %p162
    %p165 = scmp.ne.s32.totalorder %s150, %s164
    %p166 = scmp.eq.s32.totalorder %s25, 0
    %p167 = por %p165, %p166
    %s169 = sadd.s32 %s168, 1
    %p172 = scmp.eq.s32.totalorder %s19, 1
    %p173 = scmp.ne.s32.totalorder %s168, %s170
    %p174 = scmp.eq.s32.totalorder %s19, 0
    %p175 = por %p173, %p174
    %p176 = scmp.ne.s32.totalorder %s168, %s170
    %p177 = scmp.eq.s32.totalorder %s24, 1
    %p178 = por %p176, %p177
    %p179 = scmp.ne.s32.totalorder %s170, %s171
    %p180 = scmp.eq.s32.totalorder %s24, 0
    %p181 = por %p179, %p180
    %p182 = scmp.ne.s32.totalorder %s170, %s171
    %p183 = scmp.eq.s32.totalorder %s25, 1
    %p184 = por %p182, %p183
    %p186 = scmp.ne.s32.totalorder %s171, %s185
    %p187 = scmp.eq.s32.totalorder %s25, 0
    %p188 = por %p186, %p187
    %s190 = sadd.s32 %s189, 1
    %p193 = scmp.eq.s32.totalorder %s19, 1
    %p194 = scmp.ne.s32.totalorder %s189, %s191
    %p195 = scmp.eq.s32.totalorder %s19, 0
    %p196 = por %p194, %p195
    %p197 = scmp.ne.s32.totalorder %s189, %s191
    %p198 = scmp.eq.s32.totalorder %s24, 1
    %p199 = por %p197, %p198
    %p200 = scmp.ne.s32.totalorder %s191, %s192
    %p201 = scmp.eq.s32.totalorder %s24, 0
    %p202 = por %p200, %p201
    %p203 = scmp.ne.s32.totalorder %s191, %s192
    %p204 = scmp.eq.s32.totalorder %s25, 1
    %p205 = por %p203, %p204
    %p207 = scmp.ne.s32.totalorder %s192, %s206
    %p208 = scmp.eq.s32.totalorder %s25, 0
    %p209 = por %p207, %p208
    %s211 = sadd.s32 %s210, 1
    %p214 = scmp.eq.s32.totalorder %s19, 1
    %p215 = scmp.ne.s32.totalorder %s210, %s212
    %p216 = scmp.eq.s32.totalorder %s19, 0
    %p217 = por %p215, %p216
    %p218 = scmp.ne.s32.totalorder %s210, %s212
    %p219 = scmp.eq.s32.totalorder %s24, 1
    %p220 = por %p218, %p219
    %p221 = scmp.ne.s32.totalorder %s212, %s213
    %p222 = scmp.eq.s32.totalorder %s24, 0
    %p223 = por %p221, %p222
    %p224 = scmp.ne.s32.totalorder %s212, %s213
    %p225 = scmp.eq.s32.totalorder %s25, 1
    %p226 = por %p224, %p225
    %p228 = scmp.ne.s32.totalorder %s213, %s227
    %p229 = scmp.eq.s32.totalorder %s25, 0
    %p230 = por %p228, %p229
    %s232 = sadd.s32 %s231, 1
    %p235 = scmp.eq.s32.totalorder %s19, 1
    %p236 = scmp.ne.s32.totalorder %s231, %s233
    %p237 = scmp.eq.s32.totalorder %s19, 0
    %p238 = por %p236, %p237
    %p239 = scmp.ne.s32.totalorder %s231, %s233
    %p240 = scmp.eq.s32.totalorder %s24, 1
    %p241 = por %p239, %p240
    %p242 = scmp.ne.s32.totalorder %s233, %s234
    %p243 = scmp.eq.s32.totalorder %s24, 0
    %p244 = por %p242, %p243
    %p245 = scmp.ne.s32.totalorder %s233, %s234
    %p246 = scmp.eq.s32.totalorder %s25, 1
    %p247 = por %p245, %p246
    %p249 = scmp.ne.s32.totalorder %s234, %s248
    %p250 = scmp.eq.s32.totalorder %s25, 0
    %p251 = por %p249, %p250
    %s253 = sadd.s32 %s252, 1
    %p256 = scmp.eq.s32.totalorder %s19, 1
    %p257 = scmp.ne.s32.totalorder %s252, %s254
    %p258 = scmp.eq.s32.totalorder %s19, 0
    %p259 = por %p257, %p258
    %p260 = scmp.ne.s32.totalorder %s252, %s254
    %p261 = scmp.eq.s32.totalorder %s24, 1
    %p262 = por %p260, %p261
    %p263 = scmp.ne.s32.totalorder %s254, %s255
    %p264 = scmp.eq.s32.totalorder %s24, 0
    %p265 = por %p263, %p264
    %p266 = scmp.ne.s32.totalorder %s254, %s255
    %p267 = scmp.eq.s32.totalorder %s25, 1
    %p268 = por %p266, %p267
    %p270 = scmp.ne.s32.totalorder %s255, %s269
    %p271 = scmp.eq.s32.totalorder %s25, 0
    %p272 = por %p270, %p271
    %s274 = sadd.s32 %s273, 1
    %p277 = scmp.eq.s32.totalorder %s19, 1
    %p278 = scmp.ne.s32.totalorder %s273, %s275
    %p279 = scmp.eq.s32.totalorder %s19, 0
    %p280 = por %p278, %p279
    %p281 = scmp.ne.s32.totalorder %s273, %s275
    %p282 = scmp.eq.s32.totalorder %s24, 1
    %p283 = por %p281, %p282
    %p284 = scmp.ne.s32.totalorder %s275, %s276
    %p285 = scmp.eq.s32.totalorder %s24, 0
    %p286 = por %p284, %p285
    %p287 = scmp.ne.s32.totalorder %s275, %s276
    %p288 = scmp.eq.s32.totalorder %s25, 1
    %p289 = por %p287, %p288
    %p291 = scmp.ne.s32.totalorder %s276, %s290
    %p292 = scmp.eq.s32.totalorder %s25, 0
    %p293 = por %p291, %p292
    %s295 = sadd.s32 %s294, 1
    %p298 = scmp.eq.s32.totalorder %s19, 1
    %p299 = scmp.ne.s32.totalorder %s294, %s296
    %p300 = scmp.eq.s32.totalorder %s19, 0
    %p301 = por %p299, %p300
    %p302 = scmp.ne.s32.totalorder %s294, %s296
    %p303 = scmp.eq.s32.totalorder %s24, 1
    %p304 = por %p302, %p303
    %p305 = scmp.ne.s32.totalorder %s296, %s297
    %p306 = scmp.eq.s32.totalorder %s24, 0
    %p307 = por %p305, %p306
    %p308 = scmp.ne.s32.totalorder %s296, %s297
    %p309 = scmp.eq.s32.totalorder %s25, 1
    %p310 = por %p308, %p309
    %p312 = scmp.ne.s32.totalorder %s297, %s311
    %p313 = scmp.eq.s32.totalorder %s25, 0
    %p314 = por %p312, %p313
    %s315 = ssub.s32 %s19, %s26
    %p316 = scmp.eq.s32.totalorder %s315, 0
    %s318 = sadd.s32 %s317, 1
    %s319 = scalar_select %p316, %s317, %s318
    %p322 = pneg %p316
    %p323 = scmp.eq.s32.totalorder %s19, 1
    %p324 = por %p322, %p323
    %p325 = scmp.ne.s32.totalorder %s317, %s320
    %p326 = scmp.eq.s32.totalorder %s19, 0
    %p327 = por %p325, %p326
    %p328 = scmp.ne.s32.totalorder %s317, %s320
    %p329 = scmp.eq.s32.totalorder %s24, 1
    %p330 = por %p328, %p329
    %p331 = scmp.ne.s32.totalorder %s320, %s321
    %p332 = scmp.eq.s32.totalorder %s24, 0
    %p333 = por %p331, %p332
    %p334 = scmp.ne.s32.totalorder %s320, %s321
    %p335 = scmp.eq.s32.totalorder %s25, 1
    %p336 = por %p334, %p335
    %p338 = scmp.ne.s32.totalorder %s321, %s337
    %p339 = scmp.eq.s32.totalorder %s25, 0
    %p340 = por %p338, %p339
    %p341 = scmp.le.s32.totalorder 1, %s19
    %p342 = scmp.lt.s32.totalorder %s19, 3
    %p343 = pnand %p341, %p342
    %p344 = pneg %p343
    // Predicated region
    $region9: #{deq_transformer_lm_forward.27} parent=5 // pred_check
      _
    $region10: #{deq_transformer_lm_forward.27} parent=5 // pred_check_branch
      %346 = sbr.rel (%p343) target = $region12
    $region11: #{deq_transformer_lm_forward.27} parent=5 // pred_region
      %s347 = ssub.s32 %s19, 1
      // Predicated region
      $region13: #{deq_transformer_lm_forward.27} parent=11 // pred_check
        %p348 = pneg %p118
      $region14: #{deq_transformer_lm_forward.27} parent=11 // pred_check_branch
        %350 = sbr.rel (%p348) target = $region16
      $region15: #{deq_transformer_lm_forward.27} parent=11 // pred_region
        _
      $region16: #{deq_transformer_lm_forward.27} parent=11 // pred_fallthru
        _
      // Predicated region
      $region17: #{deq_transformer_lm_forward.27} parent=11 // pred_check
        %p351 = pneg %p139
      $region18: #{deq_transformer_lm_forward.27} parent=11 // pred_check_branch
        %353 = sbr.rel (%p351) target = $region20
      $region19: #{deq_transformer_lm_forward.27} parent=11 // pred_region
        _
      $region20: #{deq_transformer_lm_forward.27} parent=11 // pred_fallthru
        _
      // Predicated region
      $region21: #{deq_transformer_lm_forward.27} parent=11 // pred_check
        %p354 = pneg %p160
      $region22: #{deq_transformer_lm_forward.27} parent=11 // pred_check_branch
        %356 = sbr.rel (%p354) target = $region24
      $region23: #{deq_transformer_lm_forward.27} parent=11 // pred_region
        _
      $region24: #{deq_transformer_lm_forward.27} parent=11 // pred_fallthru
        _
      // Predicated region
      $region25: #{deq_transformer_lm_forward.27} parent=11 // pred_check
        %p357 = pneg %p181
      $region26: #{deq_transformer_lm_forward.27} parent=11 // pred_check_branch
        %359 = sbr.rel (%p357) target = $region28
      $region27: #{deq_transformer_lm_forward.27} parent=11 // pred_region
        _
      $region28: #{deq_transformer_lm_forward.27} parent=11 // pred_fallthru
        _
      // Predicated region
      $region29: #{deq_transformer_lm_forward.27} parent=11 // pred_check
        %p360 = pneg %p202
      $region30: #{deq_transformer_lm_forward.27} parent=11 // pred_check_branch
        %362 = sbr.rel (%p360) target = $region32
      $region31: #{deq_transformer_lm_forward.27} parent=11 // pred_region
        _
      $region32: #{deq_transformer_lm_forward.27} parent=11 // pred_fallthru
        _
      // Predicated region
      $region33: #{deq_transformer_lm_forward.27} parent=11 // pred_check
        %p363 = pneg %p223
      $region34: #{deq_transformer_lm_forward.27} parent=11 // pred_check_branch
        %365 = sbr.rel (%p363) target = $region36
      $region35: #{deq_transformer_lm_forward.27} parent=11 // pred_region
        _
      $region36: #{deq_transformer_lm_forward.27} parent=11 // pred_fallthru
        _
      // Predicated region
      $region37: #{deq_transformer_lm_forward.27} parent=11 // pred_check
        %p366 = pneg %p244
      $region38: #{deq_transformer_lm_forward.27} parent=11 // pred_check_branch
        %368 = sbr.rel (%p366) target = $region40
      $region39: #{deq_transformer_lm_forward.27} parent=11 // pred_region
        _
      $region40: #{deq_transformer_lm_forward.27} parent=11 // pred_fallthru
        _
      // Predicated region
      $region41: #{deq_transformer_lm_forward.27} parent=11 // pred_check
        %p369 = pneg %p265
      $region42: #{deq_transformer_lm_forward.27} parent=11 // pred_check_branch
        %371 = sbr.rel (%p369) target = $region44
      $region43: #{deq_transformer_lm_forward.27} parent=11 // pred_region
        _
      $region44: #{deq_transformer_lm_forward.27} parent=11 // pred_fallthru
        _
      // Predicated region
      $region45: #{deq_transformer_lm_forward.27} parent=11 // pred_check
        %p372 = pneg %p286
      $region46: #{deq_transformer_lm_forward.27} parent=11 // pred_check_branch
        %374 = sbr.rel (%p372) target = $region48
      $region47: #{deq_transformer_lm_forward.27} parent=11 // pred_region
        _
      $region48: #{deq_transformer_lm_forward.27} parent=11 // pred_fallthru
        _
      // Predicated region
      $region49: #{deq_transformer_lm_forward.27} parent=11 // pred_check
        %p375 = pneg %p307
      $region50: #{deq_transformer_lm_forward.27} parent=11 // pred_check_branch
        %377 = sbr.rel (%p375) target = $region52
      $region51: #{deq_transformer_lm_forward.27} parent=11 // pred_region
        _
      $region52: #{deq_transformer_lm_forward.27} parent=11 // pred_fallthru
        _
    $region12: #{deq_transformer_lm_forward.27} parent=5 // pred_fallthru
      _
    %p378 = scmp.lt.s32.totalorder %s19, 2
    // Predicated region
    $region53: #{deq_transformer_lm_forward.27} parent=5 // pred_check
      %p379 = pneg %p378
    $region54: #{deq_transformer_lm_forward.27} parent=5 // pred_check_branch
      %381 = sbr.rel (%p379) target = $region56
    $region55: #{deq_transformer_lm_forward.27} parent=5 // pred_region
      // Predicated region
      $region57: #{deq_transformer_lm_forward.27} parent=55 // pred_check
        %p382 = pneg %p39
      $region58: #{deq_transformer_lm_forward.27} parent=55 // pred_check_branch
        %384 = sbr.rel (%p382) target = $region60
      $region59: #{deq_transformer_lm_forward.27} parent=55 // pred_region
        %p385 = scmp.lt.s32.totalorder %s19, 1
        %s386 = scalar_select %p385, %s19, 1
        %s387 = smul.addr %s386, 2
        %s388 = smul.addr %s387, 8
        %s389 = scalar_lea.vmem %s0, %s388
      $region60: #{deq_transformer_lm_forward.27} parent=55 // pred_fallthru
        _
      // Predicated region
      $region61: #{deq_transformer_lm_forward.27} parent=55 // pred_check
        %p390 = pneg %p65
      $region62: #{deq_transformer_lm_forward.27} parent=55 // pred_check_branch
        %392 = sbr.rel (%p390) target = $region64
      $region63: #{deq_transformer_lm_forward.27} parent=55 // pred_region
        %p393 = scmp.lt.s32.totalorder %s19, 1
        %s394 = scalar_select %p393, %s19, 1
        %s395 = smul.addr %s394, 2
        %s396 = smul.addr %s395, 8
        %s397 = scalar_lea.vmem %s1, %s396
      $region64: #{deq_transformer_lm_forward.27} parent=55 // pred_fallthru
        _
      // Predicated region
      $region65: #{deq_transformer_lm_forward.27} parent=55 // pred_check
        %p398 = pneg %p91
      $region66: #{deq_transformer_lm_forward.27} parent=55 // pred_check_branch
        %400 = sbr.rel (%p398) target = $region68
      $region67: #{deq_transformer_lm_forward.27} parent=55 // pred_region
        %p401 = scmp.lt.s32.totalorder %s19, 1
        %s402 = scalar_select %p401, %s19, 1
        %s403 = smul.addr %s402, 8
        %s404 = scalar_lea.vmem %s2, %s403
      $region68: #{deq_transformer_lm_forward.27} parent=55 // pred_fallthru
        _
    $region56: #{deq_transformer_lm_forward.27} parent=5 // pred_fallthru
      _
    %p405 = scmp.le.s32.totalorder 1, %s19
    %p406 = scmp.lt.s32.totalorder %s19, 3
    %p407 = pnand %p405, %p406
    %p408 = pneg %p407
    // Predicated region
    $region69: #{deq_transformer_lm_forward.27} parent=5 // pred_check
      _
    $region70: #{deq_transformer_lm_forward.27} parent=5 // pred_check_branch
      %410 = sbr.rel (%p407) target = $region72
    $region71: #{deq_transformer_lm_forward.27} parent=5 // pred_region
      %s411 = ssub.s32 %s19, 1
      %p412 = scmp.lt.s32.totalorder %s24, 1
      %s413 = scalar_select %p412, %s24, 1
      %s414 = smul.addr %s413, 2
      %s415 = smul.addr %s414, 8
      %s416 = scalar_lea.vmem %s0, %s415
      %p417 = pneg %p45
      %p418 = pneg %p42
      %p419 = scmp.lt.s32.totalorder %s24, 1
      %s420 = scalar_select %p419, %s24, 1
      %s421 = smul.addr %s420, 2
      %s422 = smul.addr %s421, 8
      %s423 = scalar_lea.vmem %s1, %s422
      %p424 = pneg %p71
      %p425 = pneg %p68
      %p426 = scmp.lt.s32.totalorder %s24, 1
      %s427 = scalar_select %p426, %s24, 1
      %s428 = smul.addr %s427, 8
      %s429 = scalar_lea.vmem %s2, %s428
      %p430 = pneg %p97
      %p431 = pneg %p94
      %p432 = pneg %p118
      %p433 = pneg %p115
      %p434 = pneg %p139
      %p435 = pneg %p136
      %p436 = pneg %p160
      %p437 = pneg %p157
      %p438 = pneg %p181
      %p439 = pneg %p178
      %p440 = pneg %p202
      %p441 = pneg %p199
      %p442 = pneg %p223
      %p443 = pneg %p220
      %p444 = pneg %p244
      %p445 = pneg %p241
      %p446 = pneg %p265
      %p447 = pneg %p262
      %p448 = pneg %p286
      %p449 = pneg %p283
      %p450 = pneg %p307
      %p451 = pneg %p304
      %p452 = pneg %p333
      %p453 = pneg %p330
      %p454 = scmp.lt.s32.totalorder %s24, 1
      %s455 = scalar_select %p454, %s24, 1
      %s456 = smul.addr %s455, 8
      %s457 = scalar_lea.vmem %s13, %s456
      %p458 = scmp.lt.s32.totalorder %s24, 1
      %s459 = scalar_select %p458, %s24, 1
      %s460 = smul.addr %s459, 2
      %s461 = smul.addr %s460, 8
      %s462 = scalar_lea.vmem %s0, %s461
      %p463 = scmp.lt.s32.totalorder %s24, 1
      %s464 = scalar_select %p463, %s24, 1
      %s465 = smul.addr %s464, 2
      %s466 = smul.addr %s465, 8
      %s467 = scalar_lea.vmem %s1, %s466
      %p468 = scmp.lt.s32.totalorder %s24, 1
      %s469 = scalar_select %p468, %s24, 1
      %s470 = smul.addr %s469, 8
      %s471 = scalar_lea.vmem %s2, %s470
      %p472 = scmp.lt.s32.totalorder %s24, 1
      %s473 = scalar_select %p472, %s24, 1
      %s474 = smul.addr %s473, 8
      %s475 = scalar_lea.vmem %s13, %s474
      %v477 = vld [vmem:[%s462] sm:$0xff]
      %v478 = vld [vmem:[%s462 + $0x8] sm:$0xff]
      %vm479 = vcmask 261120
      %v480 = vsel %vm479, %v477, 0.0
      %481 = vadd.xlane.f32.xlu0 %v480
      %v482 = vpop.xlane.xlu0 %481
      %v483 = vsel %vm479, %v478, 0.0
      %484 = vadd.xlane.f32.xlu0 %v483
      %v485 = vpop.xlane.xlu0 %484
      %v486 = vrcp.pop 32.0
      %v487 = vmul.f32 %v482, %v486
      %v488 = vmul.f32 %v485, %v486
      %v489 = vsub.f32 %v477, %v487
      %v490 = vsub.f32 %v478, %v488
      %v491 = vmul.f32 %v489, %v489
      %v492 = vmul.f32 %v490, %v490
      %v493 = vsel %vm479, %v491, 0.0
      %494 = vadd.xlane.f32.xlu0 %v493
      %v495 = vpop.xlane.xlu0 %494
      %v496 = vsel %vm479, %v492, 0.0
      %497 = vadd.xlane.f32.xlu0 %v496
      %v498 = vpop.xlane.xlu0 %497
      %v499 = vmul.f32 %v495, %v486
      %v500 = vmul.f32 %v498, %v486
      %v501 = vadd.f32 %v499, 1e-05
      %v502 = vadd.f32 %v500, 1e-05
      %v503 = vrsqrt.pop %v501
      %v504 = vrsqrt.pop %v502
      %v505 = vmul.f32 %v489, %v503
      %v506 = vmul.f32 %v490, %v504
      %v507 = vld [vmem:[%s3] sm:$0x1]
      %v509 = vlaneseq
      %v510 = vshrl.u32 %v509, 7
      %v511 = vsub.s32 0, %v510
      %v512 = vrot.slane %v507, %v511
      %v514 = vmul.f32 %v505, %v512
      %v515 = vmul.f32 %v506, %v512
      %v516 = vld [vmem:[%s4] sm:$0x1]
      %v518 = vlaneseq
      %v519 = vshrl.u32 %v518, 7
      %v520 = vsub.s32 0, %v519
      %v521 = vrot.slane %v516, %v520
      %v523 = vadd.f32 %v514, %v521
      %v524 = vadd.f32 %v515, %v521
      %v525 = vpack.c.bf16 %v524, %v523
      %v526 = vld [vmem:[%s5] sm:$0xf]
      %v527 = vld [vmem:[%s5 + $0x4] sm:$0xf]
      %v528 = vld [vmem:[%s5 + $0x8] sm:$0xf]
      %v529 = vld [vmem:[%s5 + $0xc] sm:$0xf]
      %v530 = vld [vmem:[%s467] sm:$0xff]
      %v531 = vld [vmem:[%s467 + $0x8] sm:$0xff]
      %v536 = vunpack.c.l.b16 %v526
      %v537 = vunpack.c.l.b16 %v527
      %v538 = vunpack.c.l.b16 %v528
      %v539 = vunpack.c.l.b16 %v529
      %v540 = vpack.c.b16 %v537, %v536
      %v541 = vpack.c.b16 %v539, %v538
      %v545 = vsel %vm479, %v525, 0
      %547 = vmatprep.subr.bf16.mxu0 0
      %548 = vmatpush1.bf16.msra.mxu0 %v540
      %549 = vmatprep.subr.bf16.mxu0 0
      %550 = vmatpush1.bf16.msra.mxu0 %v541
      %551 = vmatprep.subr.bf16.mxu0 0
      %552 = vmatpush1.bf16.msra.mxu0 0
      %553 = vmatprep.subr.bf16.mxu0 0
      %554 = vmatpush1.bf16.msra.mxu0 0
      %555 = vmatprep.subr.bf16.mxu0 0
      %556 = vmatpush1.bf16.msra.mxu0 0
      %557 = vmatprep.subr.bf16.mxu0 0
      %558 = vmatpush1.bf16.msra.mxu0 0
      %559 = vmatprep.subr.bf16.mxu0 0
      %560 = vmatpush1.bf16.msra.mxu0 0
      %561 = vmatprep.subr.bf16.mxu0 0
      %562 = vmatpush1.bf16.msra.mxu0 0
      %563 = vmatprep.subr.bf16.mxu0 0
      %564 = vmatpush1.bf16.msra.mxu0 0
      %565 = vmatprep.subr.bf16.mxu0 0
      %566 = vmatpush1.bf16.msra.mxu0 0
      %567 = vmatprep.subr.bf16.mxu0 0
      %568 = vmatpush1.bf16.msra.mxu0 0
      %569 = vmatprep.subr.bf16.mxu0 0
      %570 = vmatpush1.bf16.msra.mxu0 0
      %571 = vmatprep.subr.bf16.mxu0 0
      %572 = vmatpush1.bf16.msra.mxu0 0
      %573 = vmatprep.subr.bf16.mxu0 0
      %574 = vmatpush1.bf16.msra.mxu0 0
      %575 = vmatprep.subr.bf16.mxu0 0
      %576 = vmatpush1.bf16.msra.mxu0 0
      %577 = vmatprep.subr.bf16.mxu0 0
      %578 = vmatpush1.bf16.msra.mxu0 0
      %579 = vmatprep.mubr.bf16.mxu0 0
      %580 = vmatmul.mubr.bf16.gmra.mrb[0].mxu0 %v545
      %v581 = vpop.f32.mrb[0].mxu0
      %v582 = vadd.f32 %v530, %v581
      %v583 = vpop.f32.mrb[0].mxu0
      %v584 = vpop.f32.mrb[0].mxu0
      %v585 = vadd.f32 %v531, %v584
      %v586 = vpop.f32.mrb[0].mxu0
      %587 = vdwg.mxu0
      %v588 = vlaneseq
      %v589 = vshrl.u32 %v588, 7
      %v590 = vlaneseq
      %v591 = vand.u32 %v590, 127
      %v592 = vadd.s32 %v589, 8
      %vm593 = vcmp.gt.s32.totalorder %v591, %v592
      %v594 = vsub.s32 %v592, 1000
      %vm595 = vcmp.le.s32.totalorder %v591, %v594
      %vm596 = vmor %vm593, %vm595
      %v597 = vld [vmem:[%s7] sm:$0xf]
      %v598 = vld [vmem:[%s8] sm:$0xf]
      %v599 = vld [vmem:[%s6] sm:$0xf]
      %v600 = vld [vmem:[%s6 + $0x4] sm:$0xf]
      %v601 = vlaneseq
      %v602 = vshrl.u32 %v601, 7
      %v603 = vsub.s32 0, %v602
      %v604 = vrot.slane %v597, %v603
      %v605 = vadd.f32 %v585, %v604
      %v606 = vpack.c.bf16 %v605, %v605
      %v607 = vlaneseq
      %v608 = vshrl.u32 %v607, 7
      %v609 = vsub.s32 0, %v608
      %v610 = vrot.slane %v598, %v609
      %v611 = vadd.f32 %v585, %v610
      %v612 = vpack.c.bf16 %v611, %v611
      %v613 = vpack.c.bf16 %v585, %v582
      %v616 = vunpack.c.l.b16 %v599
      %v617 = vunpack.c.l.b16 %v600
      %v618 = vpack.c.b16 %v617, %v616
      %vm619 = vcmask 64512
      %v621 = vsel %vm619, %v612, 0
      %v624 = vsel %vm619, %v618, 0
      %626 = vmatprep.subr.bf16.mxu0 0
      %627 = vmatpush1.bf16.xpose.msra.mxu0 %v624
      %628 = vmatprep.subr.bf16.mxu0 0
      %629 = vmatpush1.bf16.xpose.msra.mxu0 0
      %630 = vmatprep.subr.bf16.mxu0 0
      %631 = vmatpush1.bf16.xpose.msra.mxu0 0
      %632 = vmatprep.subr.bf16.mxu0 0
      %633 = vmatpush1.bf16.xpose.msra.mxu0 0
      %634 = vmatprep.subr.bf16.mxu0 0
      %635 = vmatpush1.bf16.xpose.msra.mxu0 0
      %636 = vmatprep.subr.bf16.mxu0 0
      %637 = vmatpush1.bf16.xpose.msra.mxu0 0
      %638 = vmatprep.subr.bf16.mxu0 0
      %639 = vmatpush1.bf16.xpose.msra.mxu0 0
      %640 = vmatprep.subr.bf16.mxu0 0
      %641 = vmatpush1.bf16.xpose.msra.mxu0 0
      %642 = vmatprep.subr.bf16.mxu0 0
      %643 = vmatpush1.bf16.xpose.msra.mxu0 0
      %644 = vmatprep.subr.bf16.mxu0 0
      %645 = vmatpush1.bf16.xpose.msra.mxu0 0
      %646 = vmatprep.subr.bf16.mxu0 0
      %647 = vmatpush1.bf16.xpose.msra.mxu0 0
      %648 = vmatprep.subr.bf16.mxu0 0
      %649 = vmatpush1.bf16.xpose.msra.mxu0 0
      %650 = vmatprep.subr.bf16.mxu0 0
      %651 = vmatpush1.bf16.xpose.msra.mxu0 0
      %652 = vmatprep.subr.bf16.mxu0 0
      %653 = vmatpush1.bf16.xpose.msra.mxu0 0
      %654 = vmatprep.subr.bf16.mxu0 0
      %655 = vmatpush1.bf16.xpose.msra.mxu0 0
      %656 = vmatprep.subr.bf16.mxu0 0
      %657 = vmatpush1.bf16.xpose.msra.mxu0 0
      %658 = vmatprep.mubr.bf16.mxu0 0
      %659 = vmatmul.mubr.bf16.gmra.mrb[0].mxu0 %v621
      %v660 = vpop.f32.mrb[0].mxu0
      %v661 = vadd.f32 0.0, %v660
      %v662 = vpop.f32.mrb[0].mxu0
      %v663 = vpop.f32.mrb[0].mxu0
      %v664 = vpop.f32.mrb[0].mxu0
      %665 = vdwg.mxu0
      %vm666 = vcmask 130048
      %v667 = vsel %vm666, %v661, 0.0
      %669 = vrot.lane.b32.xlu0 %v667, 1
      %v670 = vpop.permute.xlu0 %669
      %672 = vrot.lane.b32.xlu0 %v667, 2
      %v673 = vpop.permute.xlu0 %672
      %675 = vrot.lane.b32.xlu0 %v667, 3
      %v676 = vpop.permute.xlu0 %675
      %678 = vrot.lane.b32.xlu0 %v667, 4
      %v679 = vpop.permute.xlu0 %678
      %681 = vrot.lane.b32.xlu0 %v667, 5
      %v682 = vpop.permute.xlu0 %681
      %684 = vrot.lane.b32.xlu0 %v667, 6
      %v685 = vpop.permute.xlu0 %684
      %687 = vrot.lane.b32.xlu0 %v667, 7
      %v688 = vpop.permute.xlu0 %687
      %vm690 = vcmask 1040384
      %v691 = vsel %vm690, %v667, %v670
      %vm692 = vcmask 1041408
      %v693 = vsel %vm692, %v691, %v673
      %vm694 = vcmask 1042432
      %v695 = vsel %vm694, %v693, %v676
      %vm696 = vcmask 1043456
      %v697 = vsel %vm696, %v695, %v679
      %vm698 = vcmask 1044480
      %v699 = vsel %vm698, %v697, %v682
      %vm700 = vcmask 1045504
      %v701 = vsel %vm700, %v699, %v685
      %vm702 = vcmask 1046528
      %v703 = vsel %vm702, %v701, %v688
      %705 = vrot.lane.b32.xlu0 %v613, 120
      %v706 = vpop.permute.xlu0 %705
      %708 = vrot.lane.b32.xlu0 %v703, 121
      %v709 = vpop.permute.xlu0 %708
      %v712 = vsel %vm619, %v606, 0
      %v715 = vsel %vm619, %v706, 0
      %717 = vmatprep.subr.bf16.mxu0 0
      %718 = vmatpush1.bf16.xpose.msra.mxu0 %v715
      %719 = vmatprep.subr.bf16.mxu0 0
      %720 = vmatpush1.bf16.xpose.msra.mxu0 0
      %721 = vmatprep.subr.bf16.mxu0 0
      %722 = vmatpush1.bf16.xpose.msra.mxu0 0
      %723 = vmatprep.subr.bf16.mxu0 0
      %724 = vmatpush1.bf16.xpose.msra.mxu0 0
      %725 = vmatprep.subr.bf16.mxu0 0
      %726 = vmatpush1.bf16.xpose.msra.mxu0 0
      %727 = vmatprep.subr.bf16.mxu0 0
      %728 = vmatpush1.bf16.xpose.msra.mxu0 0
      %729 = vmatprep.subr.bf16.mxu0 0
      %730 = vmatpush1.bf16.xpose.msra.mxu0 0
      %731 = vmatprep.subr.bf16.mxu0 0
      %732 = vmatpush1.bf16.xpose.msra.mxu0 0
      %733 = vmatprep.subr.bf16.mxu0 0
      %734 = vmatpush1.bf16.xpose.msra.mxu0 0
      %735 = vmatprep.subr.bf16.mxu0 0
      %736 = vmatpush1.bf16.xpose.msra.mxu0 0
      %737 = vmatprep.subr.bf16.mxu0 0
      %738 = vmatpush1.bf16.xpose.msra.mxu0 0
      %739 = vmatprep.subr.bf16.mxu0 0
      %740 = vmatpush1.bf16.xpose.msra.mxu0 0
      %741 = vmatprep.subr.bf16.mxu0 0
      %742 = vmatpush1.bf16.xpose.msra.mxu0 0
      %743 = vmatprep.subr.bf16.mxu0 0
      %744 = vmatpush1.bf16.xpose.msra.mxu0 0
      %745 = vmatprep.subr.bf16.mxu0 0
      %746 = vmatpush1.bf16.xpose.msra.mxu0 0
      %747 = vmatprep.subr.bf16.mxu0 0
      %748 = vmatpush1.bf16.xpose.msra.mxu0 0
      %749 = vmatprep.mubr.bf16.mxu0 0
      %750 = vmatmul.mubr.bf16.gmra.mrb[0].mxu0 %v712
      %v751 = vpop.f32.mrb[0].mxu0
      %v752 = vadd.f32 %v709, %v751
      %v753 = vpop.f32.mrb[0].mxu0
      %v754 = vpop.f32.mrb[0].mxu0
      %v755 = vpop.f32.mrb[0].mxu0
      %756 = vdwg.mxu0
      %v757 = vmul.f32 %v752, 0.35355338
      %v758 = vsel %vm596, -1e+30, %v757
      %v759 = vsel %vm666, %v758, -inf
      %760 = vmax.xlane.f32.xlu0 %v759
      %v761 = vpop.xlane.xlu0 %760
      %v762 = vsub.f32 %v758, %v761
      %v763 = vmul.f32 %v762, 1.442695
      %v764 = vpow.pop %v763
      %v765 = vsel %vm666, %v764, 0.0
      %766 = vadd.xlane.f32.xlu0 %v765
      %v767 = vpop.xlane.xlu0 %766
      %v768 = vrcp.pop %v767
      %v769 = vmul.f32 %v764, %v768
      %v770 = vpack.c.bf16 %v769, %v769
      %771 = vrot.lane.b32.xlu0 %v613, 112
      %v772 = vpop.permute.xlu0 %771
      %v775 = vsel %vm666, %v770, 0
      %777 = vmatprep.subr.bf16.mxu0 0
      %778 = vmatpush1.bf16.msra.mxu0 %v772
      %779 = vmatprep.subr.bf16.mxu0 0
      %780 = vmatpush1.bf16.msra.mxu0 0
      %781 = vmatprep.subr.bf16.mxu0 0
      %782 = vmatpush1.bf16.msra.mxu0 0
      %783 = vmatprep.subr.bf16.mxu0 0
      %784 = vmatpush1.bf16.msra.mxu0 0
      %785 = vmatprep.subr.bf16.mxu0 0
      %786 = vmatpush1.bf16.msra.mxu0 0
      %787 = vmatprep.subr.bf16.mxu0 0
      %788 = vmatpush1.bf16.msra.mxu0 0
      %789 = vmatprep.subr.bf16.mxu0 0
      %790 = vmatpush1.bf16.msra.mxu0 0
      %791 = vmatprep.subr.bf16.mxu0 0
      %792 = vmatpush1.bf16.msra.mxu0 0
      %793 = vmatprep.subr.bf16.mxu0 0
      %794 = vmatpush1.bf16.msra.mxu0 0
      %795 = vmatprep.subr.bf16.mxu0 0
      %796 = vmatpush1.bf16.msra.mxu0 0
      %797 = vmatprep.subr.bf16.mxu0 0
      %798 = vmatpush1.bf16.msra.mxu0 0
      %799 = vmatprep.subr.bf16.mxu0 0
      %800 = vmatpush1.bf16.msra.mxu0 0
      %801 = vmatprep.subr.bf16.mxu0 0
      %802 = vmatpush1.bf16.msra.mxu0 0
      %803 = vmatprep.subr.bf16.mxu0 0
      %804 = vmatpush1.bf16.msra.mxu0 0
      %805 = vmatprep.subr.bf16.mxu0 0
      %806 = vmatpush1.bf16.msra.mxu0 0
      %807 = vmatprep.subr.bf16.mxu0 0
      %808 = vmatpush1.bf16.msra.mxu0 0
      %809 = vmatprep.mubr.bf16.mxu0 0
      %810 = vmatmul.mubr.bf16.gmra.mrb[0].mxu0 %v775
      %v811 = vpop.f32.mrb[0].mxu0
      %v812 = vadd.f32 0.0, %v811
      %v813 = vpop.f32.mrb[0].mxu0
      %v814 = vpop.f32.mrb[0].mxu0
      %v815 = vpop.f32.mrb[0].mxu0
      %816 = vdwg.mxu0
      %v817 = vlaneseq
      %v818 = vshrl.u32 %v817, 7
      %v819 = vsub.s32 1, %v818
      %v820 = vrot.slane %v597, %v819
      %822 = vrot.lane.b32.xlu0 %v820, 24
      %v823 = vpop.permute.xlu0 %822
      %v825 = vadd.f32 %v585, %v823
      %v826 = vpack.c.bf16 %v825, %v825
      %v827 = vlaneseq
      %v828 = vshrl.u32 %v827, 7
      %v829 = vsub.s32 1, %v828
      %v830 = vrot.slane %v598, %v829
      %832 = vrot.lane.b32.xlu0 %v830, 24
      %v833 = vpop.permute.xlu0 %832
      %v835 = vadd.f32 %v585, %v833
      %v836 = vpack.c.bf16 %v835, %v835
      %838 = vrot.lane.b32.xlu0 %v836, 104
      %v839 = vpop.permute.xlu0 %838
      %840 = vrot.lane.b32.xlu0 %v618, 120
      %v841 = vpop.permute.xlu0 %840
      %v843 = vsel %vm619, %v839, 0
      %v846 = vsel %vm619, %v841, 0
      %848 = vmatprep.subr.bf16.mxu0 0
      %849 = vmatpush1.bf16.xpose.msra.mxu0 %v846
      %850 = vmatprep.subr.bf16.mxu0 0
      %851 = vmatpush1.bf16.xpose.msra.mxu0 0
      %852 = vmatprep.subr.bf16.mxu0 0
      %853 = vmatpush1.bf16.xpose.msra.mxu0 0
      %854 = vmatprep.subr.bf16.mxu0 0
      %855 = vmatpush1.bf16.xpose.msra.mxu0 0
      %856 = vmatprep.subr.bf16.mxu0 0
      %857 = vmatpush1.bf16.xpose.msra.mxu0 0
      %858 = vmatprep.subr.bf16.mxu0 0
      %859 = vmatpush1.bf16.xpose.msra.mxu0 0
      %860 = vmatprep.subr.bf16.mxu0 0
      %861 = vmatpush1.bf16.xpose.msra.mxu0 0
      %862 = vmatprep.subr.bf16.mxu0 0
      %863 = vmatpush1.bf16.xpose.msra.mxu0 0
      %864 = vmatprep.subr.bf16.mxu0 0
      %865 = vmatpush1.bf16.xpose.msra.mxu0 0
      %866 = vmatprep.subr.bf16.mxu0 0
      %867 = vmatpush1.bf16.xpose.msra.mxu0 0
      %868 = vmatprep.subr.bf16.mxu0 0
      %869 = vmatpush1.bf16.xpose.msra.mxu0 0
      %870 = vmatprep.subr.bf16.mxu0 0
      %871 = vmatpush1.bf16.xpose.msra.mxu0 0
      %872 = vmatprep.subr.bf16.mxu0 0
      %873 = vmatpush1.bf16.xpose.msra.mxu0 0
      %874 = vmatprep.subr.bf16.mxu0 0
      %875 = vmatpush1.bf16.xpose.msra.mxu0 0
      %876 = vmatprep.subr.bf16.mxu0 0
      %877 = vmatpush1.bf16.xpose.msra.mxu0 0
      %878 = vmatprep.subr.bf16.mxu0 0
      %879 = vmatpush1.bf16.xpose.msra.mxu0 0
      %880 = vmatprep.mubr.bf16.mxu0 0
      %881 = vmatmul.mubr.bf16.gmra.mrb[0].mxu0 %v843
      %v882 = vpop.f32.mrb[0].mxu0
      %v883 = vadd.f32 0.0, %v882
      %v884 = vpop.f32.mrb[0].mxu0
      %v885 = vpop.f32.mrb[0].mxu0
      %v886 = vpop.f32.mrb[0].mxu0
      %887 = vdwg.mxu0
      %v888 = vsel %vm666, %v883, 0.0
      %890 = vrot.lane.b32.xlu0 %v888, 1
      %v891 = vpop.permute.xlu0 %890
      %893 = vrot.lane.b32.xlu0 %v888, 2
      %v894 = vpop.permute.xlu0 %893
      %896 = vrot.lane.b32.xlu0 %v888, 3
      %v897 = vpop.permute.xlu0 %896
      %899 = vrot.lane.b32.xlu0 %v888, 4
      %v900 = vpop.permute.xlu0 %899
      %902 = vrot.lane.b32.xlu0 %v888, 5
      %v903 = vpop.permute.xlu0 %902
      %905 = vrot.lane.b32.xlu0 %v888, 6
      %v906 = vpop.permute.xlu0 %905
      %908 = vrot.lane.b32.xlu0 %v888, 7
      %v909 = vpop.permute.xlu0 %908
      %v911 = vsel %vm690, %v888, %v891
      %v912 = vsel %vm692, %v911, %v894
      %v913 = vsel %vm694, %v912, %v897
      %v914 = vsel %vm696, %v913, %v900
      %v915 = vsel %vm698, %v914, %v903
      %v916 = vsel %vm700, %v915, %v906
      %v917 = vsel %vm702, %v916, %v909
      %919 = vrot.lane.b32.xlu0 %v826, 104
      %v920 = vpop.permute.xlu0 %919
      %921 = vrot.lane.b32.xlu0 %v613, 96
      %v922 = vpop.permute.xlu0 %921
      %924 = vrot.lane.b32.xlu0 %v917, 121
      %v925 = vpop.permute.xlu0 %924
      %v928 = vsel %vm619, %v920, 0
      %v931 = vsel %vm619, %v922, 0
      %933 = vmatprep.subr.bf16.mxu0 0
      %934 = vmatpush1.bf16.xpose.msra.mxu0 %v931
      %935 = vmatprep.subr.bf16.mxu0 0
      %936 = vmatpush1.bf16.xpose.msra.mxu0 0
      %937 = vmatprep.subr.bf16.mxu0 0
      %938 = vmatpush1.bf16.xpose.msra.mxu0 0
      %939 = vmatprep.subr.bf16.mxu0 0
      %940 = vmatpush1.bf16.xpose.msra.mxu0 0
      %941 = vmatprep.subr.bf16.mxu0 0
      %942 = vmatpush1.bf16.xpose.msra.mxu0 0
      %943 = vmatprep.subr.bf16.mxu0 0
      %944 = vmatpush1.bf16.xpose.msra.mxu0 0
      %945 = vmatprep.subr.bf16.mxu0 0
      %946 = vmatpush1.bf16.xpose.msra.mxu0 0
      %947 = vmatprep.subr.bf16.mxu0 0
      %948 = vmatpush1.bf16.xpose.msra.mxu0 0
      %949 = vmatprep.subr.bf16.mxu0 0
      %950 = vmatpush1.bf16.xpose.msra.mxu0 0
      %951 = vmatprep.subr.bf16.mxu0 0
      %952 = vmatpush1.bf16.xpose.msra.mxu0 0
      %953 = vmatprep.subr.bf16.mxu0 0
      %954 = vmatpush1.bf16.xpose.msra.mxu0 0
      %955 = vmatprep.subr.bf16.mxu0 0
      %956 = vmatpush1.bf16.xpose.msra.mxu0 0
      %957 = vmatprep.subr.bf16.mxu0 0
      %958 = vmatpush1.bf16.xpose.msra.mxu0 0
      %959 = vmatprep.subr.bf16.mxu0 0
      %960 = vmatpush1.bf16.xpose.msra.mxu0 0
      %961 = vmatprep.subr.bf16.mxu0 0
      %962 = vmatpush1.bf16.xpose.msra.mxu0 0
      %963 = vmatprep.subr.bf16.mxu0 0
      %964 = vmatpush1.bf16.xpose.msra.mxu0 0
      %965 = vmatprep.mubr.bf16.mxu0 0
      %966 = vmatmul.mubr.bf16.gmra.mrb[0].mxu0 %v928
      %v967 = vpop.f32.mrb[0].mxu0
      %v968 = vadd.f32 %v925, %v967
      %v969 = vpop.f32.mrb[0].mxu0
      %v970 = vpop.f32.mrb[0].mxu0
      %v971 = vpop.f32.mrb[0].mxu0
      %972 = vdwg.mxu0
      %v973 = vmul.f32 %v968, 0.35355338
      %v974 = vsel %vm596, -1e+30, %v973
      %v975 = vsel %vm666, %v974, -inf
      %976 = vmax.xlane.f32.xlu0 %v975
      %v977 = vpop.xlane.xlu0 %976
      %v978 = vsub.f32 %v974, %v977
      %v979 = vmul.f32 %v978, 1.442695
      %v980 = vpow.pop %v979
      %v981 = vsel %vm666, %v980, 0.0
      %982 = vadd.xlane.f32.xlu0 %v981
      %v983 = vpop.xlane.xlu0 %982
      %v984 = vrcp.pop %v983
      %v985 = vmul.f32 %v980, %v984
      %v986 = vpack.c.bf16 %v985, %v985
      %987 = vrot.lane.b32.xlu0 %v613, 88
      %v988 = vpop.permute.xlu0 %987
      %v991 = vsel %vm666, %v986, 0
      %993 = vmatprep.subr.bf16.mxu0 0
      %994 = vmatpush1.bf16.msra.mxu0 %v988
      %995 = vmatprep.subr.bf16.mxu0 0
      %996 = vmatpush1.bf16.msra.mxu0 0
      %997 = vmatprep.subr.bf16.mxu0 0
      %998 = vmatpush1.bf16.msra.mxu0 0
      %999 = vmatprep.subr.bf16.mxu0 0
      %1000 = vmatpush1.bf16.msra.mxu0 0
      %1001 = vmatprep.subr.bf16.mxu0 0
      %1002 = vmatpush1.bf16.msra.mxu0 0
      %1003 = vmatprep.subr.bf16.mxu0 0
      %1004 = vmatpush1.bf16.msra.mxu0 0
      %1005 = vmatprep.subr.bf16.mxu0 0
      %1006 = vmatpush1.bf16.msra.mxu0 0
      %1007 = vmatprep.subr.bf16.mxu0 0
      %1008 = vmatpush1.bf16.msra.mxu0 0
      %1009 = vmatprep.subr.bf16.mxu0 0
      %1010 = vmatpush1.bf16.msra.mxu0 0
      %1011 = vmatprep.subr.bf16.mxu0 0
      %1012 = vmatpush1.bf16.msra.mxu0 0
      %1013 = vmatprep.subr.bf16.mxu0 0
      %1014 = vmatpush1.bf16.msra.mxu0 0
      %1015 = vmatprep.subr.bf16.mxu0 0
      %1016 = vmatpush1.bf16.msra.mxu0 0
      %1017 = vmatprep.subr.bf16.mxu0 0
      %1018 = vmatpush1.bf16.msra.mxu0 0
      %1019 = vmatprep.subr.bf16.mxu0 0
      %1020 = vmatpush1.bf16.msra.mxu0 0
      %1021 = vmatprep.subr.bf16.mxu0 0
      %1022 = vmatpush1.bf16.msra.mxu0 0
      %1023 = vmatprep.subr.bf16.mxu0 0
      %1024 = vmatpush1.bf16.msra.mxu0 0
      %1025 = vmatprep.mubr.bf16.mxu0 0
      %1026 = vmatmul.mubr.bf16.gmra.mrb[0].mxu0 %v991
      %v1027 = vpop.f32.mrb[0].mxu0
      %v1028 = vadd.f32 0.0, %v1027
      %v1029 = vpop.f32.mrb[0].mxu0
      %v1030 = vpop.f32.mrb[0].mxu0
      %v1031 = vpop.f32.mrb[0].mxu0
      %1032 = vdwg.mxu0
      %v1033 = vlaneseq
      %v1034 = vshrl.u32 %v1033, 7
      %v1035 = vsub.s32 2, %v1034
      %v1036 = vrot.slane %v597, %v1035
      %1038 = vrot.lane.b32.xlu0 %v1036, 48
      %v1039 = vpop.permute.xlu0 %1038
      %v1041 = vadd.f32 %v585, %v1039
      %v1042 = vpack.c.bf16 %v1041, %v1041
      %v1043 = vlaneseq
      %v1044 = vshrl.u32 %v1043, 7
      %v1045 = vsub.s32 2, %v1044
      %v1046 = vrot.slane %v598, %v1045
      %1048 = vrot.lane.b32.xlu0 %v1046, 48
      %v1049 = vpop.permute.xlu0 %1048
      %v1051 = vadd.f32 %v585, %v1049
      %v1052 = vpack.c.bf16 %v1051, %v1051
      %1054 = vrot.lane.b32.xlu0 %v1052, 80
      %v1055 = vpop.permute.xlu0 %1054
      %1056 = vrot.lane.b32.xlu0 %v618, 112
      %v1057 = vpop.permute.xlu0 %1056
      %v1059 = vsel %vm619, %v1055, 0
      %v1062 = vsel %vm619, %v1057, 0
      %1064 = vmatprep.subr.bf16.mxu0 0
      %1065 = vmatpush1.bf16.xpose.msra.mxu0 %v1062
      %1066 = vmatprep.subr.bf16.mxu0 0
      %1067 = vmatpush1.bf16.xpose.msra.mxu0 0
      %1068 = vmatprep.subr.bf16.mxu0 0
      %1069 = vmatpush1.bf16.xpose.msra.mxu0 0
      %1070 = vmatprep.subr.bf16.mxu0 0
      %1071 = vmatpush1.bf16.xpose.msra.mxu0 0
      %1072 = vmatprep.subr.bf16.mxu0 0
      %1073 = vmatpush1.bf16.xpose.msra.mxu0 0
      %1074 = vmatprep.subr.bf16.mxu0 0
      %1075 = vmatpush1.bf16.xpose.msra.mxu0 0
      %1076 = vmatprep.subr.bf16.mxu0 0
      %1077 = vmatpush1.bf16.xpose.msra.mxu0 0
      %1078 = vmatprep.subr.bf16.mxu0 0
      %1079 = vmatpush1.bf16.xpose.msra.mxu0 0
      %1080 = vmatprep.subr.bf16.mxu0 0
      %1081 = vmatpush1.bf16.xpose.msra.mxu0 0
      %1082 = vmatprep.subr.bf16.mxu0 0
      %1083 = vmatpush1.bf16.xpose.msra.mxu0 0
      %1084 = vmatprep.subr.bf16.mxu0 0
      %1085 = vmatpush1.bf16.xpose.msra.mxu0 0
      %1086 = vmatprep.subr.bf16.mxu0 0
      %1087 = vmatpush1.bf16.xpose.msra.mxu0 0
      %1088 = vmatprep.subr.bf16.mxu0 0
      %1089 = vmatpush1.bf16.xpose.msra.mxu0 0
      %1090 = vmatprep.subr.bf16.mxu0 0
      %1091 = vmatpush1.bf16.xpose.msra.mxu0 0
      %1092 = vmatprep.subr.bf16.mxu0 0
      %1093 = vmatpush1.bf16.xpose.msra.mxu0 0
      %1094 = vmatprep.subr.bf16.mxu0 0
      %1095 = vmatpush1.bf16.xpose.msra.mxu0 0
      %1096 = vmatprep.mubr.bf16.mxu0 0
      %1097 = vmatmul.mubr.bf16.gmra.mrb[0].mxu0 %v1059
      %v1098 = vpop.f32.mrb[0].mxu0
      %v1099 = vadd.f32 0.0, %v1098
      %v1100 = vpop.f32.mrb[0].mxu0
      %v1101 = vpop.f32.mrb[0].mxu0
      %v1102 = vpop.f32.mrb[0].mxu0
      %1103 = vdwg.mxu0
      %v1104 = vsel %vm666, %v1099, 0.0
      %1106 = vrot.lane.b32.xlu0 %v1104, 1
      %v1107 = vpop.permute.xlu0 %1106
      %1109 = vrot.lane.b32.xlu0 %v1104, 2
      %v1110 = vpop.permute.xlu0 %1109
      %1112 = vrot.lane.b32.xlu0 %v1104, 3
      %v1113 = vpop.permute.xlu0 %1112
      %1115 = vrot.lane.b32.xlu0 %v1104, 4
      %v1116 = vpop.permute.xlu0 %1115
      %1118 = vrot.lane.b32.xlu0 %v1104, 5
      %v1119 = vpop.permute.xlu0 %1118
      %1121 = vrot.lane.b32.xlu0 %v1104, 6
      %v1122 = vpop.permute.xlu0 %1121
      %1124 = vrot.lane.b32.xlu0 %v1104, 7
      %v1125 = vpop.permute.xlu0 %1124
      %v1127 = vsel %vm690, %v1104, %v1107
      %v1128 = vsel %vm692, %v1127, %v1110
      %v1129 = vsel %vm694, %v1128, %v1113
      %v1130 = vsel %vm696, %v1129, %v1116
      %v1131 = vsel %vm698, %v1130, %v1119
      %v1132 = vsel %vm700, %v1131, %v1122
      %v1133 = vsel %vm702, %v1132, %v1125
      %1135 = vrot.lane.b32.xlu0 %v1042, 80
      %v1136 = vpop.permute.xlu0 %1135
      %1137 = vrot.lane.b32.xlu0 %v613, 72
      %v1138 = vpop.permute.xlu0 %1137
      %1140 = vrot.lane.b32.xlu0 %v1133, 121
      %v1141 = vpop.permute.xlu0 %1140
      %v1144 = vsel %vm619, %v1136, 0
      %v1147 = vsel %vm619, %v1138, 0
      %1149 = vmatprep.subr.bf16.mxu0 0
      %1150 = vmatpush1.bf16.xpose.msra.mxu0 %v1147
      %1151 = vmatprep.subr.bf16.mxu0 0
      %1152 = vmatpush1.bf16.xpose.msra.mxu0 0
      %1153 = vmatprep.subr.bf16.mxu0 0
      %1154 = vmatpush1.bf16.xpose.msra.mxu0 0
      %1155 = vmatprep.subr.bf16.mxu0 0
      %1156 = vmatpush1.bf16.xpose.msra.mxu0 0
      %1157 = vmatprep.subr.bf16.mxu0 0
      %1158 = vmatpush1.bf16.xpose.msra.mxu0 0
      %1159 = vmatprep.subr.bf16.mxu0 0
      %1160 = vmatpush1.bf16.xpose.msra.mxu0 0
      %1161 = vmatprep.subr.bf16.mxu0 0
      %1162 = vmatpush1.bf16.xpose.msra.mxu0 0
      %1163 = vmatprep.subr.bf16.mxu0 0
      %1164 = vmatpush1.bf16.xpose.msra.mxu0 0
      %1165 = vmatprep.subr.bf16.mxu0 0
      %1166 = vmatpush1.bf16.xpose.msra.mxu0 0
      %1167 = vmatprep.subr.bf16.mxu0 0
      %1168 = vmatpush1.bf16.xpose.msra.mxu0 0
      %1169 = vmatprep.subr.bf16.mxu0 0
      %1170 = vmatpush1.bf16.xpose.msra.mxu0 0
      %1171 = vmatprep.subr.bf16.mxu0 0
      %1172 = vmatpush1.bf16.xpose.msra.mxu0 0
      %1173 = vmatprep.subr.bf16.mxu0 0
      %1174 = vmatpush1.bf16.xpose.msra.mxu0 0
      %1175 = vmatprep.subr.bf16.mxu0 0
      %1176 = vmatpush1.bf16.xpose.msra.mxu0 0
      %1177 = vmatprep.subr.bf16.mxu0 0
      %1178 = vmatpush1.bf16.xpose.msra.mxu0 0
      %1179 = vmatprep.subr.bf16.mxu0 0
      %1180 = vmatpush1.bf16.xpose.msra.mxu0 0
      %1181 = vmatprep.mubr.bf16.mxu0 0
      %1182 = vmatmul.mubr.bf16.gmra.mrb[0].mxu0 %v1144
      %v1183 = vpop.f32.mrb[0].mxu0
      %v1184 = vadd.f32 %v1141, %v1183
      %v1185 = vpop.f32.mrb[0].mxu0
      %v1186 = vpop.f32.mrb[0].mxu0
      %v1187 = vpop.f32.mrb[0].mxu0
      %1188 = vdwg.mxu0
      %v1189 = vmul.f32 %v1184, 0.35355338
      %v1190 = vsel %vm596, -1e+30, %v1189
      %v1191 = vsel %vm666, %v1190, -inf
      %1192 = vmax.xlane.f32.xlu0 %v1191
      %v1193 = vpop.xlane.xlu0 %1192
      %v1194 = vsub.f32 %v1190, %v1193
      %v1195 = vmul.f32 %v1194, 1.442695
      %v1196 = vpow.pop %v1195
      %v1197 = vsel %vm666, %v1196, 0.0
      %1198 = vadd.xlane.f32.xlu0 %v1197
      %v1199 = vpop.xlane.xlu0 %1198
      %v1200 = vrcp.pop %v1199
      %v1201 = vmul.f32 %v1196, %v1200
      %v1202 = vpack.c.bf16 %v1201, %v1201
      %1203 = vrot.lane.b32.xlu0 %v613, 64
      %v1204 = vpop.permute.xlu0 %1203
      %v1207 = vsel %vm666, %v1202, 0
      %1209 = vmatprep.subr.bf16.mxu0 0
      %1210 = vmatpush1.bf16.msra.mxu0 %v1204
      %1211 = vmatprep.subr.bf16.mxu0 0
      %1212 = vmatpush1.bf16.msra.mxu0 0
      %1213 = vmatprep.subr.bf16.mxu0 0
      %1214 = vmatpush1.bf16.msra.mxu0 0
      %1215 = vmatprep.subr.bf16.mxu0 0
      %1216 = vmatpush1.bf16.msra.mxu0 0
      %1217 = vmatprep.subr.bf16.mxu0 0
      %1218 = vmatpush1.bf16.msra.mxu0 0
      %1219 = vmatprep.subr.bf16.mxu0 0
      %1220 = vmatpush1.bf16.msra.mxu0 0
      %1221 = vmatprep.subr.bf16.mxu0 0
      %1222 = vmatpush1.bf16.msra.mxu0 0
      %1223 = vmatprep.subr.bf16.mxu0 0
      %1224 = vmatpush1.bf16.msra.mxu0 0
      %1225 = vmatprep.subr.bf16.mxu0 0
      %1226 = vmatpush1.bf16.msra.mxu0 0
      %1227 = vmatprep.subr.bf16.mxu0 0
      %1228 = vmatpush1.bf16.msra.mxu0 0
      %1229 = vmatprep.subr.bf16.mxu0 0
      %1230 = vmatpush1.bf16.msra.mxu0 0
      %1231 = vmatprep.subr.bf16.mxu0 0
      %1232 = vmatpush1.bf16.msra.mxu0 0
      %1233 = vmatprep.subr.bf16.mxu0 0
      %1234 = vmatpush1.bf16.msra.mxu0 0
      %1235 = vmatprep.subr.bf16.mxu0 0
      %1236 = vmatpush1.bf16.msra.mxu0 0
      %1237 = vmatprep.subr.bf16.mxu0 0
      %1238 = vmatpush1.bf16.msra.mxu0 0
      %1239 = vmatprep.subr.bf16.mxu0 0
      %1240 = vmatpush1.bf16.msra.mxu0 0
      %1241 = vmatprep.mubr.bf16.mxu0 0
      %1242 = vmatmul.mubr.bf16.gmra.mrb[0].mxu0 %v1207
      %v1243 = vpop.f32.mrb[0].mxu0
      %v1244 = vadd.f32 0.0, %v1243
      %v1245 = vpop.f32.mrb[0].mxu0
      %v1246 = vpop.f32.mrb[0].mxu0
      %v1247 = vpop.f32.mrb[0].mxu0
      %1248 = vdwg.mxu0
      %v1249 = vlaneseq
      %v1250 = vshrl.u32 %v1249, 7
      %v1251 = vsub.s32 3, %v1250
      %v1252 = vrot.slane %v597, %v1251
      %1254 = vrot.lane.b32.xlu0 %v1252, 72
      %v1255 = vpop.permute.xlu0 %1254
      %v1257 = vadd.f32 %v585, %v1255
      %v1258 = vpack.c.bf16 %v1257, %v1257
      %v1259 = vlaneseq
      %v1260 = vshrl.u32 %v1259, 7
      %v1261 = vsub.s32 3, %v1260
      %v1262 = vrot.slane %v598, %v1261
      %1264 = vrot.lane.b32.xlu0 %v1262, 72
      %v1265 = vpop.permute.xlu0 %1264
      %v1267 = vadd.f32 %v585, %v1265
      %v1268 = vpack.c.bf16 %v1267, %v1267
      %1270 = vrot.lane.b32.xlu0 %v1268, 56
      %v1271 = vpop.permute.xlu0 %1270
      %1272 = vrot.lane.b32.xlu0 %v618, 104
      %v1273 = vpop.permute.xlu0 %1272
      %v1275 = vsel %vm619, %v1271, 0
      %v1278 = vsel %vm619, %v1273, 0
      %1280 = vmatprep.subr.bf16.mxu0 0
      %1281 = vmatpush1.bf16.xpose.msra.mxu0 %v1278
      %1282 = vmatprep.subr.bf16.mxu0 0
      %1283 = vmatpush1.bf16.xpose.msra.mxu0 0
      %1284 = vmatprep.subr.bf16.mxu0 0
      %1285 = vmatpush1.bf16.xpose.msra.mxu0 0
      %1286 = vmatprep.subr.bf16.mxu0 0
      %1287 = vmatpush1.bf16.xpose.msra.mxu0 0
      %1288 = vmatprep.subr.bf16.mxu0 0
      %1289 = vmatpush1.bf16.xpose.msra.mxu0 0
      %1290 = vmatprep.subr.bf16.mxu0 0
      %1291 = vmatpush1.bf16.xpose.msra.mxu0 0
      %1292 = vmatprep.subr.bf16.mxu0 0
      %1293 = vmatpush1.bf16.xpose.msra.mxu0 0
      %1294 = vmatprep.subr.bf16.mxu0 0
      %1295 = vmatpush1.bf16.xpose.msra.mxu0 0
      %1296 = vmatprep.subr.bf16.mxu0 0
      %1297 = vmatpush1.bf16.xpose.msra.mxu0 0
      %1298 = vmatprep.subr.bf16.mxu0 0
      %1299 = vmatpush1.bf16.xpose.msra.mxu0 0
      %1300 = vmatprep.subr.bf16.mxu0 0
      %1301 = vmatpush1.bf16.xpose.msra.mxu0 0
      %1302 = vmatprep.subr.bf16.mxu0 0
      %1303 = vmatpush1.bf16.xpose.msra.mxu0 0
      %1304 = vmatprep.subr.bf16.mxu0 0
      %1305 = vmatpush1.bf16.xpose.msra.mxu0 0
      %1306 = vmatprep.subr.bf16.mxu0 0
      %1307 = vmatpush1.bf16.xpose.msra.mxu0 0
      %1308 = vmatprep.subr.bf16.mxu0 0
      %1309 = vmatpush1.bf16.xpose.msra.mxu0 0
      %1310 = vmatprep.subr.bf16.mxu0 0
      %1311 = vmatpush1.bf16.xpose.msra.mxu0 0
      %1312 = vmatprep.mubr.bf16.mxu0 0
      %1313 = vmatmul.mubr.bf16.gmra.mrb[0].mxu0 %v1275
      %v1314 = vpop.f32.mrb[0].mxu0
      %v1315 = vadd.f32 0.0, %v1314
      %v1316 = vpop.f32.mrb[0].mxu0
      %v1317 = vpop.f32.mrb[0].mxu0
      %v1318 = vpop.f32.mrb[0].mxu0
      %1319 = vdwg.mxu0
      %v1320 = vsel %vm666, %v1315, 0.0
      %1322 = vrot.lane.b32.xlu0 %v1320, 1
      %v1323 = vpop.permute.xlu0 %1322
      %1325 = vrot.lane.b32.xlu0 %v1320, 2
      %v1326 = vpop.permute.xlu0 %1325
      %1328 = vrot.lane.b32.xlu0 %v1320, 3
      %v1329 = vpop.permute.xlu0 %1328
      %1331 = vrot.lane.b32.xlu0 %v1320, 4
      %v1332 = vpop.permute.xlu0 %1331
      %1334 = vrot.lane.b32.xlu0 %v1320, 5
      %v1335 = vpop.permute.xlu0 %1334
      %1337 = vrot.lane.b32.xlu0 %v1320, 6
      %v1338 = vpop.permute.xlu0 %1337
      %1340 = vrot.lane.b32.xlu0 %v1320, 7
      %v1341 = vpop.permute.xlu0 %1340
      %v1343 = vsel %vm690, %v1320, %v1323
      %v1344 = vsel %vm692, %v1343, %v1326
      %v1345 = vsel %vm694, %v1344, %v1329
      %v1346 = vsel %vm696, %v1345, %v1332
      %v1347 = vsel %vm698, %v1346, %v1335
      %v1348 = vsel %vm700, %v1347, %v1338
      %v1349 = vsel %vm702, %v1348, %v1341
      %1351 = vrot.lane.b32.xlu0 %v1258, 56
      %v1352 = vpop.permute.xlu0 %1351
      %1353 = vrot.lane.b32.xlu0 %v613, 48
      %v1354 = vpop.permute.xlu0 %1353
      %1356 = vrot.lane.b32.xlu0 %v1349, 121
      %v1357 = vpop.permute.xlu0 %1356
      %v1360 = vsel %vm619, %v1352, 0
      %v1363 = vsel %vm619, %v1354, 0
      %1365 = vmatprep.subr.bf16.mxu0 0
      %1366 = vmatpush1.bf16.xpose.msra.mxu0 %v1363
      %1367 = vmatprep.subr.bf16.mxu0 0
      %1368 = vmatpush1.bf16.xpose.msra.mxu0 0
      %1369 = vmatprep.subr.bf16.mxu0 0
      %1370 = vmatpush1.bf16.xpose.msra.mxu0 0
      %1371 = vmatprep.subr.bf16.mxu0 0
      %1372 = vmatpush1.bf16.xpose.msra.mxu0 0
      %1373 = vmatprep.subr.bf16.mxu0 0
      %1374 = vmatpush1.bf16.xpose.msra.mxu0 0
      %1375 = vmatprep.subr.bf16.mxu0 0
      %1376 = vmatpush1.bf16.xpose.msra.mxu0 0
      %1377 = vmatprep.subr.bf16.mxu0 0
      %1378 = vmatpush1.bf16.xpose.msra.mxu0 0
      %1379 = vmatprep.subr.bf16.mxu0 0
      %1380 = vmatpush1.bf16.xpose.msra.mxu0 0
      %1381 = vmatprep.subr.bf16.mxu0 0
      %1382 = vmatpush1.bf16.xpose.msra.mxu0 0
      %1383 = vmatprep.subr.bf16.mxu0 0
      %1384 = vmatpush1.bf16.xpose.msra.mxu0 0
      %1385 = vmatprep.subr.bf16.mxu0 0
      %1386 = vmatpush1.bf16.xpose.msra.mxu0 0
      %1387 = vmatprep.subr.bf16.mxu0 0
      %1388 = vmatpush1.bf16.xpose.msra.mxu0 0
      %1389 = vmatprep.subr.bf16.mxu0 0
      %1390 = vmatpush1.bf16.xpose.msra.mxu0 0
      %1391 = vmatprep.subr.bf16.mxu0 0
      %1392 = vmatpush1.bf16.xpose.msra.mxu0 0
      %1393 = vmatprep.subr.bf16.mxu0 0
      %1394 = vmatpush1.bf16.xpose.msra.mxu0 0
      %1395 = vmatprep.subr.bf16.mxu0 0
      %1396 = vmatpush1.bf16.xpose.msra.mxu0 0
      %1397 = vmatprep.mubr.bf16.mxu0 0
      %1398 = vmatmul.mubr.bf16.gmra.mrb[0].mxu0 %v1360
      %v1399 = vpop.f32.mrb[0].mxu0
      %v1400 = vadd.f32 %v1357, %v1399
      %v1401 = vpop.f32.mrb[0].mxu0
      %v1402 = vpop.f32.mrb[0].mxu0
      %v1403 = vpop.f32.mrb[0].mxu0
      %1404 = vdwg.mxu0
      %v1405 = vmul.f32 %v1400, 0.35355338
      %v1406 = vsel %vm596, -1e+30, %v1405
      %v1407 = vsel %vm666, %v1406, -inf
      %1408 = vmax.xlane.f32.xlu0 %v1407
      %v1409 = vpop.xlane.xlu0 %1408
      %v1410 = vsub.f32 %v1406, %v1409
      %v1411 = vmul.f32 %v1410, 1.442695
      %v1412 = vpow.pop %v1411
      %v1413 = vsel %vm666, %v1412, 0.0
      %1414 = vadd.xlane.f32.xlu0 %v1413
      %v1415 = vpop.xlane.xlu0 %1414
      %v1416 = vrcp.pop %v1415
      %v1417 = vmul.f32 %v1412, %v1416
      %v1418 = vpack.c.bf16 %v1417, %v1417
      %1419 = vrot.lane.b32.xlu0 %v613, 40
      %v1420 = vpop.permute.xlu0 %1419
      %v1423 = vsel %vm666, %v1418, 0
      %1425 = vmatprep.subr.bf16.mxu0 0
      %1426 = vmatpush1.bf16.msra.mxu0 %v1420
      %1427 = vmatprep.subr.bf16.mxu0 0
      %1428 = vmatpush1.bf16.msra.mxu0 0
      %1429 = vmatprep.subr.bf16.mxu0 0
      %1430 = vmatpush1.bf16.msra.mxu0 0
      %1431 = vmatprep.subr.bf16.mxu0 0
      %1432 = vmatpush1.bf16.msra.mxu0 0
      %1433 = vmatprep.subr.bf16.mxu0 0
      %1434 = vmatpush1.bf16.msra.mxu0 0
      %1435 = vmatprep.subr.bf16.mxu0 0
      %1436 = vmatpush1.bf16.msra.mxu0 0
      %1437 = vmatprep.subr.bf16.mxu0 0
      %1438 = vmatpush1.bf16.msra.mxu0 0
      %1439 = vmatprep.subr.bf16.mxu0 0
      %1440 = vmatpush1.bf16.msra.mxu0 0
      %1441 = vmatprep.subr.bf16.mxu0 0
      %1442 = vmatpush1.bf16.msra.mxu0 0
      %1443 = vmatprep.subr.bf16.mxu0 0
      %1444 = vmatpush1.bf16.msra.mxu0 0
      %1445 = vmatprep.subr.bf16.mxu0 0
      %1446 = vmatpush1.bf16.msra.mxu0 0
      %1447 = vmatprep.subr.bf16.mxu0 0
      %1448 = vmatpush1.bf16.msra.mxu0 0
      %1449 = vmatprep.subr.bf16.mxu0 0
      %1450 = vmatpush1.bf16.msra.mxu0 0
      %1451 = vmatprep.subr.bf16.mxu0 0
      %1452 = vmatpush1.bf16.msra.mxu0 0
      %1453 = vmatprep.subr.bf16.mxu0 0
      %1454 = vmatpush1.bf16.msra.mxu0 0
      %1455 = vmatprep.subr.bf16.mxu0 0
      %1456 = vmatpush1.bf16.msra.mxu0 0
      %1457 = vmatprep.mubr.bf16.mxu0 0
      %1458 = vmatmul.mubr.bf16.gmra.mrb[0].mxu0 %v1423
      %v1459 = vpop.f32.mrb[0].mxu0
      %v1460 = vadd.f32 0.0, %v1459
      %v1461 = vpop.f32.mrb[0].mxu0
      %v1462 = vpop.f32.mrb[0].mxu0
      %v1463 = vpop.f32.mrb[0].mxu0
      %1464 = vdwg.mxu0
      %1466 = vrot.lane.b32.xlu0 %v1028, 8
      %v1467 = vpop.permute.xlu0 %1466
      %1470 = vrot.lane.b32.xlu0 %v1244, 16
      %v1471 = vpop.permute.xlu0 %1470
      %1474 = vrot.lane.b32.xlu0 %v1460, 24
      %v1475 = vpop.permute.xlu0 %1474
      %v1477 = vsel %vm619, %v812, %v1467
      %v1478 = vsel %vm666, %v1477, %v1471
      %vm1479 = vcmask 195584
      %v1480 = vsel %vm1479, %v1478, %v1475
      %v1481 = vsel %vm479, %v1480, 0.0
      %1482 = vadd.xlane.f32.xlu0 %v1481
      %v1483 = vpop.xlane.xlu0 %1482
      %v1484 = vmul.f32 %v1483, %v486
      %v1485 = vsub.f32 %v1480, %v1484
      %v1486 = vmul.f32 %v1485, %v1485
      %v1487 = vsel %vm479, %v1486, 0.0
      %1488 = vadd.xlane.f32.xlu0 %v1487
      %v1489 = vpop.xlane.xlu0 %1488
      %v1490 = vmul.f32 %v1489, %v486
      %v1491 = vadd.f32 %v1490, 1e-05
      %v1492 = vrsqrt.pop %v1491
      %v1493 = vmul.f32 %v1485, %v1492
      %v1494 = vld [vmem:[%s9] sm:$0x1]
      %v1496 = vlaneseq
      %v1497 = vshrl.u32 %v1496, 7
      %v1498 = vsub.s32 0, %v1497
      %v1499 = vrot.slane %v1494, %v1498
      %v1501 = vmul.f32 %v1493, %v1499
      %v1502 = vld [vmem:[%s10] sm:$0x1]
      %v1504 = vlaneseq
      %v1505 = vshrl.u32 %v1504, 7
      %v1506 = vsub.s32 0, %v1505
      %v1507 = vrot.slane %v1502, %v1506
      %v1509 = vadd.f32 %v1501, %v1507
      %v1510 = vpack.c.bf16 %v1509, %v1509
      %v1511 = vld [vmem:[%s11] sm:$0xf]
      %v1512 = vld [vmem:[%s11 + $0x4] sm:$0xf]
      %v1513 = vld [vmem:[%s11 + $0x8] sm:$0xf]
      %v1514 = vld [vmem:[%s11 + $0xc] sm:$0xf]
      %v1515 = vld [vmem:[%s12] sm:$0x1]
      %v1517 = vlaneseq
      %v1518 = vshrl.u32 %v1517, 7
      %v1519 = vsub.s32 0, %v1518
      %v1520 = vrot.slane %v1515, %v1519
      %v1526 = vunpack.c.l.b16 %v1511
      %v1527 = vunpack.c.l.b16 %v1512
      %v1528 = vunpack.c.l.b16 %v1513
      %v1529 = vunpack.c.l.b16 %v1514
      %v1530 = vpack.c.b16 %v1527, %v1526
      %v1531 = vpack.c.b16 %v1529, %v1528
      %v1535 = vsel %vm479, %v1510, 0
      %1537 = vmatprep.subr.bf16.mxu0 0
      %1538 = vmatpush1.bf16.msra.mxu0 %v1530
      %1539 = vmatprep.subr.bf16.mxu0 0
      %1540 = vmatpush1.bf16.msra.mxu0 %v1531
      %1541 = vmatprep.subr.bf16.mxu0 0
      %1542 = vmatpush1.bf16.msra.mxu0 0
      %1543 = vmatprep.subr.bf16.mxu0 0
      %1544 = vmatpush1.bf16.msra.mxu0 0
      %1545 = vmatprep.subr.bf16.mxu0 0
      %1546 = vmatpush1.bf16.msra.mxu0 0
      %1547 = vmatprep.subr.bf16.mxu0 0
      %1548 = vmatpush1.bf16.msra.mxu0 0
      %1549 = vmatprep.subr.bf16.mxu0 0
      %1550 = vmatpush1.bf16.msra.mxu0 0
      %1551 = vmatprep.subr.bf16.mxu0 0
      %1552 = vmatpush1.bf16.msra.mxu0 0
      %1553 = vmatprep.subr.bf16.mxu0 0
      %1554 = vmatpush1.bf16.msra.mxu0 0
      %1555 = vmatprep.subr.bf16.mxu0 0
      %1556 = vmatpush1.bf16.msra.mxu0 0
      %1557 = vmatprep.subr.bf16.mxu0 0
      %1558 = vmatpush1.bf16.msra.mxu0 0
      %1559 = vmatprep.subr.bf16.mxu0 0
      %1560 = vmatpush1.bf16.msra.mxu0 0
      %1561 = vmatprep.subr.bf16.mxu0 0
      %1562 = vmatpush1.bf16.msra.mxu0 0
      %1563 = vmatprep.subr.bf16.mxu0 0
      %1564 = vmatpush1.bf16.msra.mxu0 0
      %1565 = vmatprep.subr.bf16.mxu0 0
      %1566 = vmatpush1.bf16.msra.mxu0 0
      %1567 = vmatprep.subr.bf16.mxu0 0
      %1568 = vmatpush1.bf16.msra.mxu0 0
      %1569 = vmatprep.mubr.bf16.mxu0 0
      %1570 = vmatmul.mubr.bf16.gmra.mrb[0].mxu0 %v1535
      %v1571 = vpop.f32.mrb[0].mxu0
      %v1572 = vadd.f32 %v1520, %v1571
      %v1573 = vpop.f32.mrb[0].mxu0
      %v1574 = vpop.f32.mrb[0].mxu0
      %v1575 = vpop.f32.mrb[0].mxu0
      %1576 = vdwg.mxu0
      %v1577 = vld [vmem:[%s471] sm:$0xff]
      %v1578 = vadd.f32 %v1572, %v1577
      %1579 = vst.msk [vmem:[%s475] sm:$0xff] %vm479, %v1578
      %p1580 = scmp.lt.s32.totalorder %s24, 1
      %s1581 = scalar_select %p1580, %s24, 1
      %s1582 = smul.addr %s1581, 8
      %s1583 = scalar_lea.vmem %s13, %s1582
      // Predicated region
      $region73: #{deq_transformer_lm_forward.27} parent=71 // pred_check
        %p1584 = pneg %p330
      $region74: #{deq_transformer_lm_forward.27} parent=71 // pred_check_branch
        %1586 = sbr.rel (%p1584) target = $region76
      $region75: #{deq_transformer_lm_forward.27} parent=71 // pred_region
        _
      $region76: #{deq_transformer_lm_forward.27} parent=71 // pred_fallthru
        _
    $region72: #{deq_transformer_lm_forward.27} parent=5 // pred_fallthru
      _
    %p1587 = scmp.le.s32.totalorder 2, %s19
    // Predicated region
    $region77: #{deq_transformer_lm_forward.27} parent=5 // pred_check
      %p1588 = pneg %p1587
    $region78: #{deq_transformer_lm_forward.27} parent=5 // pred_check_branch
      %1590 = sbr.rel (%p1588) target = $region80
    $region79: #{deq_transformer_lm_forward.27} parent=5 // pred_region
      %s1591 = ssub.s32 %s19, 2
      // Predicated region
      $region81: #{deq_transformer_lm_forward.27} parent=79 // pred_check
        %p1592 = pneg %p336
      $region82: #{deq_transformer_lm_forward.27} parent=79 // pred_check_branch
        %1594 = sbr.rel (%p1592) target = $region84
      $region83: #{deq_transformer_lm_forward.27} parent=79 // pred_region
        %p1595 = scmp.lt.s32.totalorder %s25, 1
        %s1596 = scalar_select %p1595, %s25, 1
        %s1597 = smul.addr %s1596, 8
        %s1598 = scalar_lea.vmem %s13, %s1597
      $region84: #{deq_transformer_lm_forward.27} parent=79 // pred_fallthru
        _
    $region80: #{deq_transformer_lm_forward.27} parent=5 // pred_fallthru
      _
  $region6: #{deq_transformer_lm_forward.27} parent=0 // loop_footer
    %s23 = sadd.s32 1, %s19
  $region7: #{deq_transformer_lm_forward.27} parent=0 // loop_footer_branch
    %18 = sbr.rel target = $region3
  $region8: #{deq_transformer_lm_forward.27} parent=0 // loop_exit
    _

// kernel: deq_transformer_lm_forward.47
$region0: #{deq_transformer_lm_forward.47}
  #allocation0 [shape = 'u32[]', space=smem, size = 0x4, offset = 0x4, fixed_abs, tag = 'smem constant byte address 0x4 - core index']
  #allocation1 [shape = 'u32[144,128]{1,0:T(1,128)}', space=vmem, size = 0x12000, scoped, tag = 'internal scratch']
  #allocation2 [shape = 'f32[16,1]{1,0:T(8,128)}', space=vmem, size = 0x2000, scoped, tag = 'scratch operand']
  #allocation3 [shape = 'f32[16,1]{1,0:T(8,128)}', space=vmem, size = 0x2000, scoped, tag = 'scratch operand']
  #allocation4 [shape = 'f32[16,1]{1,0:T(8,128)}', space=vmem, size = 0x2000, scoped, tag = 'scratch operand']
  %s0 = inlined_call_operand.vmem [shape: bf16[16,32], index: 0, kind: input, shape index: {}]
  %s1 = inlined_call_operand.vmem [shape: bf16[50,32], index: 1, kind: input, shape index: {}]
  %s2 = inlined_call_operand.vmem [shape: f32[1,50], index: 2, kind: input, shape index: {}]
  %s3 = inlined_call_operand.vmem [shape: s32[16,1], index: 3, kind: input, shape index: {}]
  %s4 = inlined_call_operand.vmem [shape: f32[16,1], index: 4, kind: output, shape index: {}]
  %s5 = sld [smem:[#allocation0]]
  $region34: #{deq_transformer_lm_forward.47} parent=0
    _
  %s7 = ssub.s32 1, %s5
  %s8 = scalar_select 0, %s7, %s5
  // Predicated region
  $region2: #{deq_transformer_lm_forward.47} parent=0 // pred_check
    _
  $region3: #{deq_transformer_lm_forward.47} parent=0 // pred_check_branch
    %10 = sbr.rel (0) target = $region5
  $region4: #{deq_transformer_lm_forward.47} parent=0 // pred_region
    _
  $region5: #{deq_transformer_lm_forward.47} parent=0 // pred_fallthru
    _
  // Predicated region
  $region6: #{deq_transformer_lm_forward.47} parent=0 // pred_check
    _
  $region7: #{deq_transformer_lm_forward.47} parent=0 // pred_check_branch
    %12 = sbr.rel (0) target = $region9
  $region8: #{deq_transformer_lm_forward.47} parent=0 // pred_region
    _
  $region9: #{deq_transformer_lm_forward.47} parent=0 // pred_fallthru
    _
  // Predicated region
  $region10: #{deq_transformer_lm_forward.47} parent=0 // pred_check
    _
  $region11: #{deq_transformer_lm_forward.47} parent=0 // pred_check_branch
    %14 = sbr.rel (0) target = $region13
  $region12: #{deq_transformer_lm_forward.47} parent=0 // pred_region
    _
  $region13: #{deq_transformer_lm_forward.47} parent=0 // pred_fallthru
    _
  // Predicated region
  $region14: #{deq_transformer_lm_forward.47} parent=0 // pred_check
    _
  $region15: #{deq_transformer_lm_forward.47} parent=0 // pred_check_branch
    %16 = sbr.rel (0) target = $region17
  $region16: #{deq_transformer_lm_forward.47} parent=0 // pred_region
    _
  $region17: #{deq_transformer_lm_forward.47} parent=0 // pred_fallthru
    _
  %p18 = scmp.eq.s32.totalorder 0, 0
  // Predicated region
  $region18: #{deq_transformer_lm_forward.47} parent=0 // pred_check
    %p19 = pneg %p18
  $region19: #{deq_transformer_lm_forward.47} parent=0 // pred_check_branch
    %21 = sbr.rel (%p19) target = $region21
  $region20: #{deq_transformer_lm_forward.47} parent=0 // pred_region
    %vm22 = vcmask 7168
    %23 = vst.msk [vmem:[#allocation2] sm:$0xff] %vm22, -1e+30
    %24 = vst.msk [vmem:[#allocation2 + $0x8] sm:$0xff] %vm22, -1e+30
    %25 = vst.msk [vmem:[#allocation3] sm:$0xff] %vm22, 0.0
    %26 = vst.msk [vmem:[#allocation3 + $0x8] sm:$0xff] %vm22, 0.0
    %27 = vst.msk [vmem:[#allocation4] sm:$0xff] %vm22, 0.0
    %28 = vst.msk [vmem:[#allocation4 + $0x8] sm:$0xff] %vm22, 0.0
  $region21: #{deq_transformer_lm_forward.47} parent=0 // pred_fallthru
    _
  %v29 = vld [vmem:[%s0] sm:$0xf]
  %v30 = vld [vmem:[%s0 + $0x4] sm:$0xf]
  %v31 = vld [vmem:[%s1] sm:$0xf]
  %v32 = vld [vmem:[%s1 + $0x4] sm:$0xf]
  %v33 = vld [vmem:[%s1 + $0x8] sm:$0xf]
  %v34 = vld [vmem:[%s1 + $0xc] sm:$0xf]
  %v35 = vld [vmem:[%s1 + $0x10] sm:$0xf]
  %v36 = vld [vmem:[%s1 + $0x14] sm:$0xf]
  %v37 = vld [vmem:[%s1 + $0x18] sm:$0x1]
  %v38 = vld [vmem:[%s2] sm:$0x1]
  %v40 = vlaneseq
  %v41 = vshrl.u32 %v40, 7
  %v42 = vsub.s32 0, %v41
  %v43 = vrot.slane %v38, %v42
  %v47 = vunpack.c.l.b16 %v29
  %v48 = vunpack.c.l.b16 %v30
  %v49 = vpack.c.b16 %v48, %v47
  %v57 = vunpack.c.l.b16 %v31
  %v58 = vunpack.c.l.b16 %v32
  %v59 = vunpack.c.l.b16 %v33
  %v60 = vunpack.c.l.b16 %v34
  %v61 = vunpack.c.l.b16 %v35
  %v62 = vunpack.c.l.b16 %v36
  %v63 = vunpack.c.l.b16 %v37
  %v64 = vpack.c.b16 %v58, %v57
  %v65 = vpack.c.b16 %v60, %v59
  %v66 = vpack.c.b16 %v62, %v61
  %v67 = vpack.c.b16 %v63, %v63
  %vm68 = vcmask 261120
  %v70 = vsel %vm68, %v49, 0
  %v73 = vsel %vm68, %v64, 0
  %v76 = vsel %vm68, %v65, 0
  %v79 = vsel %vm68, %v66, 0
  %v82 = vsel %vm68, %v67, 0
  %84 = vmatprep.subr.bf16.mxu0 0
  %85 = vmatpush1.bf16.xpose.msra.mxu0 %v73
  %86 = vmatprep.subr.bf16.mxu0 0
  %87 = vmatpush1.bf16.xpose.msra.mxu0 %v76
  %88 = vmatprep.subr.bf16.mxu0 0
  %89 = vmatpush1.bf16.xpose.msra.mxu0 %v79
  %90 = vmatprep.subr.bf16.mxu0 0
  %91 = vmatpush1.bf16.xpose.msra.mxu0 %v82
  %92 = vmatprep.subr.bf16.mxu0 0
  %93 = vmatpush1.bf16.xpose.msra.mxu0 0
  %94 = vmatprep.subr.bf16.mxu0 0
  %95 = vmatpush1.bf16.xpose.msra.mxu0 0
  %96 = vmatprep.subr.bf16.mxu0 0
  %97 = vmatpush1.bf16.xpose.msra.mxu0 0
  %98 = vmatprep.subr.bf16.mxu0 0
  %99 = vmatpush1.bf16.xpose.msra.mxu0 0
  %100 = vmatprep.subr.bf16.mxu0 0
  %101 = vmatpush1.bf16.xpose.msra.mxu0 0
  %102 = vmatprep.subr.bf16.mxu0 0
  %103 = vmatpush1.bf16.xpose.msra.mxu0 0
  %104 = vmatprep.subr.bf16.mxu0 0
  %105 = vmatpush1.bf16.xpose.msra.mxu0 0
  %106 = vmatprep.subr.bf16.mxu0 0
  %107 = vmatpush1.bf16.xpose.msra.mxu0 0
  %108 = vmatprep.subr.bf16.mxu0 0
  %109 = vmatpush1.bf16.xpose.msra.mxu0 0
  %110 = vmatprep.subr.bf16.mxu0 0
  %111 = vmatpush1.bf16.xpose.msra.mxu0 0
  %112 = vmatprep.subr.bf16.mxu0 0
  %113 = vmatpush1.bf16.xpose.msra.mxu0 0
  %114 = vmatprep.subr.bf16.mxu0 0
  %115 = vmatpush1.bf16.xpose.msra.mxu0 0
  %116 = vmatprep.mubr.bf16.mxu0 0
  %117 = vmatmul.mubr.bf16.gmra.mrb[0].mxu0 %v70
  %v118 = vpop.f32.mrb[0].mxu0
  %v119 = vadd.f32 %v43, %v118
  %v120 = vpop.f32.mrb[0].mxu0
  %v121 = vpop.f32.mrb[0].mxu0
  %v122 = vadd.f32 %v43, %v121
  %v123 = vpop.f32.mrb[0].mxu0
  %124 = vdwg.mxu0
  %v125 = vlaneseq
  %v126 = vand.u32 %v125, 127
  %s127 = smul.u32 0, 50
  %v128 = vstv %s127
  %v129 = vadd.s32 %v126, %v128
  %vm130 = vcmp.lt.s32.totalorder %v129, 50
  %v131 = vsel %vm130, %v119, -1e+30
  %v132 = vsel %vm130, %v122, -1e+30
  %v133 = vld [vmem:[%s3] sm:$0xff]
  %v134 = vld [vmem:[%s3 + $0x8] sm:$0xff]
  %135 = vset.pattern.permute.xlu0 0
  %136 = vperm.xlu0 %135, %v133
  %v137 = vpop.permute.xlu0 %136
  %138 = vset.pattern.permute.xlu0 0
  %139 = vperm.xlu0 %138, %v134
  %v140 = vpop.permute.xlu0 %139
  %vm141 = vcmp.eq.s32.totalorder %v129, %v137
  %vm142 = vcmp.eq.s32.totalorder %v129, %v140
  %v143 = vld [vmem:[#allocation4] sm:$0xff]
  %v144 = vld [vmem:[#allocation4 + $0x8] sm:$0xff]
  %v145 = vsel %vm141, %v131, 0.0
  %v146 = vsel %vm142, %v132, 0.0
  %vm147 = vcmask 408576
  %v148 = vsel %vm147, %v145, 0.0
  %149 = vadd.xlane.f32.xlu0 %v148
  %v150 = vpop.xlane.xlu0 %149
  %v151 = vsel %vm147, %v146, 0.0
  %152 = vadd.xlane.f32.xlu0 %v151
  %v153 = vpop.xlane.xlu0 %152
  %v154 = vadd.f32 %v143, %v150
  %v155 = vadd.f32 %v144, %v153
  %vm156 = vcmask 7168
  %157 = vst.msk [vmem:[#allocation4] sm:$0xff] %vm156, %v154
  %158 = vst.msk [vmem:[#allocation4 + $0x8] sm:$0xff] %vm156, %v155
  %v159 = vld [vmem:[#allocation2] sm:$0xff]
  %v160 = vld [vmem:[#allocation2 + $0x8] sm:$0xff]
  %v161 = vsel %vm147, %v131, -inf
  %162 = vmax.xlane.f32.xlu0 %v161
  %v163 = vpop.xlane.xlu0 %162
  %v164 = vsel %vm147, %v132, -inf
  %165 = vmax.xlane.f32.xlu0 %v164
  %v166 = vpop.xlane.xlu0 %165
  %v167 = vmax.f32 %v159, %v163
  %v168 = vmax.f32 %v160, %v166
  %v169 = vld [vmem:[#allocation3] sm:$0xff]
  %v170 = vld [vmem:[#allocation3 + $0x8] sm:$0xff]
  %v171 = vsub.f32 %v159, %v167
  %v172 = vsub.f32 %v160, %v168
  %v173 = vmul.f32 %v171, 1.442695
  %v174 = vpow.pop %v173
  %v175 = vmul.f32 %v172, 1.442695
  %v176 = vpow.pop %v175
  %v177 = vmul.f32 %v169, %v174
  %v178 = vmul.f32 %v170, %v176
  %180 = vset.pattern.permute.xlu0 0
  %181 = vperm.xlu0 %180, %v167
  %v182 = vpop.permute.xlu0 %181
  %185 = vset.pattern.permute.xlu0 0
  %186 = vperm.xlu0 %185, %v168
  %v187 = vpop.permute.xlu0 %186
  %v189 = vsub.f32 %v131, %v182
  %v190 = vsub.f32 %v132, %v187
  %v191 = vmul.f32 %v189, 1.442695
  %v192 = vpow.pop %v191
  %v193 = vmul.f32 %v190, 1.442695
  %v194 = vpow.pop %v193
  %v195 = vsel %vm147, %v192, 0.0
  %196 = vadd.xlane.f32.xlu0 %v195
  %v197 = vpop.xlane.xlu0 %196
  %v198 = vsel %vm147, %v194, 0.0
  %199 = vadd.xlane.f32.xlu0 %v198
  %v200 = vpop.xlane.xlu0 %199
  %v201 = vadd.f32 %v177, %v197
  %v202 = vadd.f32 %v178, %v200
  %203 = vst.msk [vmem:[#allocation3] sm:$0xff] %vm156, %v201
  %204 = vst.msk [vmem:[#allocation3 + $0x8] sm:$0xff] %vm156, %v202
  %205 = vst.msk [vmem:[#allocation2] sm:$0xff] %vm156, %v167
  %206 = vst.msk [vmem:[#allocation2 + $0x8] sm:$0xff] %vm156, %v168
  // Predicated region
  $region22: #{deq_transformer_lm_forward.47} parent=0 // pred_check
    %p207 = pneg %p18
  $region23: #{deq_transformer_lm_forward.47} parent=0 // pred_check_branch
    %209 = sbr.rel (%p207) target = $region25
  $region24: #{deq_transformer_lm_forward.47} parent=0 // pred_region
    %v210 = vld [vmem:[#allocation2] sm:$0xff]
    %v211 = vld [vmem:[#allocation2 + $0x8] sm:$0xff]
    %v212 = vld [vmem:[#allocation3] sm:$0xff]
    %v213 = vld [vmem:[#allocation3 + $0x8] sm:$0xff]
    %v214 = vlog2.pop %v212
    %v215 = vmul.f32 %v214, 0.6931472
    %v216 = vlog2.pop %v213
    %v217 = vmul.f32 %v216, 0.6931472
    %v218 = vadd.f32 %v210, %v215
    %v219 = vadd.f32 %v211, %v217
    %v220 = vld [vmem:[#allocation4] sm:$0xff]
    %v221 = vld [vmem:[#allocation4 + $0x8] sm:$0xff]
    %v222 = vsub.f32 %v218, %v220
    %v223 = vsub.f32 %v219, %v221
    %224 = vst.msk [vmem:[%s4] sm:$0xff] %vm156, %v222
    %225 = vst.msk [vmem:[%s4 + $0x8] sm:$0xff] %vm156, %v223
  $region25: #{deq_transformer_lm_forward.47} parent=0 // pred_fallthru
    _
  // Predicated region
  $region26: #{deq_transformer_lm_forward.47} parent=0 // pred_check
    _
  $region27: #{deq_transformer_lm_forward.47} parent=0 // pred_check_branch
    %227 = sbr.rel (0) target = $region29
  $region28: #{deq_transformer_lm_forward.47} parent=0 // pred_region
    _
  $region29: #{deq_transformer_lm_forward.47} parent=0 // pred_fallthru
    _
  // Predicated region
  $region30: #{deq_transformer_lm_forward.47} parent=0 // pred_check
    _
  $region31: #{deq_transformer_lm_forward.47} parent=0 // pred_check_branch
    %229 = sbr.rel (0) target = $region33
  $region32: #{deq_transformer_lm_forward.47} parent=0 // pred_region
    _
  $region33: #{deq_transformer_lm_forward.47} parent=0 // pred_fallthru
    _

</llo_original>
